<compile_context>
chip_gen: v5e
topology: v5e:2x2
jax: 0.10.0
libtpu: 0.0.40
codegen_flags: <defaults>
</compile_context>

<pallas_src>
import jax
import jax.numpy as jnp
from jax.experimental import pallas as pl
from jax.experimental.pallas import tpu as pltpu

SENTENCE = ('양팀은 6일 울산 문수월드컵경기장에서 19라운드 경기를 치른다. 선두 울산은 이 경기를 잡으면 '
            '2위 전북 현대와의 승점 차이를 7점까지 벌릴 수 있다. 우승으로 가는 발판을 마련할 수 있는 기회. '
            '광주는 지난 대구FC와의 맞대결에서 난타전 끝에 6대4로 승리하며 상승 분위기를 만들었다. '
            '대어 울산을 잡는다면 단숨에 6위까지도 치고 올라갈 수 있는 상황이다.').split()

VOCAB_SIZE = len(set(SENTENCE))                  # same vocab construction as PyTorch script
INPUT_SIZE = 3                                   # embedding dim == conv length == LSTM input
HIDDEN_SIZE = 20
SEQ = 48                                         # Conv1d channels == LSTM sequence length
V_PAD = ((VOCAB_SIZE + 127) // 128) * 128        # lane-dense vocab axis


def net_kernel(idx_ref, emb_ref, cw_ref, cb_ref, wih_ref, whh_ref, bg_ref,
               wl_ref, bl_ref, out_ref, xg_ref, hs_ref):
    S, L, H, V = SEQ, INPUT_SIZE, HIDDEN_SIZE, V_PAD

    # ---- Embedding as a one-hot matmul (V padded to a full 128-lane width) ----
    idx = idx_ref[...]                                              # (S, 1) int32
    col = jax.lax.broadcasted_iota(jnp.int32, (S, V), 1)
    onehot = (col == idx).astype(jnp.float32)                       # (S, V)
    x = jnp.dot(onehot, emb_ref[...],
                preferred_element_type=jnp.float32)                 # (S, L)

    # ---- Conv1d(48, 48, kernel=3, padding=1) + ReLU as ONE im2col matmul ----
    # zero-pad along the length axis via a shift matrix: xp[:, j] = x[:, j-1]
    r = jax.lax.broadcasted_iota(jnp.int32, (L, L + 2), 0)
    c2 = jax.lax.broadcasted_iota(jnp.int32, (L, L + 2), 1)
    shift = (c2 == r + 1).astype(jnp.float32)                       # (L, L+2)
    xp = jnp.dot(x, shift, preferred_element_type=jnp.float32)      # (S, L+2)
    # stack the 3 taps along sublanes -> (3S, L); weights pre-flattened to (S, 3S)
    xcol = jnp.concatenate([xp[:, 0:L], xp[:, 1:1 + L], xp[:, 2:2 + L]], axis=0)
    conv_out = jnp.maximum(
        jnp.dot(cw_ref[...], xcol, preferred_element_type=jnp.float32)
        + cb_ref[...], 0.0)                                         # (S, L)

    # ---- LSTM(3 -> 20), batch_first, zero initial state ----
    # Precompute input projections for all timesteps: (S, 4H).  One-shot, off
    # the critical path, kept in f32.
    xg_ref[...] = jnp.dot(conv_out, wih_ref[...],
                          preferred_element_type=jnp.float32) + bg_ref[...]
    whh = whh_ref[...]                                              # (H, 4H) bf16, kept in vregs

    def step(t, carry):
        h, c = carry                                                # (1,H) f32 values in vregs
        # bf16 operands -> single MXU pass; f32 accumulation keeps drift bounded.
        g = xg_ref[pl.ds(t, 1), :] + jnp.dot(
            h.astype(jnp.bfloat16), whh,
            preferred_element_type=jnp.float32)                     # (1, 4H) f32
        # PyTorch gate order: i, f, g, o.
        # One full-width sigmoid EUP pass; the "g" gate tanh is taken from the
        # narrow pre-activation slice so its rotate+tanh overlap the sigmoid
        # instead of following a second full-width tanh pass.
        sig = jax.nn.sigmoid(g)                                     # (1, 4H)
        g_g = jnp.tanh(g[:, 2 * H:3 * H])                           # (1, H)
        i_g = sig[:, 0:H]
        f_g = sig[:, H:2 * H]
        o_g = sig[:, 3 * H:4 * H]
        c_new = f_g * c + i_g * g_g
        h_new = o_g * jnp.tanh(c_new)
        hs_ref[pl.ds(t, 1), :] = h_new                              # store off the carry chain
        return h_new, c_new

    h0 = jnp.zeros((1, H), jnp.float32)
    c0 = jnp.zeros((1, H), jnp.float32)
    # unroll=True gives the LLO scheduler visibility to hoist the carry-
    # independent xg row loads and overlap MXU/EUP work across steps.
    jax.lax.fori_loop(0, S, step, (h0, c0), unroll=True)

    # ---- Linear(H, V_PAD): lane-dense store; sliced to VOCAB_SIZE outside ----
    out_ref[...] = jnp.dot(hs_ref[...], wl_ref[...],
                           preferred_element_type=jnp.float32) + bl_ref[...]


def init_params(key):
    ks = jax.random.split(key, 8)
    emb = jax.random.normal(ks[0], (VOCAB_SIZE, INPUT_SIZE), jnp.float32)
    conv_w = jax.random.normal(ks[1], (SEQ, SEQ, 3), jnp.float32) * 0.1      # (C_out, C_in, K)
    conv_b = jax.random.normal(ks[2], (SEQ,), jnp.float32) * 0.1
    w_ih = jax.random.normal(ks[3], (4 * HIDDEN_SIZE, INPUT_SIZE), jnp.float32) * 0.2
    w_hh = jax.random.normal(ks[4], (4 * HIDDEN_SIZE, HIDDEN_SIZE), jnp.float32) * 0.2
    b_g = jax.random.normal(ks[5], (4 * HIDDEN_SIZE,), jnp.float32) * 0.1    # b_ih + b_hh combined
    w_lin = jax.random.normal(ks[6], (VOCAB_SIZE, HIDDEN_SIZE), jnp.float32) * 0.2
    b_lin = jax.random.normal(ks[7], (VOCAB_SIZE,), jnp.float32) * 0.1

    # ---- host-side re-layout / padding (pure glue, done once) ----
    emb_p = jnp.zeros((V_PAD, INPUT_SIZE), jnp.float32).at[:VOCAB_SIZE].set(emb)
    cw = jnp.transpose(conv_w, (0, 2, 1)).reshape(SEQ, 3 * SEQ)    # (C_out, K*C_in) im2col layout
    cb = conv_b.reshape(SEQ, 1)                                    # (48, 1)
    wih_t = w_ih.T                                                 # (3, 80) f32
    whh_t = w_hh.T.astype(jnp.bfloat16)                            # (20, 80) bf16 (recurrence RHS)
    bg = b_g.reshape(1, -1)                                        # (1, 80)
    wl_t = jnp.zeros((HIDDEN_SIZE, V_PAD), jnp.float32).at[:, :VOCAB_SIZE].set(w_lin.T)
    bl = jnp.zeros((1, V_PAD), jnp.float32).at[:, :VOCAB_SIZE].set(b_lin.reshape(1, -1))
    return (emb_p, cw, cb, wih_t, whh_t, bg, wl_t, bl)


def net_forward(x_idx, params):
    emb, cw, cb, wih_t, whh_t, bg, wl_t, bl = params
    B = x_idx.shape[0]
    idx2d = x_idx.reshape(B * SEQ, 1).astype(jnp.int32)

    def const(shape):
        # whole-array blocks; index_map returns the same block every grid step,
        # so weights stay VMEM-resident across grid iterations (no re-DMA).
        return pl.BlockSpec(shape, lambda b: (0,) * len(shape))

    flops_per_seq = 2 * (SEQ * V_PAD * INPUT_SIZE                  # one-hot embed
                         + SEQ * 3 * SEQ * INPUT_SIZE              # im2col conv
                         + SEQ * INPUT_SIZE * 4 * HIDDEN_SIZE      # input projections
                         + SEQ * HIDDEN_SIZE * 4 * HIDDEN_SIZE     # recurrence
                         + SEQ * HIDDEN_SIZE * V_PAD)              # final linear
    weight_bytes = sum(int(w.size) * w.dtype.itemsize
                       for w in (emb, cw, cb, wih_t, whh_t, bg, wl_t, bl))

    # NOTE: batch maps to the (sequential-per-core) grid; with B=1 this is a
    # single grid point.  If B grows beyond the core count, batching sequences
    # inside the LSTM step (carry (B,H)) amortizes the serial 48-step latency.
    out = pl.pallas_call(
        net_kernel,
        out_shape=jax.ShapeDtypeStruct((B * SEQ, V_PAD), jnp.float32),
        grid=(B,),
        in_specs=[
            pl.BlockSpec((SEQ, 1), lambda b: (b, 0)),              # token ids per sequence
            const((V_PAD, INPUT_SIZE)),                            # embedding table (padded)
            const((SEQ, 3 * SEQ)),                                 # conv weights (im2col)
            const((SEQ, 1)),                                       # conv bias
            const((INPUT_SIZE, 4 * HIDDEN_SIZE)),                  # W_ih^T
            const((HIDDEN_SIZE, 4 * HIDDEN_SIZE)),                 # W_hh^T (bf16)
            const((1, 4 * HIDDEN_SIZE)),                           # LSTM biases
            const((HIDDEN_SIZE, V_PAD)),                           # linear weights (padded)
            const((1, V_PAD)),                                     # linear bias (padded)
        ],
        out_specs=pl.BlockSpec((SEQ, V_PAD), lambda b: (b, 0)),
        scratch_shapes=[
            pltpu.VMEM((SEQ, 4 * HIDDEN_SIZE), jnp.float32),       # precomputed gate inputs
            pltpu.VMEM((SEQ, HIDDEN_SIZE), jnp.float32),           # all hidden states
        ],
        compiler_params=pltpu.CompilerParams(
            dimension_semantics=("parallel",)),
        cost_estimate=pl.CostEstimate(
            flops=B * flops_per_seq,
            transcendentals=B * SEQ * (4 * HIDDEN_SIZE + 2 * HIDDEN_SIZE),
            bytes_accessed=B * SEQ * (V_PAD + 1) * 4 + weight_bytes),
    )(idx2d, emb, cw, cb, wih_t, whh_t, bg, wl_t, bl)
    # un-pad the vocab axis outside the kernel (keeps the in-kernel store lane-dense)
    return out[:, :VOCAB_SIZE]


if __name__ == "__main__":
    key = jax.random.PRNGKey(0)
    pkey, xkey = jax.random.split(key)
    params = init_params(pkey)
    # x: (batch=1, seq=48) token ids, as implied by Conv1d(48, 48, ...)
    x = jax.random.randint(xkey, (1, SEQ), 0, VOCAB_SIZE, dtype=jnp.int32)
    out = net_forward(x, params)
    jax.block_until_ready(out)
    assert out.shape == (SEQ, VOCAB_SIZE) and out.dtype == jnp.float32
    print("KERNEL_OK")
</pallas_src>

<mosaic_0001>
module attributes {stable_mosaic.version = 11 : i64} {
  func.func @net_kernel(%arg0: i32, %arg1: memref<48x1xi32, #tpu.memory_space<vmem>>, %arg2: memref<128x3xf32, #tpu.memory_space<vmem>>, %arg3: memref<48x144xf32, #tpu.memory_space<vmem>>, %arg4: memref<48x1xf32, #tpu.memory_space<vmem>>, %arg5: memref<3x80xf32, #tpu.memory_space<vmem>>, %arg6: memref<20x80xbf16, #tpu.memory_space<vmem>>, %arg7: memref<1x80xf32, #tpu.memory_space<vmem>>, %arg8: memref<20x128xf32, #tpu.memory_space<vmem>>, %arg9: memref<1x128xf32, #tpu.memory_space<vmem>>, %arg10: memref<48x128xf32, #tpu.memory_space<vmem>>, %arg11: memref<48x80xf32, #tpu.memory_space<vmem>>, %arg12: memref<48x20xf32, #tpu.memory_space<vmem>>) attributes {dimension_semantics = [#tpu.dimension_semantics<parallel>], iteration_bounds = array<i64: 1>, scalar_prefetch = 0 : i64, scratch_operands = 2 : i64, tpu.core_type = #tpu.core_type<tc>, window_params = [{transform_indices = @transform_0, window_bounds = array<i64: 48, 1>}, {pipeline_mode = #tpu.pipeline_mode<synchronous>, transform_indices = @transform_1, window_bounds = array<i64: 128, 3>}, {pipeline_mode = #tpu.pipeline_mode<synchronous>, transform_indices = @transform_2, window_bounds = array<i64: 48, 144>}, {pipeline_mode = #tpu.pipeline_mode<synchronous>, transform_indices = @transform_3, window_bounds = array<i64: 48, 1>}, {pipeline_mode = #tpu.pipeline_mode<synchronous>, transform_indices = @transform_4, window_bounds = array<i64: 3, 80>}, {pipeline_mode = #tpu.pipeline_mode<synchronous>, transform_indices = @transform_5, window_bounds = array<i64: 20, 80>}, {pipeline_mode = #tpu.pipeline_mode<synchronous>, transform_indices = @transform_6, window_bounds = array<i64: 1, 80>}, {pipeline_mode = #tpu.pipeline_mode<synchronous>, transform_indices = @transform_7, window_bounds = array<i64: 20, 128>}, {pipeline_mode = #tpu.pipeline_mode<synchronous>, transform_indices = @transform_8, window_bounds = array<i64: 1, 128>}, {transform_indices = @transform_9, window_bounds = array<i64: 48, 128>}]} {
    %c0 = arith.constant 0 : index
    %c0_0 = arith.constant 0 : index
    %0 = vector.load %arg1[%c0, %c0_0] : memref<48x1xi32, #tpu.memory_space<vmem>>, vector<48x1xi32>
    %1 = tpu.iota {dimensions = array<i32: 1>} : vector<48x128xi32>
    %2 = vector.broadcast %0 : vector<48x1xi32> to vector<48x128xi32>
    %3 = arith.cmpi eq, %1, %2 : vector<48x128xi32>
    %4 = arith.extui %3 : vector<48x128xi1> to vector<48x128xi32>
    %5 = arith.sitofp %4 : vector<48x128xi32> to vector<48x128xf32>
    %c0_1 = arith.constant 0 : index
    %c0_2 = arith.constant 0 : index
    %6 = vector.load %arg2[%c0_1, %c0_2] : memref<128x3xf32, #tpu.memory_space<vmem>>, vector<128x3xf32>
    %cst = arith.constant dense<0.000000e+00> : vector<48x3xf32>
    %7 = tpu.matmul %5, %6, %cst {dimension_numbers = #tpu.dot_dimension_numbers<[1], [0], [0], [1], [0, 0, 1, 1], [], []>} : vector<48x128xf32>, vector<128x3xf32>, vector<48x3xf32> -> vector<48x3xf32>
    %8 = tpu.iota {dimensions = array<i32: 0>} : vector<3x5xi32>
    %9 = tpu.iota {dimensions = array<i32: 1>} : vector<3x5xi32>
    %c1_i32 = arith.constant 1 : i32
    %10 = vector.broadcast %c1_i32 : i32 to vector<3x5xi32>
    %11 = arith.addi %8, %10 : vector<3x5xi32>
    %12 = arith.cmpi eq, %9, %11 : vector<3x5xi32>
    %13 = arith.extui %12 : vector<3x5xi1> to vector<3x5xi32>
    %14 = arith.sitofp %13 : vector<3x5xi32> to vector<3x5xf32>
    %cst_3 = arith.constant dense<0.000000e+00> : vector<48x5xf32>
    %15 = tpu.matmul %7, %14, %cst_3 {dimension_numbers = #tpu.dot_dimension_numbers<[1], [0], [0], [1], [0, 0, 1, 1], [], []>} : vector<48x3xf32>, vector<3x5xf32>, vector<48x5xf32> -> vector<48x5xf32>
    %16 = vector.extract_strided_slice %15 {offsets = [0, 0], sizes = [48, 3], strides = [1, 1]} : vector<48x5xf32> to vector<48x3xf32>
    %17 = vector.extract_strided_slice %15 {offsets = [0, 1], sizes = [48, 3], strides = [1, 1]} : vector<48x5xf32> to vector<48x3xf32>
    %18 = vector.extract_strided_slice %15 {offsets = [0, 2], sizes = [48, 3], strides = [1, 1]} : vector<48x5xf32> to vector<48x3xf32>
    %19 = tpu.concatenate %16, %17, %18 in 0 : vector<48x3xf32>, vector<48x3xf32>, vector<48x3xf32> -> vector<144x3xf32>
    %c0_4 = arith.constant 0 : index
    %c0_5 = arith.constant 0 : index
    %20 = vector.load %arg3[%c0_4, %c0_5] : memref<48x144xf32, #tpu.memory_space<vmem>>, vector<48x144xf32>
    %cst_6 = arith.constant dense<0.000000e+00> : vector<48x3xf32>
    %21 = tpu.matmul %20, %19, %cst_6 {dimension_numbers = #tpu.dot_dimension_numbers<[1], [0], [0], [1], [0, 0, 1, 1], [], []>} : vector<48x144xf32>, vector<144x3xf32>, vector<48x3xf32> -> vector<48x3xf32>
    %c0_7 = arith.constant 0 : index
    %c0_8 = arith.constant 0 : index
    %22 = vector.load %arg4[%c0_7, %c0_8] : memref<48x1xf32, #tpu.memory_space<vmem>>, vector<48x1xf32>
    %23 = vector.broadcast %22 : vector<48x1xf32> to vector<48x3xf32>
    %24 = arith.addf %21, %23 : vector<48x3xf32>
    %cst_9 = arith.constant 0.000000e+00 : f32
    %25 = vector.broadcast %cst_9 : f32 to vector<48x3xf32>
    %26 = arith.maximumf %24, %25 : vector<48x3xf32>
    %c0_10 = arith.constant 0 : index
    %c0_11 = arith.constant 0 : index
    %27 = vector.load %arg5[%c0_10, %c0_11] : memref<3x80xf32, #tpu.memory_space<vmem>>, vector<3x80xf32>
    %cst_12 = arith.constant dense<0.000000e+00> : vector<48x80xf32>
    %28 = tpu.matmul %26, %27, %cst_12 {dimension_numbers = #tpu.dot_dimension_numbers<[1], [0], [0], [1], [0, 0, 1, 1], [], []>} : vector<48x3xf32>, vector<3x80xf32>, vector<48x80xf32> -> vector<48x80xf32>
    %c0_13 = arith.constant 0 : index
    %c0_14 = arith.constant 0 : index
    %29 = vector.load %arg7[%c0_13, %c0_14] : memref<1x80xf32, #tpu.memory_space<vmem>>, vector<1x80xf32>
    %30 = vector.broadcast %29 : vector<1x80xf32> to vector<48x80xf32>
    %31 = arith.addf %28, %30 : vector<48x80xf32>
    %c0_15 = arith.constant 0 : index
    %c0_16 = arith.constant 0 : index
    %32 = vector.load %arg11[%c0_15, %c0_16] : memref<48x80xf32, #tpu.memory_space<vmem>>, vector<48x80xf32>
    tpu.vector_store %arg11[%c0_15, %c0_16], %31 {strides = array<i32>} : memref<48x80xf32, #tpu.memory_space<vmem>>, vector<48x80xf32>,
    %c0_17 = arith.constant 0 : index
    %c0_18 = arith.constant 0 : index
    %33 = vector.load %arg6[%c0_17, %c0_18] : memref<20x80xbf16, #tpu.memory_space<vmem>>, vector<20x80xbf16>
    %cst_19 = arith.constant 0.000000e+00 : f32
    %34 = vector.broadcast %cst_19 : f32 to vector<1x20xf32>
    %cst_20 = arith.constant 0.000000e+00 : f32
    %35 = vector.broadcast %cst_20 : f32 to vector<1x20xf32>
    %c0_i32 = arith.constant 0 : i32
    %36 = arith.index_cast %c0_i32 : i32 to index
    %c0_21 = arith.constant 0 : index
    %37 = vector.load %arg11[%36, %c0_21] : memref<48x80xf32, #tpu.memory_space<vmem>>, vector<1x80xf32>
    %38 = arith.truncf %34 : vector<1x20xf32> to vector<1x20xbf16>
    %cst_22 = arith.constant dense<0.000000e+00> : vector<1x80xf32>
    %39 = tpu.matmul %38, %33, %cst_22 {dimension_numbers = #tpu.dot_dimension_numbers<[1], [0], [0], [1], [0, 0, 1, 1], [], []>} : vector<1x20xbf16>, vector<20x80xbf16>, vector<1x80xf32> -> vector<1x80xf32>
    %40 = arith.addf %37, %39 : vector<1x80xf32>
    %41 = arith.negf %40 : vector<1x80xf32>
    %42 = math.exp %41 : vector<1x80xf32>
    %cst_23 = arith.constant 1.000000e+00 : f32
    %43 = vector.broadcast %cst_23 : f32 to vector<1x80xf32>
    %44 = arith.addf %43, %42 : vector<1x80xf32>
    %45 = arith.divf %43, %44 : vector<1x80xf32>
    %46 = vector.extract_strided_slice %40 {offsets = [0, 40], sizes = [1, 20], strides = [1, 1]} : vector<1x80xf32> to vector<1x20xf32>
    %47 = math.tanh %46 : vector<1x20xf32>
    %48 = vector.extract_strided_slice %45 {offsets = [0, 0], sizes = [1, 20], strides = [1, 1]} : vector<1x80xf32> to vector<1x20xf32>
    %49 = vector.extract_strided_slice %45 {offsets = [0, 20], sizes = [1, 20], strides = [1, 1]} : vector<1x80xf32> to vector<1x20xf32>
    %50 = vector.extract_strided_slice %45 {offsets = [0, 60], sizes = [1, 20], strides = [1, 1]} : vector<1x80xf32> to vector<1x20xf32>
    %51 = arith.mulf %49, %35 : vector<1x20xf32>
    %52 = arith.mulf %48, %47 : vector<1x20xf32>
    %53 = arith.addf %51, %52 : vector<1x20xf32>
    %54 = math.tanh %53 : vector<1x20xf32>
    %55 = arith.mulf %50, %54 : vector<1x20xf32>
    %56 = arith.index_cast %c0_i32 : i32 to index
    %c0_24 = arith.constant 0 : index
    %57 = vector.load %arg12[%56, %c0_24] : memref<48x20xf32, #tpu.memory_space<vmem>>, vector<1x20xf32>
    tpu.vector_store %arg12[%56, %c0_24], %55 {strides = array<i32>} : memref<48x20xf32, #tpu.memory_space<vmem>>, vector<1x20xf32>,
    %c1_i32_25 = arith.constant 1 : i32
    %58 = arith.index_cast %c1_i32_25 : i32 to index
    %c0_26 = arith.constant 0 : index
    %59 = vector.load %arg11[%58, %c0_26] : memref<48x80xf32, #tpu.memory_space<vmem>>, vector<1x80xf32>
    %60 = arith.truncf %55 : vector<1x20xf32> to vector<1x20xbf16>
    %cst_27 = arith.constant dense<0.000000e+00> : vector<1x80xf32>
    %61 = tpu.matmul %60, %33, %cst_27 {dimension_numbers = #tpu.dot_dimension_numbers<[1], [0], [0], [1], [0, 0, 1, 1], [], []>} : vector<1x20xbf16>, vector<20x80xbf16>, vector<1x80xf32> -> vector<1x80xf32>
    %62 = arith.addf %59, %61 : vector<1x80xf32>
    %63 = arith.negf %62 : vector<1x80xf32>
    %64 = math.exp %63 : vector<1x80xf32>
    %cst_28 = arith.constant 1.000000e+00 : f32
    %65 = vector.broadcast %cst_28 : f32 to vector<1x80xf32>
    %66 = arith.addf %65, %64 : vector<1x80xf32>
    %67 = arith.divf %65, %66 : vector<1x80xf32>
    %68 = vector.extract_strided_slice %62 {offsets = [0, 40], sizes = [1, 20], strides = [1, 1]} : vector<1x80xf32> to vector<1x20xf32>
    %69 = math.tanh %68 : vector<1x20xf32>
    %70 = vector.extract_strided_slice %67 {offsets = [0, 0], sizes = [1, 20], strides = [1, 1]} : vector<1x80xf32> to vector<1x20xf32>
    %71 = vector.extract_strided_slice %67 {offsets = [0, 20], sizes = [1, 20], strides = [1, 1]} : vector<1x80xf32> to vector<1x20xf32>
    %72 = vector.extract_strided_slice %67 {offsets = [0, 60], sizes = [1, 20], strides = [1, 1]} : vector<1x80xf32> to vector<1x20xf32>
    %73 = arith.mulf %71, %53 : vector<1x20xf32>
    %74 = arith.mulf %70, %69 : vector<1x20xf32>
    %75 = arith.addf %73, %74 : vector<1x20xf32>
    %76 = math.tanh %75 : vector<1x20xf32>
    %77 = arith.mulf %72, %76 : vector<1x20xf32>
    %78 = arith.index_cast %c1_i32_25 : i32 to index
    %c0_29 = arith.constant 0 : index
    %79 = vector.load %arg12[%78, %c0_29] : memref<48x20xf32, #tpu.memory_space<vmem>>, vector<1x20xf32>
    tpu.vector_store %arg12[%78, %c0_29], %77 {strides = array<i32>} : memref<48x20xf32, #tpu.memory_space<vmem>>, vector<1x20xf32>,
    %c2_i32 = arith.constant 2 : i32
    %80 = arith.index_cast %c2_i32 : i32 to index
    %c0_30 = arith.constant 0 : index
    %81 = vector.load %arg11[%80, %c0_30] : memref<48x80xf32, #tpu.memory_space<vmem>>, vector<1x80xf32>
    %82 = arith.truncf %77 : vector<1x20xf32> to vector<1x20xbf16>
    %cst_31 = arith.constant dense<0.000000e+00> : vector<1x80xf32>
    %83 = tpu.matmul %82, %33, %cst_31 {dimension_numbers = #tpu.dot_dimension_numbers<[1], [0], [0], [1], [0, 0, 1, 1], [], []>} : vector<1x20xbf16>, vector<20x80xbf16>, vector<1x80xf32> -> vector<1x80xf32>
    %84 = arith.addf %81, %83 : vector<1x80xf32>
    %85 = arith.negf %84 : vector<1x80xf32>
    %86 = math.exp %85 : vector<1x80xf32>
    %cst_32 = arith.constant 1.000000e+00 : f32
    %87 = vector.broadcast %cst_32 : f32 to vector<1x80xf32>
    %88 = arith.addf %87, %86 : vector<1x80xf32>
    %89 = arith.divf %87, %88 : vector<1x80xf32>
    %90 = vector.extract_strided_slice %84 {offsets = [0, 40], sizes = [1, 20], strides = [1, 1]} : vector<1x80xf32> to vector<1x20xf32>
    %91 = math.tanh %90 : vector<1x20xf32>
    %92 = vector.extract_strided_slice %89 {offsets = [0, 0], sizes = [1, 20], strides = [1, 1]} : vector<1x80xf32> to vector<1x20xf32>
    %93 = vector.extract_strided_slice %89 {offsets = [0, 20], sizes = [1, 20], strides = [1, 1]} : vector<1x80xf32> to vector<1x20xf32>
    %94 = vector.extract_strided_slice %89 {offsets = [0, 60], sizes = [1, 20], strides = [1, 1]} : vector<1x80xf32> to vector<1x20xf32>
    %95 = arith.mulf %93, %75 : vector<1x20xf32>
    %96 = arith.mulf %92, %91 : vector<1x20xf32>
    %97 = arith.addf %95, %96 : vector<1x20xf32>
    %98 = math.tanh %97 : vector<1x20xf32>
    %99 = arith.mulf %94, %98 : vector<1x20xf32>
    %100 = arith.index_cast %c2_i32 : i32 to index
    %c0_33 = arith.constant 0 : index
    %101 = vector.load %arg12[%100, %c0_33] : memref<48x20xf32, #tpu.memory_space<vmem>>, vector<1x20xf32>
    tpu.vector_store %arg12[%100, %c0_33], %99 {strides = array<i32>} : memref<48x20xf32, #tpu.memory_space<vmem>>, vector<1x20xf32>,
    %c3_i32 = arith.constant 3 : i32
    %102 = arith.index_cast %c3_i32 : i32 to index
    %c0_34 = arith.constant 0 : index
    %103 = vector.load %arg11[%102, %c0_34] : memref<48x80xf32, #tpu.memory_space<vmem>>, vector<1x80xf32>
    %104 = arith.truncf %99 : vector<1x20xf32> to vector<1x20xbf16>
    %cst_35 = arith.constant dense<0.000000e+00> : vector<1x80xf32>
    %105 = tpu.matmul %104, %33, %cst_35 {dimension_numbers = #tpu.dot_dimension_numbers<[1], [0], [0], [1], [0, 0, 1, 1], [], []>} : vector<1x20xbf16>, vector<20x80xbf16>, vector<1x80xf32> -> vector<1x80xf32>
    %106 = arith.addf %103, %105 : vector<1x80xf32>
    %107 = arith.negf %106 : vector<1x80xf32>
    %108 = math.exp %107 : vector<1x80xf32>
    %cst_36 = arith.constant 1.000000e+00 : f32
    %109 = vector.broadcast %cst_36 : f32 to vector<1x80xf32>
    %110 = arith.addf %109, %108 : vector<1x80xf32>
    %111 = arith.divf %109, %110 : vector<1x80xf32>
    %112 = vector.extract_strided_slice %106 {offsets = [0, 40], sizes = [1, 20], strides = [1, 1]} : vector<1x80xf32> to vector<1x20xf32>
    %113 = math.tanh %112 : vector<1x20xf32>
    %114 = vector.extract_strided_slice %111 {offsets = [0, 0], sizes = [1, 20], strides = [1, 1]} : vector<1x80xf32> to vector<1x20xf32>
    %115 = vector.extract_strided_slice %111 {offsets = [0, 20], sizes = [1, 20], strides = [1, 1]} : vector<1x80xf32> to vector<1x20xf32>
    %116 = vector.extract_strided_slice %111 {offsets = [0, 60], sizes = [1, 20], strides = [1, 1]} : vector<1x80xf32> to vector<1x20xf32>
    %117 = arith.mulf %115, %97 : vector<1x20xf32>
    %118 = arith.mulf %114, %113 : vector<1x20xf32>
    %119 = arith.addf %117, %118 : vector<1x20xf32>
    %120 = math.tanh %119 : vector<1x20xf32>
    %121 = arith.mulf %116, %120 : vector<1x20xf32>
    %122 = arith.index_cast %c3_i32 : i32 to index
    %c0_37 = arith.constant 0 : index
    %123 = vector.load %arg12[%122, %c0_37] : memref<48x20xf32, #tpu.memory_space<vmem>>, vector<1x20xf32>
    tpu.vector_store %arg12[%122, %c0_37], %121 {strides = array<i32>} : memref<48x20xf32, #tpu.memory_space<vmem>>, vector<1x20xf32>,
    %c4_i32 = arith.constant 4 : i32
    %124 = arith.index_cast %c4_i32 : i32 to index
    %c0_38 = arith.constant 0 : index
    %125 = vector.load %arg11[%124, %c0_38] : memref<48x80xf32, #tpu.memory_space<vmem>>, vector<1x80xf32>
    %126 = arith.truncf %121 : vector<1x20xf32> to vector<1x20xbf16>
    %cst_39 = arith.constant dense<0.000000e+00> : vector<1x80xf32>
    %127 = tpu.matmul %126, %33, %cst_39 {dimension_numbers = #tpu.dot_dimension_numbers<[1], [0], [0], [1], [0, 0, 1, 1], [], []>} : vector<1x20xbf16>, vector<20x80xbf16>, vector<1x80xf32> -> vector<1x80xf32>
    %128 = arith.addf %125, %127 : vector<1x80xf32>
    %129 = arith.negf %128 : vector<1x80xf32>
    %130 = math.exp %129 : vector<1x80xf32>
    %cst_40 = arith.constant 1.000000e+00 : f32
    %131 = vector.broadcast %cst_40 : f32 to vector<1x80xf32>
    %132 = arith.addf %131, %130 : vector<1x80xf32>
    %133 = arith.divf %131, %132 : vector<1x80xf32>
    %134 = vector.extract_strided_slice %128 {offsets = [0, 40], sizes = [1, 20], strides = [1, 1]} : vector<1x80xf32> to vector<1x20xf32>
    %135 = math.tanh %134 : vector<1x20xf32>
    %136 = vector.extract_strided_slice %133 {offsets = [0, 0], sizes = [1, 20], strides = [1, 1]} : vector<1x80xf32> to vector<1x20xf32>
    %137 = vector.extract_strided_slice %133 {offsets = [0, 20], sizes = [1, 20], strides = [1, 1]} : vector<1x80xf32> to vector<1x20xf32>
    %138 = vector.extract_strided_slice %133 {offsets = [0, 60], sizes = [1, 20], strides = [1, 1]} : vector<1x80xf32> to vector<1x20xf32>
    %139 = arith.mulf %137, %119 : vector<1x20xf32>
    %140 = arith.mulf %136, %135 : vector<1x20xf32>
    %141 = arith.addf %139, %140 : vector<1x20xf32>
    %142 = math.tanh %141 : vector<1x20xf32>
    %143 = arith.mulf %138, %142 : vector<1x20xf32>
    %144 = arith.index_cast %c4_i32 : i32 to index
    %c0_41 = arith.constant 0 : index
    %145 = vector.load %arg12[%144, %c0_41] : memref<48x20xf32, #tpu.memory_space<vmem>>, vector<1x20xf32>
    tpu.vector_store %arg12[%144, %c0_41], %143 {strides = array<i32>} : memref<48x20xf32, #tpu.memory_space<vmem>>, vector<1x20xf32>,
    %c5_i32 = arith.constant 5 : i32
    %146 = arith.index_cast %c5_i32 : i32 to index
    %c0_42 = arith.constant 0 : index
    %147 = vector.load %arg11[%146, %c0_42] : memref<48x80xf32, #tpu.memory_space<vmem>>, vector<1x80xf32>
    %148 = arith.truncf %143 : vector<1x20xf32> to vector<1x20xbf16>
    %cst_43 = arith.constant dense<0.000000e+00> : vector<1x80xf32>
    %149 = tpu.matmul %148, %33, %cst_43 {dimension_numbers = #tpu.dot_dimension_numbers<[1], [0], [0], [1], [0, 0, 1, 1], [], []>} : vector<1x20xbf16>, vector<20x80xbf16>, vector<1x80xf32> -> vector<1x80xf32>
    %150 = arith.addf %147, %149 : vector<1x80xf32>
    %151 = arith.negf %150 : vector<1x80xf32>
    %152 = math.exp %151 : vector<1x80xf32>
    %cst_44 = arith.constant 1.000000e+00 : f32
    %153 = vector.broadcast %cst_44 : f32 to vector<1x80xf32>
    %154 = arith.addf %153, %152 : vector<1x80xf32>
    %155 = arith.divf %153, %154 : vector<1x80xf32>
    %156 = vector.extract_strided_slice %150 {offsets = [0, 40], sizes = [1, 20], strides = [1, 1]} : vector<1x80xf32> to vector<1x20xf32>
    %157 = math.tanh %156 : vector<1x20xf32>
    %158 = vector.extract_strided_slice %155 {offsets = [0, 0], sizes = [1, 20], strides = [1, 1]} : vector<1x80xf32> to vector<1x20xf32>
    %159 = vector.extract_strided_slice %155 {offsets = [0, 20], sizes = [1, 20], strides = [1, 1]} : vector<1x80xf32> to vector<1x20xf32>
    %160 = vector.extract_strided_slice %155 {offsets = [0, 60], sizes = [1, 20], strides = [1, 1]} : vector<1x80xf32> to vector<1x20xf32>
    %161 = arith.mulf %159, %141 : vector<1x20xf32>
    %162 = arith.mulf %158, %157 : vector<1x20xf32>
    %163 = arith.addf %161, %162 : vector<1x20xf32>
    %164 = math.tanh %163 : vector<1x20xf32>
    %165 = arith.mulf %160, %164 : vector<1x20xf32>
    %166 = arith.index_cast %c5_i32 : i32 to index
    %c0_45 = arith.constant 0 : index
    %167 = vector.load %arg12[%166, %c0_45] : memref<48x20xf32, #tpu.memory_space<vmem>>, vector<1x20xf32>
    tpu.vector_store %arg12[%166, %c0_45], %165 {strides = array<i32>} : memref<48x20xf32, #tpu.memory_space<vmem>>, vector<1x20xf32>,
    %c6_i32 = arith.constant 6 : i32
    %168 = arith.index_cast %c6_i32 : i32 to index
    %c0_46 = arith.constant 0 : index
    %169 = vector.load %arg11[%168, %c0_46] : memref<48x80xf32, #tpu.memory_space<vmem>>, vector<1x80xf32>
    %170 = arith.truncf %165 : vector<1x20xf32> to vector<1x20xbf16>
    %cst_47 = arith.constant dense<0.000000e+00> : vector<1x80xf32>
    %171 = tpu.matmul %170, %33, %cst_47 {dimension_numbers = #tpu.dot_dimension_numbers<[1], [0], [0], [1], [0, 0, 1, 1], [], []>} : vector<1x20xbf16>, vector<20x80xbf16>, vector<1x80xf32> -> vector<1x80xf32>
    %172 = arith.addf %169, %171 : vector<1x80xf32>
    %173 = arith.negf %172 : vector<1x80xf32>
    %174 = math.exp %173 : vector<1x80xf32>
    %cst_48 = arith.constant 1.000000e+00 : f32
    %175 = vector.broadcast %cst_48 : f32 to vector<1x80xf32>
    %176 = arith.addf %175, %174 : vector<1x80xf32>
    %177 = arith.divf %175, %176 : vector<1x80xf32>
    %178 = vector.extract_strided_slice %172 {offsets = [0, 40], sizes = [1, 20], strides = [1, 1]} : vector<1x80xf32> to vector<1x20xf32>
    %179 = math.tanh %178 : vector<1x20xf32>
    %180 = vector.extract_strided_slice %177 {offsets = [0, 0], sizes = [1, 20], strides = [1, 1]} : vector<1x80xf32> to vector<1x20xf32>
    %181 = vector.extract_strided_slice %177 {offsets = [0, 20], sizes = [1, 20], strides = [1, 1]} : vector<1x80xf32> to vector<1x20xf32>
    %182 = vector.extract_strided_slice %177 {offsets = [0, 60], sizes = [1, 20], strides = [1, 1]} : vector<1x80xf32> to vector<1x20xf32>
    %183 = arith.mulf %181, %163 : vector<1x20xf32>
    %184 = arith.mulf %180, %179 : vector<1x20xf32>
    %185 = arith.addf %183, %184 : vector<1x20xf32>
    %186 = math.tanh %185 : vector<1x20xf32>
    %187 = arith.mulf %182, %186 : vector<1x20xf32>
    %188 = arith.index_cast %c6_i32 : i32 to index
    %c0_49 = arith.constant 0 : index
    %189 = vector.load %arg12[%188, %c0_49] : memref<48x20xf32, #tpu.memory_space<vmem>>, vector<1x20xf32>
    tpu.vector_store %arg12[%188, %c0_49], %187 {strides = array<i32>} : memref<48x20xf32, #tpu.memory_space<vmem>>, vector<1x20xf32>,
    %c7_i32 = arith.constant 7 : i32
    %190 = arith.index_cast %c7_i32 : i32 to index
    %c0_50 = arith.constant 0 : index
    %191 = vector.load %arg11[%190, %c0_50] : memref<48x80xf32, #tpu.memory_space<vmem>>, vector<1x80xf32>
    %192 = arith.truncf %187 : vector<1x20xf32> to vector<1x20xbf16>
    %cst_51 = arith.constant dense<0.000000e+00> : vector<1x80xf32>
    %193 = tpu.matmul %192, %33, %cst_51 {dimension_numbers = #tpu.dot_dimension_numbers<[1], [0], [0], [1], [0, 0, 1, 1], [], []>} : vector<1x20xbf16>, vector<20x80xbf16>, vector<1x80xf32> -> vector<1x80xf32>
    %194 = arith.addf %191, %193 : vector<1x80xf32>
    %195 = arith.negf %194 : vector<1x80xf32>
    %196 = math.exp %195 : vector<1x80xf32>
    %cst_52 = arith.constant 1.000000e+00 : f32
    %197 = vector.broadcast %cst_52 : f32 to vector<1x80xf32>
    %198 = arith.addf %197, %196 : vector<1x80xf32>
    %199 = arith.divf %197, %198 : vector<1x80xf32>
    %200 = vector.extract_strided_slice %194 {offsets = [0, 40], sizes = [1, 20], strides = [1, 1]} : vector<1x80xf32> to vector<1x20xf32>
    %201 = math.tanh %200 : vector<1x20xf32>
    %202 = vector.extract_strided_slice %199 {offsets = [0, 0], sizes = [1, 20], strides = [1, 1]} : vector<1x80xf32> to vector<1x20xf32>
    %203 = vector.extract_strided_slice %199 {offsets = [0, 20], sizes = [1, 20], strides = [1, 1]} : vector<1x80xf32> to vector<1x20xf32>
    %204 = vector.extract_strided_slice %199 {offsets = [0, 60], sizes = [1, 20], strides = [1, 1]} : vector<1x80xf32> to vector<1x20xf32>
    %205 = arith.mulf %203, %185 : vector<1x20xf32>
    %206 = arith.mulf %202, %201 : vector<1x20xf32>
    %207 = arith.addf %205, %206 : vector<1x20xf32>
    %208 = math.tanh %207 : vector<1x20xf32>
    %209 = arith.mulf %204, %208 : vector<1x20xf32>
    %210 = arith.index_cast %c7_i32 : i32 to index
    %c0_53 = arith.constant 0 : index
    %211 = vector.load %arg12[%210, %c0_53] : memref<48x20xf32, #tpu.memory_space<vmem>>, vector<1x20xf32>
    tpu.vector_store %arg12[%210, %c0_53], %209 {strides = array<i32>} : memref<48x20xf32, #tpu.memory_space<vmem>>, vector<1x20xf32>,
    %c8_i32 = arith.constant 8 : i32
    %212 = arith.index_cast %c8_i32 : i32 to index
    %c0_54 = arith.constant 0 : index
    %213 = vector.load %arg11[%212, %c0_54] : memref<48x80xf32, #tpu.memory_space<vmem>>, vector<1x80xf32>
    %214 = arith.truncf %209 : vector<1x20xf32> to vector<1x20xbf16>
    %cst_55 = arith.constant dense<0.000000e+00> : vector<1x80xf32>
    %215 = tpu.matmul %214, %33, %cst_55 {dimension_numbers = #tpu.dot_dimension_numbers<[1], [0], [0], [1], [0, 0, 1, 1], [], []>} : vector<1x20xbf16>, vector<20x80xbf16>, vector<1x80xf32> -> vector<1x80xf32>
    %216 = arith.addf %213, %215 : vector<1x80xf32>
    %217 = arith.negf %216 : vector<1x80xf32>
    %218 = math.exp %217 : vector<1x80xf32>
    %cst_56 = arith.constant 1.000000e+00 : f32
    %219 = vector.broadcast %cst_56 : f32 to vector<1x80xf32>
    %220 = arith.addf %219, %218 : vector<1x80xf32>
    %221 = arith.divf %219, %220 : vector<1x80xf32>
    %222 = vector.extract_strided_slice %216 {offsets = [0, 40], sizes = [1, 20], strides = [1, 1]} : vector<1x80xf32> to vector<1x20xf32>
    %223 = math.tanh %222 : vector<1x20xf32>
    %224 = vector.extract_strided_slice %221 {offsets = [0, 0], sizes = [1, 20], strides = [1, 1]} : vector<1x80xf32> to vector<1x20xf32>
    %225 = vector.extract_strided_slice %221 {offsets = [0, 20], sizes = [1, 20], strides = [1, 1]} : vector<1x80xf32> to vector<1x20xf32>
    %226 = vector.extract_strided_slice %221 {offsets = [0, 60], sizes = [1, 20], strides = [1, 1]} : vector<1x80xf32> to vector<1x20xf32>
    %227 = arith.mulf %225, %207 : vector<1x20xf32>
    %228 = arith.mulf %224, %223 : vector<1x20xf32>
    %229 = arith.addf %227, %228 : vector<1x20xf32>
    %230 = math.tanh %229 : vector<1x20xf32>
    %231 = arith.mulf %226, %230 : vector<1x20xf32>
    %232 = arith.index_cast %c8_i32 : i32 to index
    %c0_57 = arith.constant 0 : index
    %233 = vector.load %arg12[%232, %c0_57] : memref<48x20xf32, #tpu.memory_space<vmem>>, vector<1x20xf32>
    tpu.vector_store %arg12[%232, %c0_57], %231 {strides = array<i32>} : memref<48x20xf32, #tpu.memory_space<vmem>>, vector<1x20xf32>,
    %c9_i32 = arith.constant 9 : i32
    %234 = arith.index_cast %c9_i32 : i32 to index
    %c0_58 = arith.constant 0 : index
    %235 = vector.load %arg11[%234, %c0_58] : memref<48x80xf32, #tpu.memory_space<vmem>>, vector<1x80xf32>
    %236 = arith.truncf %231 : vector<1x20xf32> to vector<1x20xbf16>
    %cst_59 = arith.constant dense<0.000000e+00> : vector<1x80xf32>
    %237 = tpu.matmul %236, %33, %cst_59 {dimension_numbers = #tpu.dot_dimension_numbers<[1], [0], [0], [1], [0, 0, 1, 1], [], []>} : vector<1x20xbf16>, vector<20x80xbf16>, vector<1x80xf32> -> vector<1x80xf32>
    %238 = arith.addf %235, %237 : vector<1x80xf32>
    %239 = arith.negf %238 : vector<1x80xf32>
    %240 = math.exp %239 : vector<1x80xf32>
    %cst_60 = arith.constant 1.000000e+00 : f32
    %241 = vector.broadcast %cst_60 : f32 to vector<1x80xf32>
    %242 = arith.addf %241, %240 : vector<1x80xf32>
    %243 = arith.divf %241, %242 : vector<1x80xf32>
    %244 = vector.extract_strided_slice %238 {offsets = [0, 40], sizes = [1, 20], strides = [1, 1]} : vector<1x80xf32> to vector<1x20xf32>
    %245 = math.tanh %244 : vector<1x20xf32>
    %246 = vector.extract_strided_slice %243 {offsets = [0, 0], sizes = [1, 20], strides = [1, 1]} : vector<1x80xf32> to vector<1x20xf32>
    %247 = vector.extract_strided_slice %243 {offsets = [0, 20], sizes = [1, 20], strides = [1, 1]} : vector<1x80xf32> to vector<1x20xf32>
    %248 = vector.extract_strided_slice %243 {offsets = [0, 60], sizes = [1, 20], strides = [1, 1]} : vector<1x80xf32> to vector<1x20xf32>
    %249 = arith.mulf %247, %229 : vector<1x20xf32>
    %250 = arith.mulf %246, %245 : vector<1x20xf32>
    %251 = arith.addf %249, %250 : vector<1x20xf32>
    %252 = math.tanh %251 : vector<1x20xf32>
    %253 = arith.mulf %248, %252 : vector<1x20xf32>
    %254 = arith.index_cast %c9_i32 : i32 to index
    %c0_61 = arith.constant 0 : index
    %255 = vector.load %arg12[%254, %c0_61] : memref<48x20xf32, #tpu.memory_space<vmem>>, vector<1x20xf32>
    tpu.vector_store %arg12[%254, %c0_61], %253 {strides = array<i32>} : memref<48x20xf32, #tpu.memory_space<vmem>>, vector<1x20xf32>,
    %c10_i32 = arith.constant 10 : i32
    %256 = arith.index_cast %c10_i32 : i32 to index
    %c0_62 = arith.constant 0 : index
    %257 = vector.load %arg11[%256, %c0_62] : memref<48x80xf32, #tpu.memory_space<vmem>>, vector<1x80xf32>
    %258 = arith.truncf %253 : vector<1x20xf32> to vector<1x20xbf16>
    %cst_63 = arith.constant dense<0.000000e+00> : vector<1x80xf32>
    %259 = tpu.matmul %258, %33, %cst_63 {dimension_numbers = #tpu.dot_dimension_numbers<[1], [0], [0], [1], [0, 0, 1, 1], [], []>} : vector<1x20xbf16>, vector<20x80xbf16>, vector<1x80xf32> -> vector<1x80xf32>
    %260 = arith.addf %257, %259 : vector<1x80xf32>
    %261 = arith.negf %260 : vector<1x80xf32>
    %262 = math.exp %261 : vector<1x80xf32>
    %cst_64 = arith.constant 1.000000e+00 : f32
    %263 = vector.broadcast %cst_64 : f32 to vector<1x80xf32>
    %264 = arith.addf %263, %262 : vector<1x80xf32>
    %265 = arith.divf %263, %264 : vector<1x80xf32>
    %266 = vector.extract_strided_slice %260 {offsets = [0, 40], sizes = [1, 20], strides = [1, 1]} : vector<1x80xf32> to vector<1x20xf32>
    %267 = math.tanh %266 : vector<1x20xf32>
    %268 = vector.extract_strided_slice %265 {offsets = [0, 0], sizes = [1, 20], strides = [1, 1]} : vector<1x80xf32> to vector<1x20xf32>
    %269 = vector.extract_strided_slice %265 {offsets = [0, 20], sizes = [1, 20], strides = [1, 1]} : vector<1x80xf32> to vector<1x20xf32>
    %270 = vector.extract_strided_slice %265 {offsets = [0, 60], sizes = [1, 20], strides = [1, 1]} : vector<1x80xf32> to vector<1x20xf32>
    %271 = arith.mulf %269, %251 : vector<1x20xf32>
    %272 = arith.mulf %268, %267 : vector<1x20xf32>
    %273 = arith.addf %271, %272 : vector<1x20xf32>
    %274 = math.tanh %273 : vector<1x20xf32>
    %275 = arith.mulf %270, %274 : vector<1x20xf32>
    %276 = arith.index_cast %c10_i32 : i32 to index
    %c0_65 = arith.constant 0 : index
    %277 = vector.load %arg12[%276, %c0_65] : memref<48x20xf32, #tpu.memory_space<vmem>>, vector<1x20xf32>
    tpu.vector_store %arg12[%276, %c0_65], %275 {strides = array<i32>} : memref<48x20xf32, #tpu.memory_space<vmem>>, vector<1x20xf32>,
    %c11_i32 = arith.constant 11 : i32
    %278 = arith.index_cast %c11_i32 : i32 to index
    %c0_66 = arith.constant 0 : index
    %279 = vector.load %arg11[%278, %c0_66] : memref<48x80xf32, #tpu.memory_space<vmem>>, vector<1x80xf32>
    %280 = arith.truncf %275 : vector<1x20xf32> to vector<1x20xbf16>
    %cst_67 = arith.constant dense<0.000000e+00> : vector<1x80xf32>
    %281 = tpu.matmul %280, %33, %cst_67 {dimension_numbers = #tpu.dot_dimension_numbers<[1], [0], [0], [1], [0, 0, 1, 1], [], []>} : vector<1x20xbf16>, vector<20x80xbf16>, vector<1x80xf32> -> vector<1x80xf32>
    %282 = arith.addf %279, %281 : vector<1x80xf32>
    %283 = arith.negf %282 : vector<1x80xf32>
    %284 = math.exp %283 : vector<1x80xf32>
    %cst_68 = arith.constant 1.000000e+00 : f32
    %285 = vector.broadcast %cst_68 : f32 to vector<1x80xf32>
    %286 = arith.addf %285, %284 : vector<1x80xf32>
    %287 = arith.divf %285, %286 : vector<1x80xf32>
    %288 = vector.extract_strided_slice %282 {offsets = [0, 40], sizes = [1, 20], strides = [1, 1]} : vector<1x80xf32> to vector<1x20xf32>
    %289 = math.tanh %288 : vector<1x20xf32>
    %290 = vector.extract_strided_slice %287 {offsets = [0, 0], sizes = [1, 20], strides = [1, 1]} : vector<1x80xf32> to vector<1x20xf32>
    %291 = vector.extract_strided_slice %287 {offsets = [0, 20], sizes = [1, 20], strides = [1, 1]} : vector<1x80xf32> to vector<1x20xf32>
    %292 = vector.extract_strided_slice %287 {offsets = [0, 60], sizes = [1, 20], strides = [1, 1]} : vector<1x80xf32> to vector<1x20xf32>
    %293 = arith.mulf %291, %273 : vector<1x20xf32>
    %294 = arith.mulf %290, %289 : vector<1x20xf32>
    %295 = arith.addf %293, %294 : vector<1x20xf32>
    %296 = math.tanh %295 : vector<1x20xf32>
    %297 = arith.mulf %292, %296 : vector<1x20xf32>
    %298 = arith.index_cast %c11_i32 : i32 to index
    %c0_69 = arith.constant 0 : index
    %299 = vector.load %arg12[%298, %c0_69] : memref<48x20xf32, #tpu.memory_space<vmem>>, vector<1x20xf32>
    tpu.vector_store %arg12[%298, %c0_69], %297 {strides = array<i32>} : memref<48x20xf32, #tpu.memory_space<vmem>>, vector<1x20xf32>,
    %c12_i32 = arith.constant 12 : i32
    %300 = arith.index_cast %c12_i32 : i32 to index
    %c0_70 = arith.constant 0 : index
    %301 = vector.load %arg11[%300, %c0_70] : memref<48x80xf32, #tpu.memory_space<vmem>>, vector<1x80xf32>
    %302 = arith.truncf %297 : vector<1x20xf32> to vector<1x20xbf16>
    %cst_71 = arith.constant dense<0.000000e+00> : vector<1x80xf32>
    %303 = tpu.matmul %302, %33, %cst_71 {dimension_numbers = #tpu.dot_dimension_numbers<[1], [0], [0], [1], [0, 0, 1, 1], [], []>} : vector<1x20xbf16>, vector<20x80xbf16>, vector<1x80xf32> -> vector<1x80xf32>
    %304 = arith.addf %301, %303 : vector<1x80xf32>
    %305 = arith.negf %304 : vector<1x80xf32>
    %306 = math.exp %305 : vector<1x80xf32>
    %cst_72 = arith.constant 1.000000e+00 : f32
    %307 = vector.broadcast %cst_72 : f32 to vector<1x80xf32>
    %308 = arith.addf %307, %306 : vector<1x80xf32>
    %309 = arith.divf %307, %308 : vector<1x80xf32>
    %310 = vector.extract_strided_slice %304 {offsets = [0, 40], sizes = [1, 20], strides = [1, 1]} : vector<1x80xf32> to vector<1x20xf32>
    %311 = math.tanh %310 : vector<1x20xf32>
    %312 = vector.extract_strided_slice %309 {offsets = [0, 0], sizes = [1, 20], strides = [1, 1]} : vector<1x80xf32> to vector<1x20xf32>
    %313 = vector.extract_strided_slice %309 {offsets = [0, 20], sizes = [1, 20], strides = [1, 1]} : vector<1x80xf32> to vector<1x20xf32>
    %314 = vector.extract_strided_slice %309 {offsets = [0, 60], sizes = [1, 20], strides = [1, 1]} : vector<1x80xf32> to vector<1x20xf32>
    %315 = arith.mulf %313, %295 : vector<1x20xf32>
    %316 = arith.mulf %312, %311 : vector<1x20xf32>
    %317 = arith.addf %315, %316 : vector<1x20xf32>
    %318 = math.tanh %317 : vector<1x20xf32>
    %319 = arith.mulf %314, %318 : vector<1x20xf32>
    %320 = arith.index_cast %c12_i32 : i32 to index
    %c0_73 = arith.constant 0 : index
    %321 = vector.load %arg12[%320, %c0_73] : memref<48x20xf32, #tpu.memory_space<vmem>>, vector<1x20xf32>
    tpu.vector_store %arg12[%320, %c0_73], %319 {strides = array<i32>} : memref<48x20xf32, #tpu.memory_space<vmem>>, vector<1x20xf32>,
    %c13_i32 = arith.constant 13 : i32
    %322 = arith.index_cast %c13_i32 : i32 to index
    %c0_74 = arith.constant 0 : index
    %323 = vector.load %arg11[%322, %c0_74] : memref<48x80xf32, #tpu.memory_space<vmem>>, vector<1x80xf32>
    %324 = arith.truncf %319 : vector<1x20xf32> to vector<1x20xbf16>
    %cst_75 = arith.constant dense<0.000000e+00> : vector<1x80xf32>
    %325 = tpu.matmul %324, %33, %cst_75 {dimension_numbers = #tpu.dot_dimension_numbers<[1], [0], [0], [1], [0, 0, 1, 1], [], []>} : vector<1x20xbf16>, vector<20x80xbf16>, vector<1x80xf32> -> vector<1x80xf32>
    %326 = arith.addf %323, %325 : vector<1x80xf32>
    %327 = arith.negf %326 : vector<1x80xf32>
    %328 = math.exp %327 : vector<1x80xf32>
    %cst_76 = arith.constant 1.000000e+00 : f32
    %329 = vector.broadcast %cst_76 : f32 to vector<1x80xf32>
    %330 = arith.addf %329, %328 : vector<1x80xf32>
    %331 = arith.divf %329, %330 : vector<1x80xf32>
    %332 = vector.extract_strided_slice %326 {offsets = [0, 40], sizes = [1, 20], strides = [1, 1]} : vector<1x80xf32> to vector<1x20xf32>
    %333 = math.tanh %332 : vector<1x20xf32>
    %334 = vector.extract_strided_slice %331 {offsets = [0, 0], sizes = [1, 20], strides = [1, 1]} : vector<1x80xf32> to vector<1x20xf32>
    %335 = vector.extract_strided_slice %331 {offsets = [0, 20], sizes = [1, 20], strides = [1, 1]} : vector<1x80xf32> to vector<1x20xf32>
    %336 = vector.extract_strided_slice %331 {offsets = [0, 60], sizes = [1, 20], strides = [1, 1]} : vector<1x80xf32> to vector<1x20xf32>
    %337 = arith.mulf %335, %317 : vector<1x20xf32>
    %338 = arith.mulf %334, %333 : vector<1x20xf32>
    %339 = arith.addf %337, %338 : vector<1x20xf32>
    %340 = math.tanh %339 : vector<1x20xf32>
    %341 = arith.mulf %336, %340 : vector<1x20xf32>
    %342 = arith.index_cast %c13_i32 : i32 to index
    %c0_77 = arith.constant 0 : index
    %343 = vector.load %arg12[%342, %c0_77] : memref<48x20xf32, #tpu.memory_space<vmem>>, vector<1x20xf32>
    tpu.vector_store %arg12[%342, %c0_77], %341 {strides = array<i32>} : memref<48x20xf32, #tpu.memory_space<vmem>>, vector<1x20xf32>,
    %c14_i32 = arith.constant 14 : i32
    %344 = arith.index_cast %c14_i32 : i32 to index
    %c0_78 = arith.constant 0 : index
    %345 = vector.load %arg11[%344, %c0_78] : memref<48x80xf32, #tpu.memory_space<vmem>>, vector<1x80xf32>
    %346 = arith.truncf %341 : vector<1x20xf32> to vector<1x20xbf16>
    %cst_79 = arith.constant dense<0.000000e+00> : vector<1x80xf32>
    %347 = tpu.matmul %346, %33, %cst_79 {dimension_numbers = #tpu.dot_dimension_numbers<[1], [0], [0], [1], [0, 0, 1, 1], [], []>} : vector<1x20xbf16>, vector<20x80xbf16>, vector<1x80xf32> -> vector<1x80xf32>
    %348 = arith.addf %345, %347 : vector<1x80xf32>
    %349 = arith.negf %348 : vector<1x80xf32>
    %350 = math.exp %349 : vector<1x80xf32>
    %cst_80 = arith.constant 1.000000e+00 : f32
    %351 = vector.broadcast %cst_80 : f32 to vector<1x80xf32>
    %352 = arith.addf %351, %350 : vector<1x80xf32>
    %353 = arith.divf %351, %352 : vector<1x80xf32>
    %354 = vector.extract_strided_slice %348 {offsets = [0, 40], sizes = [1, 20], strides = [1, 1]} : vector<1x80xf32> to vector<1x20xf32>
    %355 = math.tanh %354 : vector<1x20xf32>
    %356 = vector.extract_strided_slice %353 {offsets = [0, 0], sizes = [1, 20], strides = [1, 1]} : vector<1x80xf32> to vector<1x20xf32>
    %357 = vector.extract_strided_slice %353 {offsets = [0, 20], sizes = [1, 20], strides = [1, 1]} : vector<1x80xf32> to vector<1x20xf32>
    %358 = vector.extract_strided_slice %353 {offsets = [0, 60], sizes = [1, 20], strides = [1, 1]} : vector<1x80xf32> to vector<1x20xf32>
    %359 = arith.mulf %357, %339 : vector<1x20xf32>
    %360 = arith.mulf %356, %355 : vector<1x20xf32>
    %361 = arith.addf %359, %360 : vector<1x20xf32>
    %362 = math.tanh %361 : vector<1x20xf32>
    %363 = arith.mulf %358, %362 : vector<1x20xf32>
    %364 = arith.index_cast %c14_i32 : i32 to index
    %c0_81 = arith.constant 0 : index
    %365 = vector.load %arg12[%364, %c0_81] : memref<48x20xf32, #tpu.memory_space<vmem>>, vector<1x20xf32>
    tpu.vector_store %arg12[%364, %c0_81], %363 {strides = array<i32>} : memref<48x20xf32, #tpu.memory_space<vmem>>, vector<1x20xf32>,
    %c15_i32 = arith.constant 15 : i32
    %366 = arith.index_cast %c15_i32 : i32 to index
    %c0_82 = arith.constant 0 : index
    %367 = vector.load %arg11[%366, %c0_82] : memref<48x80xf32, #tpu.memory_space<vmem>>, vector<1x80xf32>
    %368 = arith.truncf %363 : vector<1x20xf32> to vector<1x20xbf16>
    %cst_83 = arith.constant dense<0.000000e+00> : vector<1x80xf32>
    %369 = tpu.matmul %368, %33, %cst_83 {dimension_numbers = #tpu.dot_dimension_numbers<[1], [0], [0], [1], [0, 0, 1, 1], [], []>} : vector<1x20xbf16>, vector<20x80xbf16>, vector<1x80xf32> -> vector<1x80xf32>
    %370 = arith.addf %367, %369 : vector<1x80xf32>
    %371 = arith.negf %370 : vector<1x80xf32>
    %372 = math.exp %371 : vector<1x80xf32>
    %cst_84 = arith.constant 1.000000e+00 : f32
    %373 = vector.broadcast %cst_84 : f32 to vector<1x80xf32>
    %374 = arith.addf %373, %372 : vector<1x80xf32>
    %375 = arith.divf %373, %374 : vector<1x80xf32>
    %376 = vector.extract_strided_slice %370 {offsets = [0, 40], sizes = [1, 20], strides = [1, 1]} : vector<1x80xf32> to vector<1x20xf32>
    %377 = math.tanh %376 : vector<1x20xf32>
    %378 = vector.extract_strided_slice %375 {offsets = [0, 0], sizes = [1, 20], strides = [1, 1]} : vector<1x80xf32> to vector<1x20xf32>
    %379 = vector.extract_strided_slice %375 {offsets = [0, 20], sizes = [1, 20], strides = [1, 1]} : vector<1x80xf32> to vector<1x20xf32>
    %380 = vector.extract_strided_slice %375 {offsets = [0, 60], sizes = [1, 20], strides = [1, 1]} : vector<1x80xf32> to vector<1x20xf32>
    %381 = arith.mulf %379, %361 : vector<1x20xf32>
    %382 = arith.mulf %378, %377 : vector<1x20xf32>
    %383 = arith.addf %381, %382 : vector<1x20xf32>
    %384 = math.tanh %383 : vector<1x20xf32>
    %385 = arith.mulf %380, %384 : vector<1x20xf32>
    %386 = arith.index_cast %c15_i32 : i32 to index
    %c0_85 = arith.constant 0 : index
    %387 = vector.load %arg12[%386, %c0_85] : memref<48x20xf32, #tpu.memory_space<vmem>>, vector<1x20xf32>
    tpu.vector_store %arg12[%386, %c0_85], %385 {strides = array<i32>} : memref<48x20xf32, #tpu.memory_space<vmem>>, vector<1x20xf32>,
    %c16_i32 = arith.constant 16 : i32
    %388 = arith.index_cast %c16_i32 : i32 to index
    %c0_86 = arith.constant 0 : index
    %389 = vector.load %arg11[%388, %c0_86] : memref<48x80xf32, #tpu.memory_space<vmem>>, vector<1x80xf32>
    %390 = arith.truncf %385 : vector<1x20xf32> to vector<1x20xbf16>
    %cst_87 = arith.constant dense<0.000000e+00> : vector<1x80xf32>
    %391 = tpu.matmul %390, %33, %cst_87 {dimension_numbers = #tpu.dot_dimension_numbers<[1], [0], [0], [1], [0, 0, 1, 1], [], []>} : vector<1x20xbf16>, vector<20x80xbf16>, vector<1x80xf32> -> vector<1x80xf32>
    %392 = arith.addf %389, %391 : vector<1x80xf32>
    %393 = arith.negf %392 : vector<1x80xf32>
    %394 = math.exp %393 : vector<1x80xf32>
    %cst_88 = arith.constant 1.000000e+00 : f32
    %395 = vector.broadcast %cst_88 : f32 to vector<1x80xf32>
    %396 = arith.addf %395, %394 : vector<1x80xf32>
    %397 = arith.divf %395, %396 : vector<1x80xf32>
    %398 = vector.extract_strided_slice %392 {offsets = [0, 40], sizes = [1, 20], strides = [1, 1]} : vector<1x80xf32> to vector<1x20xf32>
    %399 = math.tanh %398 : vector<1x20xf32>
    %400 = vector.extract_strided_slice %397 {offsets = [0, 0], sizes = [1, 20], strides = [1, 1]} : vector<1x80xf32> to vector<1x20xf32>
    %401 = vector.extract_strided_slice %397 {offsets = [0, 20], sizes = [1, 20], strides = [1, 1]} : vector<1x80xf32> to vector<1x20xf32>
    %402 = vector.extract_strided_slice %397 {offsets = [0, 60], sizes = [1, 20], strides = [1, 1]} : vector<1x80xf32> to vector<1x20xf32>
    %403 = arith.mulf %401, %383 : vector<1x20xf32>
    %404 = arith.mulf %400, %399 : vector<1x20xf32>
    %405 = arith.addf %403, %404 : vector<1x20xf32>
    %406 = math.tanh %405 : vector<1x20xf32>
    %407 = arith.mulf %402, %406 : vector<1x20xf32>
    %408 = arith.index_cast %c16_i32 : i32 to index
    %c0_89 = arith.constant 0 : index
    %409 = vector.load %arg12[%408, %c0_89] : memref<48x20xf32, #tpu.memory_space<vmem>>, vector<1x20xf32>
    tpu.vector_store %arg12[%408, %c0_89], %407 {strides = array<i32>} : memref<48x20xf32, #tpu.memory_space<vmem>>, vector<1x20xf32>,
    %c17_i32 = arith.constant 17 : i32
    %410 = arith.index_cast %c17_i32 : i32 to index
    %c0_90 = arith.constant 0 : index
    %411 = vector.load %arg11[%410, %c0_90] : memref<48x80xf32, #tpu.memory_space<vmem>>, vector<1x80xf32>
    %412 = arith.truncf %407 : vector<1x20xf32> to vector<1x20xbf16>
    %cst_91 = arith.constant dense<0.000000e+00> : vector<1x80xf32>
    %413 = tpu.matmul %412, %33, %cst_91 {dimension_numbers = #tpu.dot_dimension_numbers<[1], [0], [0], [1], [0, 0, 1, 1], [], []>} : vector<1x20xbf16>, vector<20x80xbf16>, vector<1x80xf32> -> vector<1x80xf32>
    %414 = arith.addf %411, %413 : vector<1x80xf32>
    %415 = arith.negf %414 : vector<1x80xf32>
    %416 = math.exp %415 : vector<1x80xf32>
    %cst_92 = arith.constant 1.000000e+00 : f32
    %417 = vector.broadcast %cst_92 : f32 to vector<1x80xf32>
    %418 = arith.addf %417, %416 : vector<1x80xf32>
    %419 = arith.divf %417, %418 : vector<1x80xf32>
    %420 = vector.extract_strided_slice %414 {offsets = [0, 40], sizes = [1, 20], strides = [1, 1]} : vector<1x80xf32> to vector<1x20xf32>
    %421 = math.tanh %420 : vector<1x20xf32>
    %422 = vector.extract_strided_slice %419 {offsets = [0, 0], sizes = [1, 20], strides = [1, 1]} : vector<1x80xf32> to vector<1x20xf32>
    %423 = vector.extract_strided_slice %419 {offsets = [0, 20], sizes = [1, 20], strides = [1, 1]} : vector<1x80xf32> to vector<1x20xf32>
    %424 = vector.extract_strided_slice %419 {offsets = [0, 60], sizes = [1, 20], strides = [1, 1]} : vector<1x80xf32> to vector<1x20xf32>
    %425 = arith.mulf %423, %405 : vector<1x20xf32>
    %426 = arith.mulf %422, %421 : vector<1x20xf32>
    %427 = arith.addf %425, %426 : vector<1x20xf32>
    %428 = math.tanh %427 : vector<1x20xf32>
    %429 = arith.mulf %424, %428 : vector<1x20xf32>
    %430 = arith.index_cast %c17_i32 : i32 to index
    %c0_93 = arith.constant 0 : index
    %431 = vector.load %arg12[%430, %c0_93] : memref<48x20xf32, #tpu.memory_space<vmem>>, vector<1x20xf32>
    tpu.vector_store %arg12[%430, %c0_93], %429 {strides = array<i32>} : memref<48x20xf32, #tpu.memory_space<vmem>>, vector<1x20xf32>,
    %c18_i32 = arith.constant 18 : i32
    %432 = arith.index_cast %c18_i32 : i32 to index
    %c0_94 = arith.constant 0 : index
    %433 = vector.load %arg11[%432, %c0_94] : memref<48x80xf32, #tpu.memory_space<vmem>>, vector<1x80xf32>
    %434 = arith.truncf %429 : vector<1x20xf32> to vector<1x20xbf16>
    %cst_95 = arith.constant dense<0.000000e+00> : vector<1x80xf32>
    %435 = tpu.matmul %434, %33, %cst_95 {dimension_numbers = #tpu.dot_dimension_numbers<[1], [0], [0], [1], [0, 0, 1, 1], [], []>} : vector<1x20xbf16>, vector<20x80xbf16>, vector<1x80xf32> -> vector<1x80xf32>
    %436 = arith.addf %433, %435 : vector<1x80xf32>
    %437 = arith.negf %436 : vector<1x80xf32>
    %438 = math.exp %437 : vector<1x80xf32>
    %cst_96 = arith.constant 1.000000e+00 : f32
    %439 = vector.broadcast %cst_96 : f32 to vector<1x80xf32>
    %440 = arith.addf %439, %438 : vector<1x80xf32>
    %441 = arith.divf %439, %440 : vector<1x80xf32>
    %442 = vector.extract_strided_slice %436 {offsets = [0, 40], sizes = [1, 20], strides = [1, 1]} : vector<1x80xf32> to vector<1x20xf32>
    %443 = math.tanh %442 : vector<1x20xf32>
    %444 = vector.extract_strided_slice %441 {offsets = [0, 0], sizes = [1, 20], strides = [1, 1]} : vector<1x80xf32> to vector<1x20xf32>
    %445 = vector.extract_strided_slice %441 {offsets = [0, 20], sizes = [1, 20], strides = [1, 1]} : vector<1x80xf32> to vector<1x20xf32>
    %446 = vector.extract_strided_slice %441 {offsets = [0, 60], sizes = [1, 20], strides = [1, 1]} : vector<1x80xf32> to vector<1x20xf32>
    %447 = arith.mulf %445, %427 : vector<1x20xf32>
    %448 = arith.mulf %444, %443 : vector<1x20xf32>
    %449 = arith.addf %447, %448 : vector<1x20xf32>
    %450 = math.tanh %449 : vector<1x20xf32>
    %451 = arith.mulf %446, %450 : vector<1x20xf32>
    %452 = arith.index_cast %c18_i32 : i32 to index
    %c0_97 = arith.constant 0 : index
    %453 = vector.load %arg12[%452, %c0_97] : memref<48x20xf32, #tpu.memory_space<vmem>>, vector<1x20xf32>
    tpu.vector_store %arg12[%452, %c0_97], %451 {strides = array<i32>} : memref<48x20xf32, #tpu.memory_space<vmem>>, vector<1x20xf32>,
    %c19_i32 = arith.constant 19 : i32
    %454 = arith.index_cast %c19_i32 : i32 to index
    %c0_98 = arith.constant 0 : index
    %455 = vector.load %arg11[%454, %c0_98] : memref<48x80xf32, #tpu.memory_space<vmem>>, vector<1x80xf32>
    %456 = arith.truncf %451 : vector<1x20xf32> to vector<1x20xbf16>
    %cst_99 = arith.constant dense<0.000000e+00> : vector<1x80xf32>
    %457 = tpu.matmul %456, %33, %cst_99 {dimension_numbers = #tpu.dot_dimension_numbers<[1], [0], [0], [1], [0, 0, 1, 1], [], []>} : vector<1x20xbf16>, vector<20x80xbf16>, vector<1x80xf32> -> vector<1x80xf32>
    %458 = arith.addf %455, %457 : vector<1x80xf32>
    %459 = arith.negf %458 : vector<1x80xf32>
    %460 = math.exp %459 : vector<1x80xf32>
    %cst_100 = arith.constant 1.000000e+00 : f32
    %461 = vector.broadcast %cst_100 : f32 to vector<1x80xf32>
    %462 = arith.addf %461, %460 : vector<1x80xf32>
    %463 = arith.divf %461, %462 : vector<1x80xf32>
    %464 = vector.extract_strided_slice %458 {offsets = [0, 40], sizes = [1, 20], strides = [1, 1]} : vector<1x80xf32> to vector<1x20xf32>
    %465 = math.tanh %464 : vector<1x20xf32>
    %466 = vector.extract_strided_slice %463 {offsets = [0, 0], sizes = [1, 20], strides = [1, 1]} : vector<1x80xf32> to vector<1x20xf32>
    %467 = vector.extract_strided_slice %463 {offsets = [0, 20], sizes = [1, 20], strides = [1, 1]} : vector<1x80xf32> to vector<1x20xf32>
    %468 = vector.extract_strided_slice %463 {offsets = [0, 60], sizes = [1, 20], strides = [1, 1]} : vector<1x80xf32> to vector<1x20xf32>
    %469 = arith.mulf %467, %449 : vector<1x20xf32>
    %470 = arith.mulf %466, %465 : vector<1x20xf32>
    %471 = arith.addf %469, %470 : vector<1x20xf32>
    %472 = math.tanh %471 : vector<1x20xf32>
    %473 = arith.mulf %468, %472 : vector<1x20xf32>
    %474 = arith.index_cast %c19_i32 : i32 to index
    %c0_101 = arith.constant 0 : index
    %475 = vector.load %arg12[%474, %c0_101] : memref<48x20xf32, #tpu.memory_space<vmem>>, vector<1x20xf32>
    tpu.vector_store %arg12[%474, %c0_101], %473 {strides = array<i32>} : memref<48x20xf32, #tpu.memory_space<vmem>>, vector<1x20xf32>,
    %c20_i32 = arith.constant 20 : i32
    %476 = arith.index_cast %c20_i32 : i32 to index
    %c0_102 = arith.constant 0 : index
    %477 = vector.load %arg11[%476, %c0_102] : memref<48x80xf32, #tpu.memory_space<vmem>>, vector<1x80xf32>
    %478 = arith.truncf %473 : vector<1x20xf32> to vector<1x20xbf16>
    %cst_103 = arith.constant dense<0.000000e+00> : vector<1x80xf32>
    %479 = tpu.matmul %478, %33, %cst_103 {dimension_numbers = #tpu.dot_dimension_numbers<[1], [0], [0], [1], [0, 0, 1, 1], [], []>} : vector<1x20xbf16>, vector<20x80xbf16>, vector<1x80xf32> -> vector<1x80xf32>
    %480 = arith.addf %477, %479 : vector<1x80xf32>
    %481 = arith.negf %480 : vector<1x80xf32>
    %482 = math.exp %481 : vector<1x80xf32>
    %cst_104 = arith.constant 1.000000e+00 : f32
    %483 = vector.broadcast %cst_104 : f32 to vector<1x80xf32>
    %484 = arith.addf %483, %482 : vector<1x80xf32>
    %485 = arith.divf %483, %484 : vector<1x80xf32>
    %486 = vector.extract_strided_slice %480 {offsets = [0, 40], sizes = [1, 20], strides = [1, 1]} : vector<1x80xf32> to vector<1x20xf32>
    %487 = math.tanh %486 : vector<1x20xf32>
    %488 = vector.extract_strided_slice %485 {offsets = [0, 0], sizes = [1, 20], strides = [1, 1]} : vector<1x80xf32> to vector<1x20xf32>
    %489 = vector.extract_strided_slice %485 {offsets = [0, 20], sizes = [1, 20], strides = [1, 1]} : vector<1x80xf32> to vector<1x20xf32>
    %490 = vector.extract_strided_slice %485 {offsets = [0, 60], sizes = [1, 20], strides = [1, 1]} : vector<1x80xf32> to vector<1x20xf32>
    %491 = arith.mulf %489, %471 : vector<1x20xf32>
    %492 = arith.mulf %488, %487 : vector<1x20xf32>
    %493 = arith.addf %491, %492 : vector<1x20xf32>
    %494 = math.tanh %493 : vector<1x20xf32>
    %495 = arith.mulf %490, %494 : vector<1x20xf32>
    %496 = arith.index_cast %c20_i32 : i32 to index
    %c0_105 = arith.constant 0 : index
    %497 = vector.load %arg12[%496, %c0_105] : memref<48x20xf32, #tpu.memory_space<vmem>>, vector<1x20xf32>
    tpu.vector_store %arg12[%496, %c0_105], %495 {strides = array<i32>} : memref<48x20xf32, #tpu.memory_space<vmem>>, vector<1x20xf32>,
    %c21_i32 = arith.constant 21 : i32
    %498 = arith.index_cast %c21_i32 : i32 to index
    %c0_106 = arith.constant 0 : index
    %499 = vector.load %arg11[%498, %c0_106] : memref<48x80xf32, #tpu.memory_space<vmem>>, vector<1x80xf32>
    %500 = arith.truncf %495 : vector<1x20xf32> to vector<1x20xbf16>
    %cst_107 = arith.constant dense<0.000000e+00> : vector<1x80xf32>
    %501 = tpu.matmul %500, %33, %cst_107 {dimension_numbers = #tpu.dot_dimension_numbers<[1], [0], [0], [1], [0, 0, 1, 1], [], []>} : vector<1x20xbf16>, vector<20x80xbf16>, vector<1x80xf32> -> vector<1x80xf32>
    %502 = arith.addf %499, %501 : vector<1x80xf32>
    %503 = arith.negf %502 : vector<1x80xf32>
    %504 = math.exp %503 : vector<1x80xf32>
    %cst_108 = arith.constant 1.000000e+00 : f32
    %505 = vector.broadcast %cst_108 : f32 to vector<1x80xf32>
    %506 = arith.addf %505, %504 : vector<1x80xf32>
    %507 = arith.divf %505, %506 : vector<1x80xf32>
    %508 = vector.extract_strided_slice %502 {offsets = [0, 40], sizes = [1, 20], strides = [1, 1]} : vector<1x80xf32> to vector<1x20xf32>
    %509 = math.tanh %508 : vector<1x20xf32>
    %510 = vector.extract_strided_slice %507 {offsets = [0, 0], sizes = [1, 20], strides = [1, 1]} : vector<1x80xf32> to vector<1x20xf32>
    %511 = vector.extract_strided_slice %507 {offsets = [0, 20], sizes = [1, 20], strides = [1, 1]} : vector<1x80xf32> to vector<1x20xf32>
    %512 = vector.extract_strided_slice %507 {offsets = [0, 60], sizes = [1, 20], strides = [1, 1]} : vector<1x80xf32> to vector<1x20xf32>
    %513 = arith.mulf %511, %493 : vector<1x20xf32>
    %514 = arith.mulf %510, %509 : vector<1x20xf32>
    %515 = arith.addf %513, %514 : vector<1x20xf32>
    %516 = math.tanh %515 : vector<1x20xf32>
    %517 = arith.mulf %512, %516 : vector<1x20xf32>
    %518 = arith.index_cast %c21_i32 : i32 to index
    %c0_109 = arith.constant 0 : index
    %519 = vector.load %arg12[%518, %c0_109] : memref<48x20xf32, #tpu.memory_space<vmem>>, vector<1x20xf32>
    tpu.vector_store %arg12[%518, %c0_109], %517 {strides = array<i32>} : memref<48x20xf32, #tpu.memory_space<vmem>>, vector<1x20xf32>,
    %c22_i32 = arith.constant 22 : i32
    %520 = arith.index_cast %c22_i32 : i32 to index
    %c0_110 = arith.constant 0 : index
    %521 = vector.load %arg11[%520, %c0_110] : memref<48x80xf32, #tpu.memory_space<vmem>>, vector<1x80xf32>
    %522 = arith.truncf %517 : vector<1x20xf32> to vector<1x20xbf16>
    %cst_111 = arith.constant dense<0.000000e+00> : vector<1x80xf32>
    %523 = tpu.matmul %522, %33, %cst_111 {dimension_numbers = #tpu.dot_dimension_numbers<[1], [0], [0], [1], [0, 0, 1, 1], [], []>} : vector<1x20xbf16>, vector<20x80xbf16>, vector<1x80xf32> -> vector<1x80xf32>
    %524 = arith.addf %521, %523 : vector<1x80xf32>
    %525 = arith.negf %524 : vector<1x80xf32>
    %526 = math.exp %525 : vector<1x80xf32>
    %cst_112 = arith.constant 1.000000e+00 : f32
    %527 = vector.broadcast %cst_112 : f32 to vector<1x80xf32>
    %528 = arith.addf %527, %526 : vector<1x80xf32>
    %529 = arith.divf %527, %528 : vector<1x80xf32>
    %530 = vector.extract_strided_slice %524 {offsets = [0, 40], sizes = [1, 20], strides = [1, 1]} : vector<1x80xf32> to vector<1x20xf32>
    %531 = math.tanh %530 : vector<1x20xf32>
    %532 = vector.extract_strided_slice %529 {offsets = [0, 0], sizes = [1, 20], strides = [1, 1]} : vector<1x80xf32> to vector<1x20xf32>
    %533 = vector.extract_strided_slice %529 {offsets = [0, 20], sizes = [1, 20], strides = [1, 1]} : vector<1x80xf32> to vector<1x20xf32>
    %534 = vector.extract_strided_slice %529 {offsets = [0, 60], sizes = [1, 20], strides = [1, 1]} : vector<1x80xf32> to vector<1x20xf32>
    %535 = arith.mulf %533, %515 : vector<1x20xf32>
    %536 = arith.mulf %532, %531 : vector<1x20xf32>
    %537 = arith.addf %535, %536 : vector<1x20xf32>
    %538 = math.tanh %537 : vector<1x20xf32>
    %539 = arith.mulf %534, %538 : vector<1x20xf32>
    %540 = arith.index_cast %c22_i32 : i32 to index
    %c0_113 = arith.constant 0 : index
    %541 = vector.load %arg12[%540, %c0_113] : memref<48x20xf32, #tpu.memory_space<vmem>>, vector<1x20xf32>
    tpu.vector_store %arg12[%540, %c0_113], %539 {strides = array<i32>} : memref<48x20xf32, #tpu.memory_space<vmem>>, vector<1x20xf32>,
    %c23_i32 = arith.constant 23 : i32
    %542 = arith.index_cast %c23_i32 : i32 to index
    %c0_114 = arith.constant 0 : index
    %543 = vector.load %arg11[%542, %c0_114] : memref<48x80xf32, #tpu.memory_space<vmem>>, vector<1x80xf32>
    %544 = arith.truncf %539 : vector<1x20xf32> to vector<1x20xbf16>
    %cst_115 = arith.constant dense<0.000000e+00> : vector<1x80xf32>
    %545 = tpu.matmul %544, %33, %cst_115 {dimension_numbers = #tpu.dot_dimension_numbers<[1], [0], [0], [1], [0, 0, 1, 1], [], []>} : vector<1x20xbf16>, vector<20x80xbf16>, vector<1x80xf32> -> vector<1x80xf32>
    %546 = arith.addf %543, %545 : vector<1x80xf32>
    %547 = arith.negf %546 : vector<1x80xf32>
    %548 = math.exp %547 : vector<1x80xf32>
    %cst_116 = arith.constant 1.000000e+00 : f32
    %549 = vector.broadcast %cst_116 : f32 to vector<1x80xf32>
    %550 = arith.addf %549, %548 : vector<1x80xf32>
    %551 = arith.divf %549, %550 : vector<1x80xf32>
    %552 = vector.extract_strided_slice %546 {offsets = [0, 40], sizes = [1, 20], strides = [1, 1]} : vector<1x80xf32> to vector<1x20xf32>
    %553 = math.tanh %552 : vector<1x20xf32>
    %554 = vector.extract_strided_slice %551 {offsets = [0, 0], sizes = [1, 20], strides = [1, 1]} : vector<1x80xf32> to vector<1x20xf32>
    %555 = vector.extract_strided_slice %551 {offsets = [0, 20], sizes = [1, 20], strides = [1, 1]} : vector<1x80xf32> to vector<1x20xf32>
    %556 = vector.extract_strided_slice %551 {offsets = [0, 60], sizes = [1, 20], strides = [1, 1]} : vector<1x80xf32> to vector<1x20xf32>
    %557 = arith.mulf %555, %537 : vector<1x20xf32>
    %558 = arith.mulf %554, %553 : vector<1x20xf32>
    %559 = arith.addf %557, %558 : vector<1x20xf32>
    %560 = math.tanh %559 : vector<1x20xf32>
    %561 = arith.mulf %556, %560 : vector<1x20xf32>
    %562 = arith.index_cast %c23_i32 : i32 to index
    %c0_117 = arith.constant 0 : index
    %563 = vector.load %arg12[%562, %c0_117] : memref<48x20xf32, #tpu.memory_space<vmem>>, vector<1x20xf32>
    tpu.vector_store %arg12[%562, %c0_117], %561 {strides = array<i32>} : memref<48x20xf32, #tpu.memory_space<vmem>>, vector<1x20xf32>,
    %c24_i32 = arith.constant 24 : i32
    %564 = arith.index_cast %c24_i32 : i32 to index
    %c0_118 = arith.constant 0 : index
    %565 = vector.load %arg11[%564, %c0_118] : memref<48x80xf32, #tpu.memory_space<vmem>>, vector<1x80xf32>
    %566 = arith.truncf %561 : vector<1x20xf32> to vector<1x20xbf16>
    %cst_119 = arith.constant dense<0.000000e+00> : vector<1x80xf32>
    %567 = tpu.matmul %566, %33, %cst_119 {dimension_numbers = #tpu.dot_dimension_numbers<[1], [0], [0], [1], [0, 0, 1, 1], [], []>} : vector<1x20xbf16>, vector<20x80xbf16>, vector<1x80xf32> -> vector<1x80xf32>
    %568 = arith.addf %565, %567 : vector<1x80xf32>
    %569 = arith.negf %568 : vector<1x80xf32>
    %570 = math.exp %569 : vector<1x80xf32>
    %cst_120 = arith.constant 1.000000e+00 : f32
    %571 = vector.broadcast %cst_120 : f32 to vector<1x80xf32>
    %572 = arith.addf %571, %570 : vector<1x80xf32>
    %573 = arith.divf %571, %572 : vector<1x80xf32>
    %574 = vector.extract_strided_slice %568 {offsets = [0, 40], sizes = [1, 20], strides = [1, 1]} : vector<1x80xf32> to vector<1x20xf32>
    %575 = math.tanh %574 : vector<1x20xf32>
    %576 = vector.extract_strided_slice %573 {offsets = [0, 0], sizes = [1, 20], strides = [1, 1]} : vector<1x80xf32> to vector<1x20xf32>
    %577 = vector.extract_strided_slice %573 {offsets = [0, 20], sizes = [1, 20], strides = [1, 1]} : vector<1x80xf32> to vector<1x20xf32>
    %578 = vector.extract_strided_slice %573 {offsets = [0, 60], sizes = [1, 20], strides = [1, 1]} : vector<1x80xf32> to vector<1x20xf32>
    %579 = arith.mulf %577, %559 : vector<1x20xf32>
    %580 = arith.mulf %576, %575 : vector<1x20xf32>
    %581 = arith.addf %579, %580 : vector<1x20xf32>
    %582 = math.tanh %581 : vector<1x20xf32>
    %583 = arith.mulf %578, %582 : vector<1x20xf32>
    %584 = arith.index_cast %c24_i32 : i32 to index
    %c0_121 = arith.constant 0 : index
    %585 = vector.load %arg12[%584, %c0_121] : memref<48x20xf32, #tpu.memory_space<vmem>>, vector<1x20xf32>
    tpu.vector_store %arg12[%584, %c0_121], %583 {strides = array<i32>} : memref<48x20xf32, #tpu.memory_space<vmem>>, vector<1x20xf32>,
    %c25_i32 = arith.constant 25 : i32
    %586 = arith.index_cast %c25_i32 : i32 to index
    %c0_122 = arith.constant 0 : index
    %587 = vector.load %arg11[%586, %c0_122] : memref<48x80xf32, #tpu.memory_space<vmem>>, vector<1x80xf32>
    %588 = arith.truncf %583 : vector<1x20xf32> to vector<1x20xbf16>
    %cst_123 = arith.constant dense<0.000000e+00> : vector<1x80xf32>
    %589 = tpu.matmul %588, %33, %cst_123 {dimension_numbers = #tpu.dot_dimension_numbers<[1], [0], [0], [1], [0, 0, 1, 1], [], []>} : vector<1x20xbf16>, vector<20x80xbf16>, vector<1x80xf32> -> vector<1x80xf32>
    %590 = arith.addf %587, %589 : vector<1x80xf32>
    %591 = arith.negf %590 : vector<1x80xf32>
    %592 = math.exp %591 : vector<1x80xf32>
    %cst_124 = arith.constant 1.000000e+00 : f32
    %593 = vector.broadcast %cst_124 : f32 to vector<1x80xf32>
    %594 = arith.addf %593, %592 : vector<1x80xf32>
    %595 = arith.divf %593, %594 : vector<1x80xf32>
    %596 = vector.extract_strided_slice %590 {offsets = [0, 40], sizes = [1, 20], strides = [1, 1]} : vector<1x80xf32> to vector<1x20xf32>
    %597 = math.tanh %596 : vector<1x20xf32>
    %598 = vector.extract_strided_slice %595 {offsets = [0, 0], sizes = [1, 20], strides = [1, 1]} : vector<1x80xf32> to vector<1x20xf32>
    %599 = vector.extract_strided_slice %595 {offsets = [0, 20], sizes = [1, 20], strides = [1, 1]} : vector<1x80xf32> to vector<1x20xf32>
    %600 = vector.extract_strided_slice %595 {offsets = [0, 60], sizes = [1, 20], strides = [1, 1]} : vector<1x80xf32> to vector<1x20xf32>
    %601 = arith.mulf %599, %581 : vector<1x20xf32>
    %602 = arith.mulf %598, %597 : vector<1x20xf32>
    %603 = arith.addf %601, %602 : vector<1x20xf32>
    %604 = math.tanh %603 : vector<1x20xf32>
    %605 = arith.mulf %600, %604 : vector<1x20xf32>
    %606 = arith.index_cast %c25_i32 : i32 to index
    %c0_125 = arith.constant 0 : index
    %607 = vector.load %arg12[%606, %c0_125] : memref<48x20xf32, #tpu.memory_space<vmem>>, vector<1x20xf32>
    tpu.vector_store %arg12[%606, %c0_125], %605 {strides = array<i32>} : memref<48x20xf32, #tpu.memory_space<vmem>>, vector<1x20xf32>,
    %c26_i32 = arith.constant 26 : i32
    %608 = arith.index_cast %c26_i32 : i32 to index
    %c0_126 = arith.constant 0 : index
    %609 = vector.load %arg11[%608, %c0_126] : memref<48x80xf32, #tpu.memory_space<vmem>>, vector<1x80xf32>
    %610 = arith.truncf %605 : vector<1x20xf32> to vector<1x20xbf16>
    %cst_127 = arith.constant dense<0.000000e+00> : vector<1x80xf32>
    %611 = tpu.matmul %610, %33, %cst_127 {dimension_numbers = #tpu.dot_dimension_numbers<[1], [0], [0], [1], [0, 0, 1, 1], [], []>} : vector<1x20xbf16>, vector<20x80xbf16>, vector<1x80xf32> -> vector<1x80xf32>
    %612 = arith.addf %609, %611 : vector<1x80xf32>
    %613 = arith.negf %612 : vector<1x80xf32>
    %614 = math.exp %613 : vector<1x80xf32>
    %cst_128 = arith.constant 1.000000e+00 : f32
    %615 = vector.broadcast %cst_128 : f32 to vector<1x80xf32>
    %616 = arith.addf %615, %614 : vector<1x80xf32>
    %617 = arith.divf %615, %616 : vector<1x80xf32>
    %618 = vector.extract_strided_slice %612 {offsets = [0, 40], sizes = [1, 20], strides = [1, 1]} : vector<1x80xf32> to vector<1x20xf32>
    %619 = math.tanh %618 : vector<1x20xf32>
    %620 = vector.extract_strided_slice %617 {offsets = [0, 0], sizes = [1, 20], strides = [1, 1]} : vector<1x80xf32> to vector<1x20xf32>
    %621 = vector.extract_strided_slice %617 {offsets = [0, 20], sizes = [1, 20], strides = [1, 1]} : vector<1x80xf32> to vector<1x20xf32>
    %622 = vector.extract_strided_slice %617 {offsets = [0, 60], sizes = [1, 20], strides = [1, 1]} : vector<1x80xf32> to vector<1x20xf32>
    %623 = arith.mulf %621, %603 : vector<1x20xf32>
    %624 = arith.mulf %620, %619 : vector<1x20xf32>
    %625 = arith.addf %623, %624 : vector<1x20xf32>
    %626 = math.tanh %625 : vector<1x20xf32>
    %627 = arith.mulf %622, %626 : vector<1x20xf32>
    %628 = arith.index_cast %c26_i32 : i32 to index
    %c0_129 = arith.constant 0 : index
    %629 = vector.load %arg12[%628, %c0_129] : memref<48x20xf32, #tpu.memory_space<vmem>>, vector<1x20xf32>
    tpu.vector_store %arg12[%628, %c0_129], %627 {strides = array<i32>} : memref<48x20xf32, #tpu.memory_space<vmem>>, vector<1x20xf32>,
    %c27_i32 = arith.constant 27 : i32
    %630 = arith.index_cast %c27_i32 : i32 to index
    %c0_130 = arith.constant 0 : index
    %631 = vector.load %arg11[%630, %c0_130] : memref<48x80xf32, #tpu.memory_space<vmem>>, vector<1x80xf32>
    %632 = arith.truncf %627 : vector<1x20xf32> to vector<1x20xbf16>
    %cst_131 = arith.constant dense<0.000000e+00> : vector<1x80xf32>
    %633 = tpu.matmul %632, %33, %cst_131 {dimension_numbers = #tpu.dot_dimension_numbers<[1], [0], [0], [1], [0, 0, 1, 1], [], []>} : vector<1x20xbf16>, vector<20x80xbf16>, vector<1x80xf32> -> vector<1x80xf32>
    %634 = arith.addf %631, %633 : vector<1x80xf32>
    %635 = arith.negf %634 : vector<1x80xf32>
    %636 = math.exp %635 : vector<1x80xf32>
    %cst_132 = arith.constant 1.000000e+00 : f32
    %637 = vector.broadcast %cst_132 : f32 to vector<1x80xf32>
    %638 = arith.addf %637, %636 : vector<1x80xf32>
    %639 = arith.divf %637, %638 : vector<1x80xf32>
    %640 = vector.extract_strided_slice %634 {offsets = [0, 40], sizes = [1, 20], strides = [1, 1]} : vector<1x80xf32> to vector<1x20xf32>
    %641 = math.tanh %640 : vector<1x20xf32>
    %642 = vector.extract_strided_slice %639 {offsets = [0, 0], sizes = [1, 20], strides = [1, 1]} : vector<1x80xf32> to vector<1x20xf32>
    %643 = vector.extract_strided_slice %639 {offsets = [0, 20], sizes = [1, 20], strides = [1, 1]} : vector<1x80xf32> to vector<1x20xf32>
    %644 = vector.extract_strided_slice %639 {offsets = [0, 60], sizes = [1, 20], strides = [1, 1]} : vector<1x80xf32> to vector<1x20xf32>
    %645 = arith.mulf %643, %625 : vector<1x20xf32>
    %646 = arith.mulf %642, %641 : vector<1x20xf32>
    %647 = arith.addf %645, %646 : vector<1x20xf32>
    %648 = math.tanh %647 : vector<1x20xf32>
    %649 = arith.mulf %644, %648 : vector<1x20xf32>
    %650 = arith.index_cast %c27_i32 : i32 to index
    %c0_133 = arith.constant 0 : index
    %651 = vector.load %arg12[%650, %c0_133] : memref<48x20xf32, #tpu.memory_space<vmem>>, vector<1x20xf32>
    tpu.vector_store %arg12[%650, %c0_133], %649 {strides = array<i32>} : memref<48x20xf32, #tpu.memory_space<vmem>>, vector<1x20xf32>,
    %c28_i32 = arith.constant 28 : i32
    %652 = arith.index_cast %c28_i32 : i32 to index
    %c0_134 = arith.constant 0 : index
    %653 = vector.load %arg11[%652, %c0_134] : memref<48x80xf32, #tpu.memory_space<vmem>>, vector<1x80xf32>
    %654 = arith.truncf %649 : vector<1x20xf32> to vector<1x20xbf16>
    %cst_135 = arith.constant dense<0.000000e+00> : vector<1x80xf32>
    %655 = tpu.matmul %654, %33, %cst_135 {dimension_numbers = #tpu.dot_dimension_numbers<[1], [0], [0], [1], [0, 0, 1, 1], [], []>} : vector<1x20xbf16>, vector<20x80xbf16>, vector<1x80xf32> -> vector<1x80xf32>
    %656 = arith.addf %653, %655 : vector<1x80xf32>
    %657 = arith.negf %656 : vector<1x80xf32>
    %658 = math.exp %657 : vector<1x80xf32>
    %cst_136 = arith.constant 1.000000e+00 : f32
    %659 = vector.broadcast %cst_136 : f32 to vector<1x80xf32>
    %660 = arith.addf %659, %658 : vector<1x80xf32>
    %661 = arith.divf %659, %660 : vector<1x80xf32>
    %662 = vector.extract_strided_slice %656 {offsets = [0, 40], sizes = [1, 20], strides = [1, 1]} : vector<1x80xf32> to vector<1x20xf32>
    %663 = math.tanh %662 : vector<1x20xf32>
    %664 = vector.extract_strided_slice %661 {offsets = [0, 0], sizes = [1, 20], strides = [1, 1]} : vector<1x80xf32> to vector<1x20xf32>
    %665 = vector.extract_strided_slice %661 {offsets = [0, 20], sizes = [1, 20], strides = [1, 1]} : vector<1x80xf32> to vector<1x20xf32>
    %666 = vector.extract_strided_slice %661 {offsets = [0, 60], sizes = [1, 20], strides = [1, 1]} : vector<1x80xf32> to vector<1x20xf32>
    %667 = arith.mulf %665, %647 : vector<1x20xf32>
    %668 = arith.mulf %664, %663 : vector<1x20xf32>
    %669 = arith.addf %667, %668 : vector<1x20xf32>
    %670 = math.tanh %669 : vector<1x20xf32>
    %671 = arith.mulf %666, %670 : vector<1x20xf32>
    %672 = arith.index_cast %c28_i32 : i32 to index
    %c0_137 = arith.constant 0 : index
    %673 = vector.load %arg12[%672, %c0_137] : memref<48x20xf32, #tpu.memory_space<vmem>>, vector<1x20xf32>
    tpu.vector_store %arg12[%672, %c0_137], %671 {strides = array<i32>} : memref<48x20xf32, #tpu.memory_space<vmem>>, vector<1x20xf32>,
    %c29_i32 = arith.constant 29 : i32
    %674 = arith.index_cast %c29_i32 : i32 to index
    %c0_138 = arith.constant 0 : index
    %675 = vector.load %arg11[%674, %c0_138] : memref<48x80xf32, #tpu.memory_space<vmem>>, vector<1x80xf32>
    %676 = arith.truncf %671 : vector<1x20xf32> to vector<1x20xbf16>
    %cst_139 = arith.constant dense<0.000000e+00> : vector<1x80xf32>
    %677 = tpu.matmul %676, %33, %cst_139 {dimension_numbers = #tpu.dot_dimension_numbers<[1], [0], [0], [1], [0, 0, 1, 1], [], []>} : vector<1x20xbf16>, vector<20x80xbf16>, vector<1x80xf32> -> vector<1x80xf32>
    %678 = arith.addf %675, %677 : vector<1x80xf32>
    %679 = arith.negf %678 : vector<1x80xf32>
    %680 = math.exp %679 : vector<1x80xf32>
    %cst_140 = arith.constant 1.000000e+00 : f32
    %681 = vector.broadcast %cst_140 : f32 to vector<1x80xf32>
    %682 = arith.addf %681, %680 : vector<1x80xf32>
    %683 = arith.divf %681, %682 : vector<1x80xf32>
    %684 = vector.extract_strided_slice %678 {offsets = [0, 40], sizes = [1, 20], strides = [1, 1]} : vector<1x80xf32> to vector<1x20xf32>
    %685 = math.tanh %684 : vector<1x20xf32>
    %686 = vector.extract_strided_slice %683 {offsets = [0, 0], sizes = [1, 20], strides = [1, 1]} : vector<1x80xf32> to vector<1x20xf32>
    %687 = vector.extract_strided_slice %683 {offsets = [0, 20], sizes = [1, 20], strides = [1, 1]} : vector<1x80xf32> to vector<1x20xf32>
    %688 = vector.extract_strided_slice %683 {offsets = [0, 60], sizes = [1, 20], strides = [1, 1]} : vector<1x80xf32> to vector<1x20xf32>
    %689 = arith.mulf %687, %669 : vector<1x20xf32>
    %690 = arith.mulf %686, %685 : vector<1x20xf32>
    %691 = arith.addf %689, %690 : vector<1x20xf32>
    %692 = math.tanh %691 : vector<1x20xf32>
    %693 = arith.mulf %688, %692 : vector<1x20xf32>
    %694 = arith.index_cast %c29_i32 : i32 to index
    %c0_141 = arith.constant 0 : index
    %695 = vector.load %arg12[%694, %c0_141] : memref<48x20xf32, #tpu.memory_space<vmem>>, vector<1x20xf32>
    tpu.vector_store %arg12[%694, %c0_141], %693 {strides = array<i32>} : memref<48x20xf32, #tpu.memory_space<vmem>>, vector<1x20xf32>,
    %c30_i32 = arith.constant 30 : i32
    %696 = arith.index_cast %c30_i32 : i32 to index
    %c0_142 = arith.constant 0 : index
    %697 = vector.load %arg11[%696, %c0_142] : memref<48x80xf32, #tpu.memory_space<vmem>>, vector<1x80xf32>
    %698 = arith.truncf %693 : vector<1x20xf32> to vector<1x20xbf16>
    %cst_143 = arith.constant dense<0.000000e+00> : vector<1x80xf32>
    %699 = tpu.matmul %698, %33, %cst_143 {dimension_numbers = #tpu.dot_dimension_numbers<[1], [0], [0], [1], [0, 0, 1, 1], [], []>} : vector<1x20xbf16>, vector<20x80xbf16>, vector<1x80xf32> -> vector<1x80xf32>
    %700 = arith.addf %697, %699 : vector<1x80xf32>
    %701 = arith.negf %700 : vector<1x80xf32>
    %702 = math.exp %701 : vector<1x80xf32>
    %cst_144 = arith.constant 1.000000e+00 : f32
    %703 = vector.broadcast %cst_144 : f32 to vector<1x80xf32>
    %704 = arith.addf %703, %702 : vector<1x80xf32>
    %705 = arith.divf %703, %704 : vector<1x80xf32>
    %706 = vector.extract_strided_slice %700 {offsets = [0, 40], sizes = [1, 20], strides = [1, 1]} : vector<1x80xf32> to vector<1x20xf32>
    %707 = math.tanh %706 : vector<1x20xf32>
    %708 = vector.extract_strided_slice %705 {offsets = [0, 0], sizes = [1, 20], strides = [1, 1]} : vector<1x80xf32> to vector<1x20xf32>
    %709 = vector.extract_strided_slice %705 {offsets = [0, 20], sizes = [1, 20], strides = [1, 1]} : vector<1x80xf32> to vector<1x20xf32>
    %710 = vector.extract_strided_slice %705 {offsets = [0, 60], sizes = [1, 20], strides = [1, 1]} : vector<1x80xf32> to vector<1x20xf32>
    %711 = arith.mulf %709, %691 : vector<1x20xf32>
    %712 = arith.mulf %708, %707 : vector<1x20xf32>
    %713 = arith.addf %711, %712 : vector<1x20xf32>
    %714 = math.tanh %713 : vector<1x20xf32>
    %715 = arith.mulf %710, %714 : vector<1x20xf32>
    %716 = arith.index_cast %c30_i32 : i32 to index
    %c0_145 = arith.constant 0 : index
    %717 = vector.load %arg12[%716, %c0_145] : memref<48x20xf32, #tpu.memory_space<vmem>>, vector<1x20xf32>
    tpu.vector_store %arg12[%716, %c0_145], %715 {strides = array<i32>} : memref<48x20xf32, #tpu.memory_space<vmem>>, vector<1x20xf32>,
    %c31_i32 = arith.constant 31 : i32
    %718 = arith.index_cast %c31_i32 : i32 to index
    %c0_146 = arith.constant 0 : index
    %719 = vector.load %arg11[%718, %c0_146] : memref<48x80xf32, #tpu.memory_space<vmem>>, vector<1x80xf32>
    %720 = arith.truncf %715 : vector<1x20xf32> to vector<1x20xbf16>
    %cst_147 = arith.constant dense<0.000000e+00> : vector<1x80xf32>
    %721 = tpu.matmul %720, %33, %cst_147 {dimension_numbers = #tpu.dot_dimension_numbers<[1], [0], [0], [1], [0, 0, 1, 1], [], []>} : vector<1x20xbf16>, vector<20x80xbf16>, vector<1x80xf32> -> vector<1x80xf32>
    %722 = arith.addf %719, %721 : vector<1x80xf32>
    %723 = arith.negf %722 : vector<1x80xf32>
    %724 = math.exp %723 : vector<1x80xf32>
    %cst_148 = arith.constant 1.000000e+00 : f32
    %725 = vector.broadcast %cst_148 : f32 to vector<1x80xf32>
    %726 = arith.addf %725, %724 : vector<1x80xf32>
    %727 = arith.divf %725, %726 : vector<1x80xf32>
    %728 = vector.extract_strided_slice %722 {offsets = [0, 40], sizes = [1, 20], strides = [1, 1]} : vector<1x80xf32> to vector<1x20xf32>
    %729 = math.tanh %728 : vector<1x20xf32>
    %730 = vector.extract_strided_slice %727 {offsets = [0, 0], sizes = [1, 20], strides = [1, 1]} : vector<1x80xf32> to vector<1x20xf32>
    %731 = vector.extract_strided_slice %727 {offsets = [0, 20], sizes = [1, 20], strides = [1, 1]} : vector<1x80xf32> to vector<1x20xf32>
    %732 = vector.extract_strided_slice %727 {offsets = [0, 60], sizes = [1, 20], strides = [1, 1]} : vector<1x80xf32> to vector<1x20xf32>
    %733 = arith.mulf %731, %713 : vector<1x20xf32>
    %734 = arith.mulf %730, %729 : vector<1x20xf32>
    %735 = arith.addf %733, %734 : vector<1x20xf32>
    %736 = math.tanh %735 : vector<1x20xf32>
    %737 = arith.mulf %732, %736 : vector<1x20xf32>
    %738 = arith.index_cast %c31_i32 : i32 to index
    %c0_149 = arith.constant 0 : index
    %739 = vector.load %arg12[%738, %c0_149] : memref<48x20xf32, #tpu.memory_space<vmem>>, vector<1x20xf32>
    tpu.vector_store %arg12[%738, %c0_149], %737 {strides = array<i32>} : memref<48x20xf32, #tpu.memory_space<vmem>>, vector<1x20xf32>,
    %c32_i32 = arith.constant 32 : i32
    %740 = arith.index_cast %c32_i32 : i32 to index
    %c0_150 = arith.constant 0 : index
    %741 = vector.load %arg11[%740, %c0_150] : memref<48x80xf32, #tpu.memory_space<vmem>>, vector<1x80xf32>
    %742 = arith.truncf %737 : vector<1x20xf32> to vector<1x20xbf16>
    %cst_151 = arith.constant dense<0.000000e+00> : vector<1x80xf32>
    %743 = tpu.matmul %742, %33, %cst_151 {dimension_numbers = #tpu.dot_dimension_numbers<[1], [0], [0], [1], [0, 0, 1, 1], [], []>} : vector<1x20xbf16>, vector<20x80xbf16>, vector<1x80xf32> -> vector<1x80xf32>
    %744 = arith.addf %741, %743 : vector<1x80xf32>
    %745 = arith.negf %744 : vector<1x80xf32>
    %746 = math.exp %745 : vector<1x80xf32>
    %cst_152 = arith.constant 1.000000e+00 : f32
    %747 = vector.broadcast %cst_152 : f32 to vector<1x80xf32>
    %748 = arith.addf %747, %746 : vector<1x80xf32>
    %749 = arith.divf %747, %748 : vector<1x80xf32>
    %750 = vector.extract_strided_slice %744 {offsets = [0, 40], sizes = [1, 20], strides = [1, 1]} : vector<1x80xf32> to vector<1x20xf32>
    %751 = math.tanh %750 : vector<1x20xf32>
    %752 = vector.extract_strided_slice %749 {offsets = [0, 0], sizes = [1, 20], strides = [1, 1]} : vector<1x80xf32> to vector<1x20xf32>
    %753 = vector.extract_strided_slice %749 {offsets = [0, 20], sizes = [1, 20], strides = [1, 1]} : vector<1x80xf32> to vector<1x20xf32>
    %754 = vector.extract_strided_slice %749 {offsets = [0, 60], sizes = [1, 20], strides = [1, 1]} : vector<1x80xf32> to vector<1x20xf32>
    %755 = arith.mulf %753, %735 : vector<1x20xf32>
    %756 = arith.mulf %752, %751 : vector<1x20xf32>
    %757 = arith.addf %755, %756 : vector<1x20xf32>
    %758 = math.tanh %757 : vector<1x20xf32>
    %759 = arith.mulf %754, %758 : vector<1x20xf32>
    %760 = arith.index_cast %c32_i32 : i32 to index
    %c0_153 = arith.constant 0 : index
    %761 = vector.load %arg12[%760, %c0_153] : memref<48x20xf32, #tpu.memory_space<vmem>>, vector<1x20xf32>
    tpu.vector_store %arg12[%760, %c0_153], %759 {strides = array<i32>} : memref<48x20xf32, #tpu.memory_space<vmem>>, vector<1x20xf32>,
    %c33_i32 = arith.constant 33 : i32
    %762 = arith.index_cast %c33_i32 : i32 to index
    %c0_154 = arith.constant 0 : index
    %763 = vector.load %arg11[%762, %c0_154] : memref<48x80xf32, #tpu.memory_space<vmem>>, vector<1x80xf32>
    %764 = arith.truncf %759 : vector<1x20xf32> to vector<1x20xbf16>
    %cst_155 = arith.constant dense<0.000000e+00> : vector<1x80xf32>
    %765 = tpu.matmul %764, %33, %cst_155 {dimension_numbers = #tpu.dot_dimension_numbers<[1], [0], [0], [1], [0, 0, 1, 1], [], []>} : vector<1x20xbf16>, vector<20x80xbf16>, vector<1x80xf32> -> vector<1x80xf32>
    %766 = arith.addf %763, %765 : vector<1x80xf32>
    %767 = arith.negf %766 : vector<1x80xf32>
    %768 = math.exp %767 : vector<1x80xf32>
    %cst_156 = arith.constant 1.000000e+00 : f32
    %769 = vector.broadcast %cst_156 : f32 to vector<1x80xf32>
    %770 = arith.addf %769, %768 : vector<1x80xf32>
    %771 = arith.divf %769, %770 : vector<1x80xf32>
    %772 = vector.extract_strided_slice %766 {offsets = [0, 40], sizes = [1, 20], strides = [1, 1]} : vector<1x80xf32> to vector<1x20xf32>
    %773 = math.tanh %772 : vector<1x20xf32>
    %774 = vector.extract_strided_slice %771 {offsets = [0, 0], sizes = [1, 20], strides = [1, 1]} : vector<1x80xf32> to vector<1x20xf32>
    %775 = vector.extract_strided_slice %771 {offsets = [0, 20], sizes = [1, 20], strides = [1, 1]} : vector<1x80xf32> to vector<1x20xf32>
    %776 = vector.extract_strided_slice %771 {offsets = [0, 60], sizes = [1, 20], strides = [1, 1]} : vector<1x80xf32> to vector<1x20xf32>
    %777 = arith.mulf %775, %757 : vector<1x20xf32>
    %778 = arith.mulf %774, %773 : vector<1x20xf32>
    %779 = arith.addf %777, %778 : vector<1x20xf32>
    %780 = math.tanh %779 : vector<1x20xf32>
    %781 = arith.mulf %776, %780 : vector<1x20xf32>
    %782 = arith.index_cast %c33_i32 : i32 to index
    %c0_157 = arith.constant 0 : index
    %783 = vector.load %arg12[%782, %c0_157] : memref<48x20xf32, #tpu.memory_space<vmem>>, vector<1x20xf32>
    tpu.vector_store %arg12[%782, %c0_157], %781 {strides = array<i32>} : memref<48x20xf32, #tpu.memory_space<vmem>>, vector<1x20xf32>,
    %c34_i32 = arith.constant 34 : i32
    %784 = arith.index_cast %c34_i32 : i32 to index
    %c0_158 = arith.constant 0 : index
    %785 = vector.load %arg11[%784, %c0_158] : memref<48x80xf32, #tpu.memory_space<vmem>>, vector<1x80xf32>
    %786 = arith.truncf %781 : vector<1x20xf32> to vector<1x20xbf16>
    %cst_159 = arith.constant dense<0.000000e+00> : vector<1x80xf32>
    %787 = tpu.matmul %786, %33, %cst_159 {dimension_numbers = #tpu.dot_dimension_numbers<[1], [0], [0], [1], [0, 0, 1, 1], [], []>} : vector<1x20xbf16>, vector<20x80xbf16>, vector<1x80xf32> -> vector<1x80xf32>
    %788 = arith.addf %785, %787 : vector<1x80xf32>
    %789 = arith.negf %788 : vector<1x80xf32>
    %790 = math.exp %789 : vector<1x80xf32>
    %cst_160 = arith.constant 1.000000e+00 : f32
    %791 = vector.broadcast %cst_160 : f32 to vector<1x80xf32>
    %792 = arith.addf %791, %790 : vector<1x80xf32>
    %793 = arith.divf %791, %792 : vector<1x80xf32>
    %794 = vector.extract_strided_slice %788 {offsets = [0, 40], sizes = [1, 20], strides = [1, 1]} : vector<1x80xf32> to vector<1x20xf32>
    %795 = math.tanh %794 : vector<1x20xf32>
    %796 = vector.extract_strided_slice %793 {offsets = [0, 0], sizes = [1, 20], strides = [1, 1]} : vector<1x80xf32> to vector<1x20xf32>
    %797 = vector.extract_strided_slice %793 {offsets = [0, 20], sizes = [1, 20], strides = [1, 1]} : vector<1x80xf32> to vector<1x20xf32>
    %798 = vector.extract_strided_slice %793 {offsets = [0, 60], sizes = [1, 20], strides = [1, 1]} : vector<1x80xf32> to vector<1x20xf32>
    %799 = arith.mulf %797, %779 : vector<1x20xf32>
    %800 = arith.mulf %796, %795 : vector<1x20xf32>
    %801 = arith.addf %799, %800 : vector<1x20xf32>
    %802 = math.tanh %801 : vector<1x20xf32>
    %803 = arith.mulf %798, %802 : vector<1x20xf32>
    %804 = arith.index_cast %c34_i32 : i32 to index
    %c0_161 = arith.constant 0 : index
    %805 = vector.load %arg12[%804, %c0_161] : memref<48x20xf32, #tpu.memory_space<vmem>>, vector<1x20xf32>
    tpu.vector_store %arg12[%804, %c0_161], %803 {strides = array<i32>} : memref<48x20xf32, #tpu.memory_space<vmem>>, vector<1x20xf32>,
    %c35_i32 = arith.constant 35 : i32
    %806 = arith.index_cast %c35_i32 : i32 to index
    %c0_162 = arith.constant 0 : index
    %807 = vector.load %arg11[%806, %c0_162] : memref<48x80xf32, #tpu.memory_space<vmem>>, vector<1x80xf32>
    %808 = arith.truncf %803 : vector<1x20xf32> to vector<1x20xbf16>
    %cst_163 = arith.constant dense<0.000000e+00> : vector<1x80xf32>
    %809 = tpu.matmul %808, %33, %cst_163 {dimension_numbers = #tpu.dot_dimension_numbers<[1], [0], [0], [1], [0, 0, 1, 1], [], []>} : vector<1x20xbf16>, vector<20x80xbf16>, vector<1x80xf32> -> vector<1x80xf32>
    %810 = arith.addf %807, %809 : vector<1x80xf32>
    %811 = arith.negf %810 : vector<1x80xf32>
    %812 = math.exp %811 : vector<1x80xf32>
    %cst_164 = arith.constant 1.000000e+00 : f32
    %813 = vector.broadcast %cst_164 : f32 to vector<1x80xf32>
    %814 = arith.addf %813, %812 : vector<1x80xf32>
    %815 = arith.divf %813, %814 : vector<1x80xf32>
    %816 = vector.extract_strided_slice %810 {offsets = [0, 40], sizes = [1, 20], strides = [1, 1]} : vector<1x80xf32> to vector<1x20xf32>
    %817 = math.tanh %816 : vector<1x20xf32>
    %818 = vector.extract_strided_slice %815 {offsets = [0, 0], sizes = [1, 20], strides = [1, 1]} : vector<1x80xf32> to vector<1x20xf32>
    %819 = vector.extract_strided_slice %815 {offsets = [0, 20], sizes = [1, 20], strides = [1, 1]} : vector<1x80xf32> to vector<1x20xf32>
    %820 = vector.extract_strided_slice %815 {offsets = [0, 60], sizes = [1, 20], strides = [1, 1]} : vector<1x80xf32> to vector<1x20xf32>
    %821 = arith.mulf %819, %801 : vector<1x20xf32>
    %822 = arith.mulf %818, %817 : vector<1x20xf32>
    %823 = arith.addf %821, %822 : vector<1x20xf32>
    %824 = math.tanh %823 : vector<1x20xf32>
    %825 = arith.mulf %820, %824 : vector<1x20xf32>
    %826 = arith.index_cast %c35_i32 : i32 to index
    %c0_165 = arith.constant 0 : index
    %827 = vector.load %arg12[%826, %c0_165] : memref<48x20xf32, #tpu.memory_space<vmem>>, vector<1x20xf32>
    tpu.vector_store %arg12[%826, %c0_165], %825 {strides = array<i32>} : memref<48x20xf32, #tpu.memory_space<vmem>>, vector<1x20xf32>,
    %c36_i32 = arith.constant 36 : i32
    %828 = arith.index_cast %c36_i32 : i32 to index
    %c0_166 = arith.constant 0 : index
    %829 = vector.load %arg11[%828, %c0_166] : memref<48x80xf32, #tpu.memory_space<vmem>>, vector<1x80xf32>
    %830 = arith.truncf %825 : vector<1x20xf32> to vector<1x20xbf16>
    %cst_167 = arith.constant dense<0.000000e+00> : vector<1x80xf32>
    %831 = tpu.matmul %830, %33, %cst_167 {dimension_numbers = #tpu.dot_dimension_numbers<[1], [0], [0], [1], [0, 0, 1, 1], [], []>} : vector<1x20xbf16>, vector<20x80xbf16>, vector<1x80xf32> -> vector<1x80xf32>
    %832 = arith.addf %829, %831 : vector<1x80xf32>
    %833 = arith.negf %832 : vector<1x80xf32>
    %834 = math.exp %833 : vector<1x80xf32>
    %cst_168 = arith.constant 1.000000e+00 : f32
    %835 = vector.broadcast %cst_168 : f32 to vector<1x80xf32>
    %836 = arith.addf %835, %834 : vector<1x80xf32>
    %837 = arith.divf %835, %836 : vector<1x80xf32>
    %838 = vector.extract_strided_slice %832 {offsets = [0, 40], sizes = [1, 20], strides = [1, 1]} : vector<1x80xf32> to vector<1x20xf32>
    %839 = math.tanh %838 : vector<1x20xf32>
    %840 = vector.extract_strided_slice %837 {offsets = [0, 0], sizes = [1, 20], strides = [1, 1]} : vector<1x80xf32> to vector<1x20xf32>
    %841 = vector.extract_strided_slice %837 {offsets = [0, 20], sizes = [1, 20], strides = [1, 1]} : vector<1x80xf32> to vector<1x20xf32>
    %842 = vector.extract_strided_slice %837 {offsets = [0, 60], sizes = [1, 20], strides = [1, 1]} : vector<1x80xf32> to vector<1x20xf32>
    %843 = arith.mulf %841, %823 : vector<1x20xf32>
    %844 = arith.mulf %840, %839 : vector<1x20xf32>
    %845 = arith.addf %843, %844 : vector<1x20xf32>
    %846 = math.tanh %845 : vector<1x20xf32>
    %847 = arith.mulf %842, %846 : vector<1x20xf32>
    %848 = arith.index_cast %c36_i32 : i32 to index
    %c0_169 = arith.constant 0 : index
    %849 = vector.load %arg12[%848, %c0_169] : memref<48x20xf32, #tpu.memory_space<vmem>>, vector<1x20xf32>
    tpu.vector_store %arg12[%848, %c0_169], %847 {strides = array<i32>} : memref<48x20xf32, #tpu.memory_space<vmem>>, vector<1x20xf32>,
    %c37_i32 = arith.constant 37 : i32
    %850 = arith.index_cast %c37_i32 : i32 to index
    %c0_170 = arith.constant 0 : index
    %851 = vector.load %arg11[%850, %c0_170] : memref<48x80xf32, #tpu.memory_space<vmem>>, vector<1x80xf32>
    %852 = arith.truncf %847 : vector<1x20xf32> to vector<1x20xbf16>
    %cst_171 = arith.constant dense<0.000000e+00> : vector<1x80xf32>
    %853 = tpu.matmul %852, %33, %cst_171 {dimension_numbers = #tpu.dot_dimension_numbers<[1], [0], [0], [1], [0, 0, 1, 1], [], []>} : vector<1x20xbf16>, vector<20x80xbf16>, vector<1x80xf32> -> vector<1x80xf32>
    %854 = arith.addf %851, %853 : vector<1x80xf32>
    %855 = arith.negf %854 : vector<1x80xf32>
    %856 = math.exp %855 : vector<1x80xf32>
    %cst_172 = arith.constant 1.000000e+00 : f32
    %857 = vector.broadcast %cst_172 : f32 to vector<1x80xf32>
    %858 = arith.addf %857, %856 : vector<1x80xf32>
    %859 = arith.divf %857, %858 : vector<1x80xf32>
    %860 = vector.extract_strided_slice %854 {offsets = [0, 40], sizes = [1, 20], strides = [1, 1]} : vector<1x80xf32> to vector<1x20xf32>
    %861 = math.tanh %860 : vector<1x20xf32>
    %862 = vector.extract_strided_slice %859 {offsets = [0, 0], sizes = [1, 20], strides = [1, 1]} : vector<1x80xf32> to vector<1x20xf32>
    %863 = vector.extract_strided_slice %859 {offsets = [0, 20], sizes = [1, 20], strides = [1, 1]} : vector<1x80xf32> to vector<1x20xf32>
    %864 = vector.extract_strided_slice %859 {offsets = [0, 60], sizes = [1, 20], strides = [1, 1]} : vector<1x80xf32> to vector<1x20xf32>
    %865 = arith.mulf %863, %845 : vector<1x20xf32>
    %866 = arith.mulf %862, %861 : vector<1x20xf32>
    %867 = arith.addf %865, %866 : vector<1x20xf32>
    %868 = math.tanh %867 : vector<1x20xf32>
    %869 = arith.mulf %864, %868 : vector<1x20xf32>
    %870 = arith.index_cast %c37_i32 : i32 to index
    %c0_173 = arith.constant 0 : index
    %871 = vector.load %arg12[%870, %c0_173] : memref<48x20xf32, #tpu.memory_space<vmem>>, vector<1x20xf32>
    tpu.vector_store %arg12[%870, %c0_173], %869 {strides = array<i32>} : memref<48x20xf32, #tpu.memory_space<vmem>>, vector<1x20xf32>,
    %c38_i32 = arith.constant 38 : i32
    %872 = arith.index_cast %c38_i32 : i32 to index
    %c0_174 = arith.constant 0 : index
    %873 = vector.load %arg11[%872, %c0_174] : memref<48x80xf32, #tpu.memory_space<vmem>>, vector<1x80xf32>
    %874 = arith.truncf %869 : vector<1x20xf32> to vector<1x20xbf16>
    %cst_175 = arith.constant dense<0.000000e+00> : vector<1x80xf32>
    %875 = tpu.matmul %874, %33, %cst_175 {dimension_numbers = #tpu.dot_dimension_numbers<[1], [0], [0], [1], [0, 0, 1, 1], [], []>} : vector<1x20xbf16>, vector<20x80xbf16>, vector<1x80xf32> -> vector<1x80xf32>
    %876 = arith.addf %873, %875 : vector<1x80xf32>
    %877 = arith.negf %876 : vector<1x80xf32>
    %878 = math.exp %877 : vector<1x80xf32>
    %cst_176 = arith.constant 1.000000e+00 : f32
    %879 = vector.broadcast %cst_176 : f32 to vector<1x80xf32>
    %880 = arith.addf %879, %878 : vector<1x80xf32>
    %881 = arith.divf %879, %880 : vector<1x80xf32>
    %882 = vector.extract_strided_slice %876 {offsets = [0, 40], sizes = [1, 20], strides = [1, 1]} : vector<1x80xf32> to vector<1x20xf32>
    %883 = math.tanh %882 : vector<1x20xf32>
    %884 = vector.extract_strided_slice %881 {offsets = [0, 0], sizes = [1, 20], strides = [1, 1]} : vector<1x80xf32> to vector<1x20xf32>
    %885 = vector.extract_strided_slice %881 {offsets = [0, 20], sizes = [1, 20], strides = [1, 1]} : vector<1x80xf32> to vector<1x20xf32>
    %886 = vector.extract_strided_slice %881 {offsets = [0, 60], sizes = [1, 20], strides = [1, 1]} : vector<1x80xf32> to vector<1x20xf32>
    %887 = arith.mulf %885, %867 : vector<1x20xf32>
    %888 = arith.mulf %884, %883 : vector<1x20xf32>
    %889 = arith.addf %887, %888 : vector<1x20xf32>
    %890 = math.tanh %889 : vector<1x20xf32>
    %891 = arith.mulf %886, %890 : vector<1x20xf32>
    %892 = arith.index_cast %c38_i32 : i32 to index
    %c0_177 = arith.constant 0 : index
    %893 = vector.load %arg12[%892, %c0_177] : memref<48x20xf32, #tpu.memory_space<vmem>>, vector<1x20xf32>
    tpu.vector_store %arg12[%892, %c0_177], %891 {strides = array<i32>} : memref<48x20xf32, #tpu.memory_space<vmem>>, vector<1x20xf32>,
    %c39_i32 = arith.constant 39 : i32
    %894 = arith.index_cast %c39_i32 : i32 to index
    %c0_178 = arith.constant 0 : index
    %895 = vector.load %arg11[%894, %c0_178] : memref<48x80xf32, #tpu.memory_space<vmem>>, vector<1x80xf32>
    %896 = arith.truncf %891 : vector<1x20xf32> to vector<1x20xbf16>
    %cst_179 = arith.constant dense<0.000000e+00> : vector<1x80xf32>
    %897 = tpu.matmul %896, %33, %cst_179 {dimension_numbers = #tpu.dot_dimension_numbers<[1], [0], [0], [1], [0, 0, 1, 1], [], []>} : vector<1x20xbf16>, vector<20x80xbf16>, vector<1x80xf32> -> vector<1x80xf32>
    %898 = arith.addf %895, %897 : vector<1x80xf32>
    %899 = arith.negf %898 : vector<1x80xf32>
    %900 = math.exp %899 : vector<1x80xf32>
    %cst_180 = arith.constant 1.000000e+00 : f32
    %901 = vector.broadcast %cst_180 : f32 to vector<1x80xf32>
    %902 = arith.addf %901, %900 : vector<1x80xf32>
    %903 = arith.divf %901, %902 : vector<1x80xf32>
    %904 = vector.extract_strided_slice %898 {offsets = [0, 40], sizes = [1, 20], strides = [1, 1]} : vector<1x80xf32> to vector<1x20xf32>
    %905 = math.tanh %904 : vector<1x20xf32>
    %906 = vector.extract_strided_slice %903 {offsets = [0, 0], sizes = [1, 20], strides = [1, 1]} : vector<1x80xf32> to vector<1x20xf32>
    %907 = vector.extract_strided_slice %903 {offsets = [0, 20], sizes = [1, 20], strides = [1, 1]} : vector<1x80xf32> to vector<1x20xf32>
    %908 = vector.extract_strided_slice %903 {offsets = [0, 60], sizes = [1, 20], strides = [1, 1]} : vector<1x80xf32> to vector<1x20xf32>
    %909 = arith.mulf %907, %889 : vector<1x20xf32>
    %910 = arith.mulf %906, %905 : vector<1x20xf32>
    %911 = arith.addf %909, %910 : vector<1x20xf32>
    %912 = math.tanh %911 : vector<1x20xf32>
    %913 = arith.mulf %908, %912 : vector<1x20xf32>
    %914 = arith.index_cast %c39_i32 : i32 to index
    %c0_181 = arith.constant 0 : index
    %915 = vector.load %arg12[%914, %c0_181] : memref<48x20xf32, #tpu.memory_space<vmem>>, vector<1x20xf32>
    tpu.vector_store %arg12[%914, %c0_181], %913 {strides = array<i32>} : memref<48x20xf32, #tpu.memory_space<vmem>>, vector<1x20xf32>,
    %c40_i32 = arith.constant 40 : i32
    %916 = arith.index_cast %c40_i32 : i32 to index
    %c0_182 = arith.constant 0 : index
    %917 = vector.load %arg11[%916, %c0_182] : memref<48x80xf32, #tpu.memory_space<vmem>>, vector<1x80xf32>
    %918 = arith.truncf %913 : vector<1x20xf32> to vector<1x20xbf16>
    %cst_183 = arith.constant dense<0.000000e+00> : vector<1x80xf32>
    %919 = tpu.matmul %918, %33, %cst_183 {dimension_numbers = #tpu.dot_dimension_numbers<[1], [0], [0], [1], [0, 0, 1, 1], [], []>} : vector<1x20xbf16>, vector<20x80xbf16>, vector<1x80xf32> -> vector<1x80xf32>
    %920 = arith.addf %917, %919 : vector<1x80xf32>
    %921 = arith.negf %920 : vector<1x80xf32>
    %922 = math.exp %921 : vector<1x80xf32>
    %cst_184 = arith.constant 1.000000e+00 : f32
    %923 = vector.broadcast %cst_184 : f32 to vector<1x80xf32>
    %924 = arith.addf %923, %922 : vector<1x80xf32>
    %925 = arith.divf %923, %924 : vector<1x80xf32>
    %926 = vector.extract_strided_slice %920 {offsets = [0, 40], sizes = [1, 20], strides = [1, 1]} : vector<1x80xf32> to vector<1x20xf32>
    %927 = math.tanh %926 : vector<1x20xf32>
    %928 = vector.extract_strided_slice %925 {offsets = [0, 0], sizes = [1, 20], strides = [1, 1]} : vector<1x80xf32> to vector<1x20xf32>
    %929 = vector.extract_strided_slice %925 {offsets = [0, 20], sizes = [1, 20], strides = [1, 1]} : vector<1x80xf32> to vector<1x20xf32>
    %930 = vector.extract_strided_slice %925 {offsets = [0, 60], sizes = [1, 20], strides = [1, 1]} : vector<1x80xf32> to vector<1x20xf32>
    %931 = arith.mulf %929, %911 : vector<1x20xf32>
    %932 = arith.mulf %928, %927 : vector<1x20xf32>
    %933 = arith.addf %931, %932 : vector<1x20xf32>
    %934 = math.tanh %933 : vector<1x20xf32>
    %935 = arith.mulf %930, %934 : vector<1x20xf32>
    %936 = arith.index_cast %c40_i32 : i32 to index
    %c0_185 = arith.constant 0 : index
    %937 = vector.load %arg12[%936, %c0_185] : memref<48x20xf32, #tpu.memory_space<vmem>>, vector<1x20xf32>
    tpu.vector_store %arg12[%936, %c0_185], %935 {strides = array<i32>} : memref<48x20xf32, #tpu.memory_space<vmem>>, vector<1x20xf32>,
    %c41_i32 = arith.constant 41 : i32
    %938 = arith.index_cast %c41_i32 : i32 to index
    %c0_186 = arith.constant 0 : index
    %939 = vector.load %arg11[%938, %c0_186] : memref<48x80xf32, #tpu.memory_space<vmem>>, vector<1x80xf32>
    %940 = arith.truncf %935 : vector<1x20xf32> to vector<1x20xbf16>
    %cst_187 = arith.constant dense<0.000000e+00> : vector<1x80xf32>
    %941 = tpu.matmul %940, %33, %cst_187 {dimension_numbers = #tpu.dot_dimension_numbers<[1], [0], [0], [1], [0, 0, 1, 1], [], []>} : vector<1x20xbf16>, vector<20x80xbf16>, vector<1x80xf32> -> vector<1x80xf32>
    %942 = arith.addf %939, %941 : vector<1x80xf32>
    %943 = arith.negf %942 : vector<1x80xf32>
    %944 = math.exp %943 : vector<1x80xf32>
    %cst_188 = arith.constant 1.000000e+00 : f32
    %945 = vector.broadcast %cst_188 : f32 to vector<1x80xf32>
    %946 = arith.addf %945, %944 : vector<1x80xf32>
    %947 = arith.divf %945, %946 : vector<1x80xf32>
    %948 = vector.extract_strided_slice %942 {offsets = [0, 40], sizes = [1, 20], strides = [1, 1]} : vector<1x80xf32> to vector<1x20xf32>
    %949 = math.tanh %948 : vector<1x20xf32>
    %950 = vector.extract_strided_slice %947 {offsets = [0, 0], sizes = [1, 20], strides = [1, 1]} : vector<1x80xf32> to vector<1x20xf32>
    %951 = vector.extract_strided_slice %947 {offsets = [0, 20], sizes = [1, 20], strides = [1, 1]} : vector<1x80xf32> to vector<1x20xf32>
    %952 = vector.extract_strided_slice %947 {offsets = [0, 60], sizes = [1, 20], strides = [1, 1]} : vector<1x80xf32> to vector<1x20xf32>
    %953 = arith.mulf %951, %933 : vector<1x20xf32>
    %954 = arith.mulf %950, %949 : vector<1x20xf32>
    %955 = arith.addf %953, %954 : vector<1x20xf32>
    %956 = math.tanh %955 : vector<1x20xf32>
    %957 = arith.mulf %952, %956 : vector<1x20xf32>
    %958 = arith.index_cast %c41_i32 : i32 to index
    %c0_189 = arith.constant 0 : index
    %959 = vector.load %arg12[%958, %c0_189] : memref<48x20xf32, #tpu.memory_space<vmem>>, vector<1x20xf32>
    tpu.vector_store %arg12[%958, %c0_189], %957 {strides = array<i32>} : memref<48x20xf32, #tpu.memory_space<vmem>>, vector<1x20xf32>,
    %c42_i32 = arith.constant 42 : i32
    %960 = arith.index_cast %c42_i32 : i32 to index
    %c0_190 = arith.constant 0 : index
    %961 = vector.load %arg11[%960, %c0_190] : memref<48x80xf32, #tpu.memory_space<vmem>>, vector<1x80xf32>
    %962 = arith.truncf %957 : vector<1x20xf32> to vector<1x20xbf16>
    %cst_191 = arith.constant dense<0.000000e+00> : vector<1x80xf32>
    %963 = tpu.matmul %962, %33, %cst_191 {dimension_numbers = #tpu.dot_dimension_numbers<[1], [0], [0], [1], [0, 0, 1, 1], [], []>} : vector<1x20xbf16>, vector<20x80xbf16>, vector<1x80xf32> -> vector<1x80xf32>
    %964 = arith.addf %961, %963 : vector<1x80xf32>
    %965 = arith.negf %964 : vector<1x80xf32>
    %966 = math.exp %965 : vector<1x80xf32>
    %cst_192 = arith.constant 1.000000e+00 : f32
    %967 = vector.broadcast %cst_192 : f32 to vector<1x80xf32>
    %968 = arith.addf %967, %966 : vector<1x80xf32>
    %969 = arith.divf %967, %968 : vector<1x80xf32>
    %970 = vector.extract_strided_slice %964 {offsets = [0, 40], sizes = [1, 20], strides = [1, 1]} : vector<1x80xf32> to vector<1x20xf32>
    %971 = math.tanh %970 : vector<1x20xf32>
    %972 = vector.extract_strided_slice %969 {offsets = [0, 0], sizes = [1, 20], strides = [1, 1]} : vector<1x80xf32> to vector<1x20xf32>
    %973 = vector.extract_strided_slice %969 {offsets = [0, 20], sizes = [1, 20], strides = [1, 1]} : vector<1x80xf32> to vector<1x20xf32>
    %974 = vector.extract_strided_slice %969 {offsets = [0, 60], sizes = [1, 20], strides = [1, 1]} : vector<1x80xf32> to vector<1x20xf32>
    %975 = arith.mulf %973, %955 : vector<1x20xf32>
    %976 = arith.mulf %972, %971 : vector<1x20xf32>
    %977 = arith.addf %975, %976 : vector<1x20xf32>
    %978 = math.tanh %977 : vector<1x20xf32>
    %979 = arith.mulf %974, %978 : vector<1x20xf32>
    %980 = arith.index_cast %c42_i32 : i32 to index
    %c0_193 = arith.constant 0 : index
    %981 = vector.load %arg12[%980, %c0_193] : memref<48x20xf32, #tpu.memory_space<vmem>>, vector<1x20xf32>
    tpu.vector_store %arg12[%980, %c0_193], %979 {strides = array<i32>} : memref<48x20xf32, #tpu.memory_space<vmem>>, vector<1x20xf32>,
    %c43_i32 = arith.constant 43 : i32
    %982 = arith.index_cast %c43_i32 : i32 to index
    %c0_194 = arith.constant 0 : index
    %983 = vector.load %arg11[%982, %c0_194] : memref<48x80xf32, #tpu.memory_space<vmem>>, vector<1x80xf32>
    %984 = arith.truncf %979 : vector<1x20xf32> to vector<1x20xbf16>
    %cst_195 = arith.constant dense<0.000000e+00> : vector<1x80xf32>
    %985 = tpu.matmul %984, %33, %cst_195 {dimension_numbers = #tpu.dot_dimension_numbers<[1], [0], [0], [1], [0, 0, 1, 1], [], []>} : vector<1x20xbf16>, vector<20x80xbf16>, vector<1x80xf32> -> vector<1x80xf32>
    %986 = arith.addf %983, %985 : vector<1x80xf32>
    %987 = arith.negf %986 : vector<1x80xf32>
    %988 = math.exp %987 : vector<1x80xf32>
    %cst_196 = arith.constant 1.000000e+00 : f32
    %989 = vector.broadcast %cst_196 : f32 to vector<1x80xf32>
    %990 = arith.addf %989, %988 : vector<1x80xf32>
    %991 = arith.divf %989, %990 : vector<1x80xf32>
    %992 = vector.extract_strided_slice %986 {offsets = [0, 40], sizes = [1, 20], strides = [1, 1]} : vector<1x80xf32> to vector<1x20xf32>
    %993 = math.tanh %992 : vector<1x20xf32>
    %994 = vector.extract_strided_slice %991 {offsets = [0, 0], sizes = [1, 20], strides = [1, 1]} : vector<1x80xf32> to vector<1x20xf32>
    %995 = vector.extract_strided_slice %991 {offsets = [0, 20], sizes = [1, 20], strides = [1, 1]} : vector<1x80xf32> to vector<1x20xf32>
    %996 = vector.extract_strided_slice %991 {offsets = [0, 60], sizes = [1, 20], strides = [1, 1]} : vector<1x80xf32> to vector<1x20xf32>
    %997 = arith.mulf %995, %977 : vector<1x20xf32>
    %998 = arith.mulf %994, %993 : vector<1x20xf32>
    %999 = arith.addf %997, %998 : vector<1x20xf32>
    %1000 = math.tanh %999 : vector<1x20xf32>
    %1001 = arith.mulf %996, %1000 : vector<1x20xf32>
    %1002 = arith.index_cast %c43_i32 : i32 to index
    %c0_197 = arith.constant 0 : index
    %1003 = vector.load %arg12[%1002, %c0_197] : memref<48x20xf32, #tpu.memory_space<vmem>>, vector<1x20xf32>
    tpu.vector_store %arg12[%1002, %c0_197], %1001 {strides = array<i32>} : memref<48x20xf32, #tpu.memory_space<vmem>>, vector<1x20xf32>,
    %c44_i32 = arith.constant 44 : i32
    %1004 = arith.index_cast %c44_i32 : i32 to index
    %c0_198 = arith.constant 0 : index
    %1005 = vector.load %arg11[%1004, %c0_198] : memref<48x80xf32, #tpu.memory_space<vmem>>, vector<1x80xf32>
    %1006 = arith.truncf %1001 : vector<1x20xf32> to vector<1x20xbf16>
    %cst_199 = arith.constant dense<0.000000e+00> : vector<1x80xf32>
    %1007 = tpu.matmul %1006, %33, %cst_199 {dimension_numbers = #tpu.dot_dimension_numbers<[1], [0], [0], [1], [0, 0, 1, 1], [], []>} : vector<1x20xbf16>, vector<20x80xbf16>, vector<1x80xf32> -> vector<1x80xf32>
    %1008 = arith.addf %1005, %1007 : vector<1x80xf32>
    %1009 = arith.negf %1008 : vector<1x80xf32>
    %1010 = math.exp %1009 : vector<1x80xf32>
    %cst_200 = arith.constant 1.000000e+00 : f32
    %1011 = vector.broadcast %cst_200 : f32 to vector<1x80xf32>
    %1012 = arith.addf %1011, %1010 : vector<1x80xf32>
    %1013 = arith.divf %1011, %1012 : vector<1x80xf32>
    %1014 = vector.extract_strided_slice %1008 {offsets = [0, 40], sizes = [1, 20], strides = [1, 1]} : vector<1x80xf32> to vector<1x20xf32>
    %1015 = math.tanh %1014 : vector<1x20xf32>
    %1016 = vector.extract_strided_slice %1013 {offsets = [0, 0], sizes = [1, 20], strides = [1, 1]} : vector<1x80xf32> to vector<1x20xf32>
    %1017 = vector.extract_strided_slice %1013 {offsets = [0, 20], sizes = [1, 20], strides = [1, 1]} : vector<1x80xf32> to vector<1x20xf32>
    %1018 = vector.extract_strided_slice %1013 {offsets = [0, 60], sizes = [1, 20], strides = [1, 1]} : vector<1x80xf32> to vector<1x20xf32>
    %1019 = arith.mulf %1017, %999 : vector<1x20xf32>
    %1020 = arith.mulf %1016, %1015 : vector<1x20xf32>
    %1021 = arith.addf %1019, %1020 : vector<1x20xf32>
    %1022 = math.tanh %1021 : vector<1x20xf32>
    %1023 = arith.mulf %1018, %1022 : vector<1x20xf32>
    %1024 = arith.index_cast %c44_i32 : i32 to index
    %c0_201 = arith.constant 0 : index
    %1025 = vector.load %arg12[%1024, %c0_201] : memref<48x20xf32, #tpu.memory_space<vmem>>, vector<1x20xf32>
    tpu.vector_store %arg12[%1024, %c0_201], %1023 {strides = array<i32>} : memref<48x20xf32, #tpu.memory_space<vmem>>, vector<1x20xf32>,
    %c45_i32 = arith.constant 45 : i32
    %1026 = arith.index_cast %c45_i32 : i32 to index
    %c0_202 = arith.constant 0 : index
    %1027 = vector.load %arg11[%1026, %c0_202] : memref<48x80xf32, #tpu.memory_space<vmem>>, vector<1x80xf32>
    %1028 = arith.truncf %1023 : vector<1x20xf32> to vector<1x20xbf16>
    %cst_203 = arith.constant dense<0.000000e+00> : vector<1x80xf32>
    %1029 = tpu.matmul %1028, %33, %cst_203 {dimension_numbers = #tpu.dot_dimension_numbers<[1], [0], [0], [1], [0, 0, 1, 1], [], []>} : vector<1x20xbf16>, vector<20x80xbf16>, vector<1x80xf32> -> vector<1x80xf32>
    %1030 = arith.addf %1027, %1029 : vector<1x80xf32>
    %1031 = arith.negf %1030 : vector<1x80xf32>
    %1032 = math.exp %1031 : vector<1x80xf32>
    %cst_204 = arith.constant 1.000000e+00 : f32
    %1033 = vector.broadcast %cst_204 : f32 to vector<1x80xf32>
    %1034 = arith.addf %1033, %1032 : vector<1x80xf32>
    %1035 = arith.divf %1033, %1034 : vector<1x80xf32>
    %1036 = vector.extract_strided_slice %1030 {offsets = [0, 40], sizes = [1, 20], strides = [1, 1]} : vector<1x80xf32> to vector<1x20xf32>
    %1037 = math.tanh %1036 : vector<1x20xf32>
    %1038 = vector.extract_strided_slice %1035 {offsets = [0, 0], sizes = [1, 20], strides = [1, 1]} : vector<1x80xf32> to vector<1x20xf32>
    %1039 = vector.extract_strided_slice %1035 {offsets = [0, 20], sizes = [1, 20], strides = [1, 1]} : vector<1x80xf32> to vector<1x20xf32>
    %1040 = vector.extract_strided_slice %1035 {offsets = [0, 60], sizes = [1, 20], strides = [1, 1]} : vector<1x80xf32> to vector<1x20xf32>
    %1041 = arith.mulf %1039, %1021 : vector<1x20xf32>
    %1042 = arith.mulf %1038, %1037 : vector<1x20xf32>
    %1043 = arith.addf %1041, %1042 : vector<1x20xf32>
    %1044 = math.tanh %1043 : vector<1x20xf32>
    %1045 = arith.mulf %1040, %1044 : vector<1x20xf32>
    %1046 = arith.index_cast %c45_i32 : i32 to index
    %c0_205 = arith.constant 0 : index
    %1047 = vector.load %arg12[%1046, %c0_205] : memref<48x20xf32, #tpu.memory_space<vmem>>, vector<1x20xf32>
    tpu.vector_store %arg12[%1046, %c0_205], %1045 {strides = array<i32>} : memref<48x20xf32, #tpu.memory_space<vmem>>, vector<1x20xf32>,
    %c46_i32 = arith.constant 46 : i32
    %1048 = arith.index_cast %c46_i32 : i32 to index
    %c0_206 = arith.constant 0 : index
    %1049 = vector.load %arg11[%1048, %c0_206] : memref<48x80xf32, #tpu.memory_space<vmem>>, vector<1x80xf32>
    %1050 = arith.truncf %1045 : vector<1x20xf32> to vector<1x20xbf16>
    %cst_207 = arith.constant dense<0.000000e+00> : vector<1x80xf32>
    %1051 = tpu.matmul %1050, %33, %cst_207 {dimension_numbers = #tpu.dot_dimension_numbers<[1], [0], [0], [1], [0, 0, 1, 1], [], []>} : vector<1x20xbf16>, vector<20x80xbf16>, vector<1x80xf32> -> vector<1x80xf32>
    %1052 = arith.addf %1049, %1051 : vector<1x80xf32>
    %1053 = arith.negf %1052 : vector<1x80xf32>
    %1054 = math.exp %1053 : vector<1x80xf32>
    %cst_208 = arith.constant 1.000000e+00 : f32
    %1055 = vector.broadcast %cst_208 : f32 to vector<1x80xf32>
    %1056 = arith.addf %1055, %1054 : vector<1x80xf32>
    %1057 = arith.divf %1055, %1056 : vector<1x80xf32>
    %1058 = vector.extract_strided_slice %1052 {offsets = [0, 40], sizes = [1, 20], strides = [1, 1]} : vector<1x80xf32> to vector<1x20xf32>
    %1059 = math.tanh %1058 : vector<1x20xf32>
    %1060 = vector.extract_strided_slice %1057 {offsets = [0, 0], sizes = [1, 20], strides = [1, 1]} : vector<1x80xf32> to vector<1x20xf32>
    %1061 = vector.extract_strided_slice %1057 {offsets = [0, 20], sizes = [1, 20], strides = [1, 1]} : vector<1x80xf32> to vector<1x20xf32>
    %1062 = vector.extract_strided_slice %1057 {offsets = [0, 60], sizes = [1, 20], strides = [1, 1]} : vector<1x80xf32> to vector<1x20xf32>
    %1063 = arith.mulf %1061, %1043 : vector<1x20xf32>
    %1064 = arith.mulf %1060, %1059 : vector<1x20xf32>
    %1065 = arith.addf %1063, %1064 : vector<1x20xf32>
    %1066 = math.tanh %1065 : vector<1x20xf32>
    %1067 = arith.mulf %1062, %1066 : vector<1x20xf32>
    %1068 = arith.index_cast %c46_i32 : i32 to index
    %c0_209 = arith.constant 0 : index
    %1069 = vector.load %arg12[%1068, %c0_209] : memref<48x20xf32, #tpu.memory_space<vmem>>, vector<1x20xf32>
    tpu.vector_store %arg12[%1068, %c0_209], %1067 {strides = array<i32>} : memref<48x20xf32, #tpu.memory_space<vmem>>, vector<1x20xf32>,
    %c47_i32 = arith.constant 47 : i32
    %1070 = arith.index_cast %c47_i32 : i32 to index
    %c0_210 = arith.constant 0 : index
    %1071 = vector.load %arg11[%1070, %c0_210] : memref<48x80xf32, #tpu.memory_space<vmem>>, vector<1x80xf32>
    %1072 = arith.truncf %1067 : vector<1x20xf32> to vector<1x20xbf16>
    %cst_211 = arith.constant dense<0.000000e+00> : vector<1x80xf32>
    %1073 = tpu.matmul %1072, %33, %cst_211 {dimension_numbers = #tpu.dot_dimension_numbers<[1], [0], [0], [1], [0, 0, 1, 1], [], []>} : vector<1x20xbf16>, vector<20x80xbf16>, vector<1x80xf32> -> vector<1x80xf32>
    %1074 = arith.addf %1071, %1073 : vector<1x80xf32>
    %1075 = arith.negf %1074 : vector<1x80xf32>
    %1076 = math.exp %1075 : vector<1x80xf32>
    %cst_212 = arith.constant 1.000000e+00 : f32
    %1077 = vector.broadcast %cst_212 : f32 to vector<1x80xf32>
    %1078 = arith.addf %1077, %1076 : vector<1x80xf32>
    %1079 = arith.divf %1077, %1078 : vector<1x80xf32>
    %1080 = vector.extract_strided_slice %1074 {offsets = [0, 40], sizes = [1, 20], strides = [1, 1]} : vector<1x80xf32> to vector<1x20xf32>
    %1081 = math.tanh %1080 : vector<1x20xf32>
    %1082 = vector.extract_strided_slice %1079 {offsets = [0, 0], sizes = [1, 20], strides = [1, 1]} : vector<1x80xf32> to vector<1x20xf32>
    %1083 = vector.extract_strided_slice %1079 {offsets = [0, 20], sizes = [1, 20], strides = [1, 1]} : vector<1x80xf32> to vector<1x20xf32>
    %1084 = vector.extract_strided_slice %1079 {offsets = [0, 60], sizes = [1, 20], strides = [1, 1]} : vector<1x80xf32> to vector<1x20xf32>
    %1085 = arith.mulf %1083, %1065 : vector<1x20xf32>
    %1086 = arith.mulf %1082, %1081 : vector<1x20xf32>
    %1087 = arith.addf %1085, %1086 : vector<1x20xf32>
    %1088 = math.tanh %1087 : vector<1x20xf32>
    %1089 = arith.mulf %1084, %1088 : vector<1x20xf32>
    %1090 = arith.index_cast %c47_i32 : i32 to index
    %c0_213 = arith.constant 0 : index
    %1091 = vector.load %arg12[%1090, %c0_213] : memref<48x20xf32, #tpu.memory_space<vmem>>, vector<1x20xf32>
    tpu.vector_store %arg12[%1090, %c0_213], %1089 {strides = array<i32>} : memref<48x20xf32, #tpu.memory_space<vmem>>, vector<1x20xf32>,
    %c48_i32 = arith.constant 48 : i32
    %c0_214 = arith.constant 0 : index
    %c0_215 = arith.constant 0 : index
    %1092 = vector.load %arg12[%c0_214, %c0_215] : memref<48x20xf32, #tpu.memory_space<vmem>>, vector<48x20xf32>
    %c0_216 = arith.constant 0 : index
    %c0_217 = arith.constant 0 : index
    %1093 = vector.load %arg8[%c0_216, %c0_217] : memref<20x128xf32, #tpu.memory_space<vmem>>, vector<20x128xf32>
    %cst_218 = arith.constant dense<0.000000e+00> : vector<48x128xf32>
    %1094 = tpu.matmul %1092, %1093, %cst_218 {dimension_numbers = #tpu.dot_dimension_numbers<[1], [0], [0], [1], [0, 0, 1, 1], [], []>} : vector<48x20xf32>, vector<20x128xf32>, vector<48x128xf32> -> vector<48x128xf32>
    %c0_219 = arith.constant 0 : index
    %c0_220 = arith.constant 0 : index
    %1095 = vector.load %arg9[%c0_219, %c0_220] : memref<1x128xf32, #tpu.memory_space<vmem>>, vector<1x128xf32>
    %1096 = vector.broadcast %1095 : vector<1x128xf32> to vector<48x128xf32>
    %1097 = arith.addf %1094, %1096 : vector<48x128xf32>
    %c0_221 = arith.constant 0 : index
    %c0_222 = arith.constant 0 : index
    %1098 = vector.load %arg10[%c0_221, %c0_222] : memref<48x128xf32, #tpu.memory_space<vmem>>, vector<48x128xf32>
    tpu.vector_store %arg10[%c0_221, %c0_222], %1097 {strides = array<i32>} : memref<48x128xf32, #tpu.memory_space<vmem>>, vector<48x128xf32>,
    return
  }
  func.func @transform_0(%arg0: i32) -> (i32, i32) {
    %c0_i32 = arith.constant 0 : i32
    %c0_i32_0 = arith.constant 0 : i32
    return %arg0, %c0_i32 : i32, i32
  }
  func.func @transform_1(%arg0: i32) -> (i32, i32) {
    %c0_i32 = arith.constant 0 : i32
    %c0_i32_0 = arith.constant 0 : i32
    %c0_i32_1 = arith.constant 0 : i32
    return %c0_i32, %c0_i32_0 : i32, i32
  }
  func.func @transform_2(%arg0: i32) -> (i32, i32) {
    %c0_i32 = arith.constant 0 : i32
    %c0_i32_0 = arith.constant 0 : i32
    %c0_i32_1 = arith.constant 0 : i32
    return %c0_i32, %c0_i32_0 : i32, i32
  }
  func.func @transform_3(%arg0: i32) -> (i32, i32) {
    %c0_i32 = arith.constant 0 : i32
    %c0_i32_0 = arith.constant 0 : i32
    %c0_i32_1 = arith.constant 0 : i32
    return %c0_i32, %c0_i32_0 : i32, i32
  }
  func.func @transform_4(%arg0: i32) -> (i32, i32) {
    %c0_i32 = arith.constant 0 : i32
    %c0_i32_0 = arith.constant 0 : i32
    %c0_i32_1 = arith.constant 0 : i32
    return %c0_i32, %c0_i32_0 : i32, i32
  }
  func.func @transform_5(%arg0: i32) -> (i32, i32) {
    %c0_i32 = arith.constant 0 : i32
    %c0_i32_0 = arith.constant 0 : i32
    %c0_i32_1 = arith.constant 0 : i32
    return %c0_i32, %c0_i32_0 : i32, i32
  }
  func.func @transform_6(%arg0: i32) -> (i32, i32) {
    %c0_i32 = arith.constant 0 : i32
    %c0_i32_0 = arith.constant 0 : i32
    %c0_i32_1 = arith.constant 0 : i32
    return %c0_i32, %c0_i32_0 : i32, i32
  }
  func.func @transform_7(%arg0: i32) -> (i32, i32) {
    %c0_i32 = arith.constant 0 : i32
    %c0_i32_0 = arith.constant 0 : i32
    %c0_i32_1 = arith.constant 0 : i32
    return %c0_i32, %c0_i32_0 : i32, i32
  }
  func.func @transform_8(%arg0: i32) -> (i32, i32) {
    %c0_i32 = arith.constant 0 : i32
    %c0_i32_0 = arith.constant 0 : i32
    %c0_i32_1 = arith.constant 0 : i32
    return %c0_i32, %c0_i32_0 : i32, i32
  }
  func.func @transform_9(%arg0: i32) -> (i32, i32) {
    %c0_i32 = arith.constant 0 : i32
    %c0_i32_0 = arith.constant 0 : i32
    return %arg0, %c0_i32 : i32, i32
  }
}

</mosaic_0001>

<llo_original>
// kernel: tpu_custom_call.1
$region0: #{tpu_custom_call.1}
  #allocation0 [shape = 'u32[]', space=smem, size = 0x4, offset = 0x4, fixed_abs, tag = 'smem constant byte address 0x4 - core index']
  #allocation1 [shape = 'u32[72,128]{1,0:T(1,128)}', space=vmem, size = 0x9000, scoped, tag = 'internal scratch']
  #allocation2 [shape = 'f32[48,80]{1,0:T(8,128)}', space=vmem, size = 0x6000, scoped, tag = 'scratch operand']
  #allocation3 [shape = 'f32[48,20]{1,0:T(8,128)}', space=vmem, size = 0x6000, scoped, tag = 'scratch operand']
  %s0 = inlined_call_operand.vmem [shape: s32[48,1], index: 0, kind: input, shape index: {}]
  %s1 = inlined_call_operand.vmem [shape: f32[128,3], index: 1, kind: input, shape index: {}]
  %s2 = inlined_call_operand.vmem [shape: f32[48,144], index: 2, kind: input, shape index: {}]
  %s3 = inlined_call_operand.vmem [shape: f32[48,1], index: 3, kind: input, shape index: {}]
  %s4 = inlined_call_operand.vmem [shape: f32[3,80], index: 4, kind: input, shape index: {}]
  %s5 = inlined_call_operand.vmem [shape: bf16[20,80], index: 5, kind: input, shape index: {}]
  %s6 = inlined_call_operand.vmem [shape: f32[1,80], index: 6, kind: input, shape index: {}]
  %s7 = inlined_call_operand.vmem [shape: f32[20,128], index: 7, kind: input, shape index: {}]
  %s8 = inlined_call_operand.vmem [shape: f32[1,128], index: 8, kind: input, shape index: {}]
  %s9 = inlined_call_operand.hbm [shape: f32[48,128], index: 9, kind: output, shape index: {}]
  %s10 = sld [smem:[#allocation0]]
  $region46: #{tpu_custom_call.1} parent=0
    _
  %s12 = ssub.s32 1, %s10
  %s13 = scalar_select 0, %s12, %s10
  $region1: #{tpu_custom_call.1} parent=0
    #allocation4 [shape = 'u8[24576]{0}', space=vmem, size = 0x6000, scoped, tag = 'output window, operand 0, single buffered']
    #allocation5 [shape = 's32[1]{0}', space=sflag, size = 0x4, scoped, tag = 'scoped memory for tpu_custom_call.1']
    %14 = vsyncpa [#allocation5], 0
    // Predicated region
    $region2: #{tpu_custom_call.1} parent=1 // pred_check
      _
    $region3: #{tpu_custom_call.1} parent=1 // pred_check_branch
      %16 = sbr.rel (0) target = $region5
    $region4: #{tpu_custom_call.1} parent=1 // pred_region
      _
    $region5: #{tpu_custom_call.1} parent=1 // pred_fallthru
      _
    // Predicated region
    $region6: #{tpu_custom_call.1} parent=1 // pred_check
      _
    $region7: #{tpu_custom_call.1} parent=1 // pred_check_branch
      %18 = sbr.rel (0) target = $region9
    $region8: #{tpu_custom_call.1} parent=1 // pred_region
      _
    $region9: #{tpu_custom_call.1} parent=1 // pred_fallthru
      _
    // Predicated region
    $region10: #{tpu_custom_call.1} parent=1 // pred_check
      _
    $region11: #{tpu_custom_call.1} parent=1 // pred_check_branch
      %20 = sbr.rel (0) target = $region13
    $region12: #{tpu_custom_call.1} parent=1 // pred_region
      _
    $region13: #{tpu_custom_call.1} parent=1 // pred_fallthru
      _
    // Predicated region
    $region14: #{tpu_custom_call.1} parent=1 // pred_check
      _
    $region15: #{tpu_custom_call.1} parent=1 // pred_check_branch
      %22 = sbr.rel (0) target = $region17
    $region16: #{tpu_custom_call.1} parent=1 // pred_region
      _
    $region17: #{tpu_custom_call.1} parent=1 // pred_fallthru
      _
    // Predicated region
    $region18: #{tpu_custom_call.1} parent=1 // pred_check
      _
    $region19: #{tpu_custom_call.1} parent=1 // pred_check_branch
      %24 = sbr.rel (0) target = $region21
    $region20: #{tpu_custom_call.1} parent=1 // pred_region
      _
    $region21: #{tpu_custom_call.1} parent=1 // pred_fallthru
      _
    // Predicated region
    $region22: #{tpu_custom_call.1} parent=1 // pred_check
      _
    $region23: #{tpu_custom_call.1} parent=1 // pred_check_branch
      %26 = sbr.rel (0) target = $region25
    $region24: #{tpu_custom_call.1} parent=1 // pred_region
      _
    $region25: #{tpu_custom_call.1} parent=1 // pred_fallthru
      _
    // Predicated region
    $region26: #{tpu_custom_call.1} parent=1 // pred_check
      _
    $region27: #{tpu_custom_call.1} parent=1 // pred_check_branch
      %28 = sbr.rel (0) target = $region29
    $region28: #{tpu_custom_call.1} parent=1 // pred_region
      _
    $region29: #{tpu_custom_call.1} parent=1 // pred_fallthru
      _
    // Predicated region
    $region30: #{tpu_custom_call.1} parent=1 // pred_check
      _
    $region31: #{tpu_custom_call.1} parent=1 // pred_check_branch
      %30 = sbr.rel (0) target = $region33
    $region32: #{tpu_custom_call.1} parent=1 // pred_region
      _
    $region33: #{tpu_custom_call.1} parent=1 // pred_fallthru
      _
    // Predicated region
    $region34: #{tpu_custom_call.1} parent=1 // pred_check
      _
    $region35: #{tpu_custom_call.1} parent=1 // pred_check_branch
      %32 = sbr.rel (0) target = $region37
    $region36: #{tpu_custom_call.1} parent=1 // pred_region
      _
    $region37: #{tpu_custom_call.1} parent=1 // pred_fallthru
      _
    %v34 = vld [vmem:[%s0] sm:$0xff]
    %v35 = vld [vmem:[%s0 + $0x8] sm:$0xff]
    %v36 = vld [vmem:[%s0 + $0x10] sm:$0xff]
    %v37 = vld [vmem:[%s0 + $0x18] sm:$0xff]
    %v38 = vld [vmem:[%s0 + $0x20] sm:$0xff]
    %v39 = vld [vmem:[%s0 + $0x28] sm:$0xff]
    %v40 = vlaneseq
    %v41 = vand.u32 %v40, 127
    %42 = vset.pattern.permute.xlu0 0
    %43 = vperm.xlu0 %42, %v34
    %v44 = vpop.permute.xlu0 %43
    %45 = vset.pattern.permute.xlu0 0
    %46 = vperm.xlu0 %45, %v35
    %v47 = vpop.permute.xlu0 %46
    %48 = vset.pattern.permute.xlu0 0
    %49 = vperm.xlu0 %48, %v36
    %v50 = vpop.permute.xlu0 %49
    %51 = vset.pattern.permute.xlu0 0
    %52 = vperm.xlu0 %51, %v37
    %v53 = vpop.permute.xlu0 %52
    %54 = vset.pattern.permute.xlu0 0
    %55 = vperm.xlu0 %54, %v38
    %v56 = vpop.permute.xlu0 %55
    %57 = vset.pattern.permute.xlu0 0
    %58 = vperm.xlu0 %57, %v39
    %v59 = vpop.permute.xlu0 %58
    %vm60 = vcmp.eq.s32.totalorder %v41, %v44
    %vm61 = vcmp.eq.s32.totalorder %v41, %v47
    %vm62 = vcmp.eq.s32.totalorder %v41, %v50
    %vm63 = vcmp.eq.s32.totalorder %v41, %v53
    %vm64 = vcmp.eq.s32.totalorder %v41, %v56
    %vm65 = vcmp.eq.s32.totalorder %v41, %v59
    %v66 = vsel %vm60, 1, 0
    %v67 = vsel %vm61, 1, 0
    %v68 = vsel %vm62, 1, 0
    %v69 = vsel %vm63, 1, 0
    %v70 = vsel %vm64, 1, 0
    %v71 = vsel %vm65, 1, 0
    %v72 = vcvt.s32.f32 %v66
    %v73 = vcvt.s32.f32 %v67
    %v74 = vcvt.s32.f32 %v68
    %v75 = vcvt.s32.f32 %v69
    %v76 = vcvt.s32.f32 %v70
    %v77 = vcvt.s32.f32 %v71
    %v78 = vld [vmem:[%s1] sm:$0xff]
    %v79 = vld [vmem:[%s1 + $0x8] sm:$0xff]
    %v80 = vld [vmem:[%s1 + $0x10] sm:$0xff]
    %v81 = vld [vmem:[%s1 + $0x18] sm:$0xff]
    %v82 = vld [vmem:[%s1 + $0x20] sm:$0xff]
    %v83 = vld [vmem:[%s1 + $0x28] sm:$0xff]
    %v84 = vld [vmem:[%s1 + $0x30] sm:$0xff]
    %v85 = vld [vmem:[%s1 + $0x38] sm:$0xff]
    %v86 = vld [vmem:[%s1 + $0x40] sm:$0xff]
    %v87 = vld [vmem:[%s1 + $0x48] sm:$0xff]
    %v88 = vld [vmem:[%s1 + $0x50] sm:$0xff]
    %v89 = vld [vmem:[%s1 + $0x58] sm:$0xff]
    %v90 = vld [vmem:[%s1 + $0x60] sm:$0xff]
    %v91 = vld [vmem:[%s1 + $0x68] sm:$0xff]
    %v92 = vld [vmem:[%s1 + $0x70] sm:$0xff]
    %v93 = vld [vmem:[%s1 + $0x78] sm:$0xff]
    %94 = vmatpush.msra.mxu0 %v93
    %95 = vmatpush.msra.mxu0 %v92
    %96 = vmatpush.msra.mxu0 %v91
    %97 = vmatpush.msra.mxu0 %v90
    %98 = vmatpush.msra.mxu0 %v89
    %99 = vmatpush.msra.mxu0 %v88
    %100 = vmatpush.msra.mxu0 %v87
    %101 = vmatpush.msra.mxu0 %v86
    %102 = vmatpush.msra.mxu0 %v85
    %103 = vmatpush.msra.mxu0 %v84
    %104 = vmatpush.msra.mxu0 %v83
    %105 = vmatpush.msra.mxu0 %v82
    %106 = vmatpush.msra.mxu0 %v81
    %107 = vmatpush.msra.mxu0 %v80
    %108 = vmatpush.msra.mxu0 %v79
    %109 = vmatpush.msra.mxu0 %v78
    %110 = vmatmul.f32.gmra.mxu0 %v72
    %v111 = vpop.f32.mrf.mxu0
    %v112 = vadd.f32 0.0, %v111
    %113 = vmatmul.f32.gmra.mxu0 %v73
    %v114 = vpop.f32.mrf.mxu0
    %v115 = vadd.f32 0.0, %v114
    %116 = vmatmul.f32.gmra.mxu0 %v74
    %v117 = vpop.f32.mrf.mxu0
    %v118 = vadd.f32 0.0, %v117
    %119 = vmatmul.f32.gmra.mxu0 %v75
    %v120 = vpop.f32.mrf.mxu0
    %v121 = vadd.f32 0.0, %v120
    %122 = vmatmul.f32.gmra.mxu0 %v76
    %v123 = vpop.f32.mrf.mxu0
    %v124 = vadd.f32 0.0, %v123
    %125 = vmatmul.f32.gmra.mxu0 %v77
    %v126 = vpop.f32.mrf.mxu0
    %v127 = vadd.f32 0.0, %v126
    %128 = vdwg.mxu0
    %v129 = vlaneseq
    %v130 = vshrl.u32 %v129, 7
    %v131 = vadd.s32 %v130, 1
    %vm132 = vcmp.eq.s32.totalorder %v41, %v131
    %v133 = vsel %vm132, 1, 0
    %v134 = vcvt.s32.f32 %v133
    %vm135 = vcmask 23552
    %v137 = vsel %vm135, %v112, 0
    %v140 = vsel %vm135, %v115, 0
    %v143 = vsel %vm135, %v118, 0
    %v146 = vsel %vm135, %v121, 0
    %v149 = vsel %vm135, %v124, 0
    %v152 = vsel %vm135, %v127, 0
    %vm154 = vcmask 1042432
    %v156 = vsel %vm154, %v134, 0
    %158 = vmatpush.msra.mxu0 0.0
    %159 = vmatpush.msra.mxu0 0.0
    %160 = vmatpush.msra.mxu0 0.0
    %161 = vmatpush.msra.mxu0 0.0
    %162 = vmatpush.msra.mxu0 0.0
    %163 = vmatpush.msra.mxu0 0.0
    %164 = vmatpush.msra.mxu0 0.0
    %165 = vmatpush.msra.mxu0 0.0
    %166 = vmatpush.msra.mxu0 0.0
    %167 = vmatpush.msra.mxu0 0.0
    %168 = vmatpush.msra.mxu0 0.0
    %169 = vmatpush.msra.mxu0 0.0
    %170 = vmatpush.msra.mxu0 0.0
    %171 = vmatpush.msra.mxu0 0.0
    %172 = vmatpush.msra.mxu0 0.0
    %173 = vmatpush.msra.mxu0 %v156
    %174 = vmatmul.f32.gmra.mxu0 %v137
    %v175 = vpop.f32.mrf.mxu0
    %v176 = vadd.f32 0.0, %v175
    %177 = vmatmul.f32.gmra.mxu0 %v140
    %v178 = vpop.f32.mrf.mxu0
    %v179 = vadd.f32 0.0, %v178
    %180 = vmatmul.f32.gmra.mxu0 %v143
    %v181 = vpop.f32.mrf.mxu0
    %v182 = vadd.f32 0.0, %v181
    %183 = vmatmul.f32.gmra.mxu0 %v146
    %v184 = vpop.f32.mrf.mxu0
    %v185 = vadd.f32 0.0, %v184
    %186 = vmatmul.f32.gmra.mxu0 %v149
    %v187 = vpop.f32.mrf.mxu0
    %v188 = vadd.f32 0.0, %v187
    %189 = vmatmul.f32.gmra.mxu0 %v152
    %v190 = vpop.f32.mrf.mxu0
    %v191 = vadd.f32 0.0, %v190
    %192 = vdwg.mxu0
    %199 = vrot.lane.b32.xlu0 %v176, 127
    %v200 = vpop.permute.xlu0 %199
    %201 = vrot.lane.b32.xlu0 %v179, 127
    %v202 = vpop.permute.xlu0 %201
    %203 = vrot.lane.b32.xlu0 %v182, 127
    %v204 = vpop.permute.xlu0 %203
    %205 = vrot.lane.b32.xlu0 %v185, 127
    %v206 = vpop.permute.xlu0 %205
    %207 = vrot.lane.b32.xlu0 %v188, 127
    %v208 = vpop.permute.xlu0 %207
    %209 = vrot.lane.b32.xlu0 %v191, 127
    %v210 = vpop.permute.xlu0 %209
    %217 = vrot.lane.b32.xlu0 %v176, 126
    %v218 = vpop.permute.xlu0 %217
    %219 = vrot.lane.b32.xlu0 %v179, 126
    %v220 = vpop.permute.xlu0 %219
    %221 = vrot.lane.b32.xlu0 %v182, 126
    %v222 = vpop.permute.xlu0 %221
    %223 = vrot.lane.b32.xlu0 %v185, 126
    %v224 = vpop.permute.xlu0 %223
    %225 = vrot.lane.b32.xlu0 %v188, 126
    %v226 = vpop.permute.xlu0 %225
    %227 = vrot.lane.b32.xlu0 %v191, 126
    %v228 = vpop.permute.xlu0 %227
    %v235 = vld [vmem:[%s2] sm:$0xff]
    %v236 = vld [vmem:[%s2 + $0x8] sm:$0xff]
    %v237 = vld [vmem:[%s2 + $0x10] sm:$0xff]
    %v238 = vld [vmem:[%s2 + $0x18] sm:$0xff]
    %v239 = vld [vmem:[%s2 + $0x20] sm:$0xff]
    %v240 = vld [vmem:[%s2 + $0x28] sm:$0xff]
    %v241 = vld [vmem:[%s2 + $0x30] sm:$0xff]
    %v242 = vld [vmem:[%s2 + $0x38] sm:$0xff]
    %v243 = vld [vmem:[%s2 + $0x40] sm:$0xff]
    %v244 = vld [vmem:[%s2 + $0x48] sm:$0xff]
    %v245 = vld [vmem:[%s2 + $0x50] sm:$0xff]
    %v246 = vld [vmem:[%s2 + $0x58] sm:$0xff]
    %v247 = vld [vmem:[%s3] sm:$0xff]
    %v248 = vld [vmem:[%s3 + $0x8] sm:$0xff]
    %v249 = vld [vmem:[%s3 + $0x10] sm:$0xff]
    %v250 = vld [vmem:[%s3 + $0x18] sm:$0xff]
    %v251 = vld [vmem:[%s3 + $0x20] sm:$0xff]
    %v252 = vld [vmem:[%s3 + $0x28] sm:$0xff]
    %254 = vset.pattern.permute.xlu0 0
    %255 = vperm.xlu0 %254, %v247
    %v256 = vpop.permute.xlu0 %255
    %259 = vset.pattern.permute.xlu0 0
    %260 = vperm.xlu0 %259, %v248
    %v261 = vpop.permute.xlu0 %260
    %264 = vset.pattern.permute.xlu0 0
    %265 = vperm.xlu0 %264, %v249
    %v266 = vpop.permute.xlu0 %265
    %269 = vset.pattern.permute.xlu0 0
    %270 = vperm.xlu0 %269, %v250
    %v271 = vpop.permute.xlu0 %270
    %274 = vset.pattern.permute.xlu0 0
    %275 = vperm.xlu0 %274, %v251
    %v276 = vpop.permute.xlu0 %275
    %279 = vset.pattern.permute.xlu0 0
    %280 = vperm.xlu0 %279, %v252
    %v281 = vpop.permute.xlu0 %280
    %vm283 = vcmask 130048
    %v285 = vsel %vm283, %v236, 0
    %v288 = vsel %vm283, %v238, 0
    %v291 = vsel %vm283, %v240, 0
    %v294 = vsel %vm283, %v242, 0
    %v297 = vsel %vm283, %v244, 0
    %v300 = vsel %vm283, %v246, 0
    %302 = vmatpush.msra.mxu0 %v224
    %303 = vmatpush.msra.mxu0 %v222
    %304 = vmatpush.msra.mxu0 %v220
    %305 = vmatpush.msra.mxu0 %v218
    %306 = vmatpush.msra.mxu0 %v210
    %307 = vmatpush.msra.mxu0 %v208
    %308 = vmatpush.msra.mxu0 %v206
    %309 = vmatpush.msra.mxu0 %v204
    %310 = vmatpush.msra.mxu0 %v202
    %311 = vmatpush.msra.mxu0 %v200
    %312 = vmatpush.msra.mxu0 %v191
    %313 = vmatpush.msra.mxu0 %v188
    %314 = vmatpush.msra.mxu0 %v185
    %315 = vmatpush.msra.mxu0 %v182
    %316 = vmatpush.msra.mxu0 %v179
    %317 = vmatpush.msra.mxu0 %v176
    %318 = vmatmul.f32.gmra.mxu0 %v235
    %v319 = vpop.f32.mrf.mxu0
    %v320 = vadd.f32 %v256, %v319
    %321 = vmatmul.f32.gmra.mxu0 %v237
    %v322 = vpop.f32.mrf.mxu0
    %v323 = vadd.f32 %v261, %v322
    %324 = vmatmul.f32.gmra.mxu0 %v239
    %v325 = vpop.f32.mrf.mxu0
    %v326 = vadd.f32 %v266, %v325
    %327 = vmatmul.f32.gmra.mxu0 %v241
    %v328 = vpop.f32.mrf.mxu0
    %v329 = vadd.f32 %v271, %v328
    %330 = vmatmul.f32.gmra.mxu0 %v243
    %v331 = vpop.f32.mrf.mxu0
    %v332 = vadd.f32 %v276, %v331
    %333 = vmatmul.f32.gmra.mxu0 %v245
    %v334 = vpop.f32.mrf.mxu0
    %v335 = vadd.f32 %v281, %v334
    %336 = vdwg.mxu0
    %337 = vmatpush.msra.mxu0 0.0
    %338 = vmatpush.msra.mxu0 0.0
    %339 = vmatpush.msra.mxu0 0.0
    %340 = vmatpush.msra.mxu0 0.0
    %341 = vmatpush.msra.mxu0 0.0
    %342 = vmatpush.msra.mxu0 0.0
    %343 = vmatpush.msra.mxu0 0.0
    %344 = vmatpush.msra.mxu0 0.0
    %345 = vmatpush.msra.mxu0 0.0
    %346 = vmatpush.msra.mxu0 0.0
    %347 = vmatpush.msra.mxu0 0.0
    %348 = vmatpush.msra.mxu0 0.0
    %349 = vmatpush.msra.mxu0 0.0
    %350 = vmatpush.msra.mxu0 0.0
    %351 = vmatpush.msra.mxu0 %v228
    %352 = vmatpush.msra.mxu0 %v226
    %353 = vmatmul.f32.gmra.mxu0 %v285
    %v354 = vpop.f32.mrf.mxu0
    %v355 = vadd.f32 %v320, %v354
    %356 = vmatmul.f32.gmra.mxu0 %v288
    %v357 = vpop.f32.mrf.mxu0
    %v358 = vadd.f32 %v323, %v357
    %359 = vmatmul.f32.gmra.mxu0 %v291
    %v360 = vpop.f32.mrf.mxu0
    %v361 = vadd.f32 %v326, %v360
    %362 = vmatmul.f32.gmra.mxu0 %v294
    %v363 = vpop.f32.mrf.mxu0
    %v364 = vadd.f32 %v329, %v363
    %365 = vmatmul.f32.gmra.mxu0 %v297
    %v366 = vpop.f32.mrf.mxu0
    %v367 = vadd.f32 %v332, %v366
    %368 = vmatmul.f32.gmra.mxu0 %v300
    %v369 = vpop.f32.mrf.mxu0
    %v370 = vadd.f32 %v335, %v369
    %371 = vdwg.mxu0
    %v372 = vmax.f32 %v355, 0.0
    %v373 = vmax.f32 %v358, 0.0
    %v374 = vmax.f32 %v361, 0.0
    %v375 = vmax.f32 %v364, 0.0
    %v376 = vmax.f32 %v367, 0.0
    %v377 = vmax.f32 %v370, 0.0
    %v378 = vld [vmem:[%s4] sm:$0x7]
    %v379 = vld [vmem:[%s6] sm:$0x1]
    %v381 = vperm.slane %v379, 0
    %v384 = vsel %vm135, %v372, 0
    %v387 = vsel %vm135, %v373, 0
    %v390 = vsel %vm135, %v374, 0
    %v393 = vsel %vm135, %v375, 0
    %v396 = vsel %vm135, %v376, 0
    %v399 = vsel %vm135, %v377, 0
    %v402 = vsel %vm154, %v378, 0
    %404 = vmatpush.msra.mxu0 0.0
    %405 = vmatpush.msra.mxu0 0.0
    %406 = vmatpush.msra.mxu0 0.0
    %407 = vmatpush.msra.mxu0 0.0
    %408 = vmatpush.msra.mxu0 0.0
    %409 = vmatpush.msra.mxu0 0.0
    %410 = vmatpush.msra.mxu0 0.0
    %411 = vmatpush.msra.mxu0 0.0
    %412 = vmatpush.msra.mxu0 0.0
    %413 = vmatpush.msra.mxu0 0.0
    %414 = vmatpush.msra.mxu0 0.0
    %415 = vmatpush.msra.mxu0 0.0
    %416 = vmatpush.msra.mxu0 0.0
    %417 = vmatpush.msra.mxu0 0.0
    %418 = vmatpush.msra.mxu0 0.0
    %419 = vmatpush.msra.mxu0 %v402
    %420 = vmatmul.f32.gmra.mxu0 %v384
    %v421 = vpop.f32.mrf.mxu0
    %v422 = vadd.f32 %v381, %v421
    %423 = vmatmul.f32.gmra.mxu0 %v387
    %v424 = vpop.f32.mrf.mxu0
    %v425 = vadd.f32 %v381, %v424
    %426 = vmatmul.f32.gmra.mxu0 %v390
    %v427 = vpop.f32.mrf.mxu0
    %v428 = vadd.f32 %v381, %v427
    %429 = vmatmul.f32.gmra.mxu0 %v393
    %v430 = vpop.f32.mrf.mxu0
    %v431 = vadd.f32 %v381, %v430
    %432 = vmatmul.f32.gmra.mxu0 %v396
    %v433 = vpop.f32.mrf.mxu0
    %v434 = vadd.f32 %v381, %v433
    %435 = vmatmul.f32.gmra.mxu0 %v399
    %v436 = vpop.f32.mrf.mxu0
    %v437 = vadd.f32 %v381, %v436
    %438 = vdwg.mxu0
    %vm439 = vcmask 654336
    %440 = vst.msk [vmem:[#allocation2] sm:$0xff] %vm439, %v422
    %441 = vst.msk [vmem:[#allocation2 + $0x8] sm:$0xff] %vm439, %v425
    %442 = vst.msk [vmem:[#allocation2 + $0x10] sm:$0xff] %vm439, %v428
    %443 = vst.msk [vmem:[#allocation2 + $0x18] sm:$0xff] %vm439, %v431
    %444 = vst.msk [vmem:[#allocation2 + $0x20] sm:$0xff] %vm439, %v434
    %445 = vst.msk [vmem:[#allocation2 + $0x28] sm:$0xff] %vm439, %v437
    %v446 = vld [vmem:[%s5] sm:$0xf]
    %v447 = vld [vmem:[%s5 + $0x4] sm:$0xf]
    %v448 = vld [vmem:[%s5 + $0x8] sm:$0x3]
    %v449 = vld [vmem:[#allocation2] sm:$0x1]
    %v453 = vunpack.c.l.b16 %v446
    %v454 = vunpack.c.l.b16 %v447
    %v455 = vunpack.c.l.b16 %v448
    %v456 = vpack.c.b16 %v454, %v453
    %v457 = vpack.c.b16 %v455, %v455
    %vm459 = vcmask 162816
    %v461 = vsel %vm459, 0, 0
    %vm463 = vcmask 1041408
    %v465 = vsel %vm463, %v457, 0
    %467 = vmatpush.bf16.msra.mxu0 0
    %468 = vmatpush.bf16.msra.mxu0 0
    %469 = vmatpush.bf16.msra.mxu0 0
    %470 = vmatpush.bf16.msra.mxu0 0
    %471 = vmatpush.bf16.msra.mxu0 0
    %472 = vmatpush.bf16.msra.mxu0 0
    %473 = vmatpush.bf16.msra.mxu0 %v465
    %474 = vmatpush.bf16.msra.mxu0 %v456
    %475 = vmatmul.bf16.gmra.mxu0 %v461
    %v476 = vpop.f32.mrf.mxu0
    %v477 = vadd.f32 0.0, %v476
    %v478 = vpop.f32.mrf.mxu0
    %479 = vdwg.mxu0
    %v480 = vadd.f32 %v449, %v477
    %v481 = vxor.u32 %v480, 2147483648
    %v482 = vmul.f32 %v481, 1.442695
    %v483 = vpow.pop %v482
    %v484 = vadd.f32 %v483, 1.0
    %v485 = vrcp.pop %v484
    %v486 = vmul.f32 %v484, %v485
    %v487 = vsub.f32 1.0, %v486
    %v488 = vmul.f32 %v485, %v487
    %v489 = vadd.f32 %v485, %v488
    %vm490 = vweird.f32 %v484
    %vm491 = vweird.f32 %v485
    %vm492 = vmor %vm490, %vm491
    %v493 = vsel %vm492, %v485, %v489
    %v494 = vand.u32 2147483647, %v484
    %vm495 = vcmp.eq.f32.partialorder %v494, 8.507059e+37
    %v496 = vand.u32 %v484, 2147483648
    %v497 = vor.u32 1.1754944e-38, %v496
    %v498 = vsel %vm495, %v497, %v493
    %v499 = vmul.f32 1.0, %v498
    %v500 = vtanh.pop %v480
    %v501 = vmul.f32 %v499, 0.0
    %503 = vrot.lane.b32.xlu0 %v500, 88
    %v504 = vpop.permute.xlu0 %503
    %v506 = vmul.f32 %v499, %v504
    %508 = vrot.lane.b32.xlu0 %v506, 20
    %v509 = vpop.permute.xlu0 %508
    %v511 = vadd.f32 %v501, %v509
    %v512 = vtanh.pop %v511
    %514 = vrot.lane.b32.xlu0 %v512, 40
    %v515 = vpop.permute.xlu0 %514
    %v517 = vmul.f32 %v499, %v515
    %519 = vrot.lane.b32.xlu0 %v517, 68
    %v520 = vpop.permute.xlu0 %519
    %vm522 = vcmask 155648
    %523 = vst.msk [vmem:[#allocation3] sm:$0x1] %vm522, %v520
    %v524 = vld [vmem:[#allocation2 + $0x1] sm:$0x1]
    %v525 = vpack.c.bf16 %v517, %v517
    %527 = vrot.lane.b32.xlu0 %v525, 68
    %v528 = vpop.permute.xlu0 %527
    %v530 = vsel %vm459, %v528, 0
    %532 = vmatpush.bf16.msra.mxu0 0
    %533 = vmatpush.bf16.msra.mxu0 0
    %534 = vmatpush.bf16.msra.mxu0 0
    %535 = vmatpush.bf16.msra.mxu0 0
    %536 = vmatpush.bf16.msra.mxu0 0
    %537 = vmatpush.bf16.msra.mxu0 0
    %538 = vmatpush.bf16.msra.mxu0 %v465
    %539 = vmatpush.bf16.msra.mxu0 %v456
    %540 = vmatmul.bf16.gmra.mxu0 %v530
    %v541 = vpop.f32.mrf.mxu0
    %v542 = vadd.f32 0.0, %v541
    %v543 = vpop.f32.mrf.mxu0
    %544 = vdwg.mxu0
    %v545 = vadd.f32 %v524, %v542
    %v546 = vxor.u32 %v545, 2147483648
    %v547 = vmul.f32 %v546, 1.442695
    %v548 = vpow.pop %v547
    %v549 = vadd.f32 %v548, 1.0
    %v550 = vrcp.pop %v549
    %v551 = vmul.f32 %v549, %v550
    %v552 = vsub.f32 1.0, %v551
    %v553 = vmul.f32 %v550, %v552
    %v554 = vadd.f32 %v550, %v553
    %vm555 = vweird.f32 %v549
    %vm556 = vweird.f32 %v550
    %vm557 = vmor %vm555, %vm556
    %v558 = vsel %vm557, %v550, %v554
    %v559 = vand.u32 2147483647, %v549
    %vm560 = vcmp.eq.f32.partialorder %v559, 8.507059e+37
    %v561 = vand.u32 %v549, 2147483648
    %v562 = vor.u32 1.1754944e-38, %v561
    %v563 = vsel %vm560, %v562, %v558
    %v564 = vmul.f32 1.0, %v563
    %v565 = vtanh.pop %v545
    %v566 = vmul.f32 %v564, %v511
    %568 = vrot.lane.b32.xlu0 %v565, 88
    %v569 = vpop.permute.xlu0 %568
    %v571 = vmul.f32 %v564, %v569
    %573 = vrot.lane.b32.xlu0 %v571, 20
    %v574 = vpop.permute.xlu0 %573
    %v576 = vadd.f32 %v566, %v574
    %v577 = vtanh.pop %v576
    %579 = vrot.lane.b32.xlu0 %v577, 40
    %v580 = vpop.permute.xlu0 %579
    %v582 = vmul.f32 %v564, %v580
    %584 = vrot.lane.b32.xlu0 %v582, 68
    %v585 = vpop.permute.xlu0 %584
    %587 = vst.msk [vmem:[#allocation3 + $0x1] sm:$0x1] %vm522, %v585
    %v588 = vld [vmem:[#allocation2 + $0x2] sm:$0x1]
    %v589 = vpack.c.bf16 %v582, %v582
    %591 = vrot.lane.b32.xlu0 %v589, 68
    %v592 = vpop.permute.xlu0 %591
    %v594 = vsel %vm459, %v592, 0
    %596 = vmatpush.bf16.msra.mxu0 0
    %597 = vmatpush.bf16.msra.mxu0 0
    %598 = vmatpush.bf16.msra.mxu0 0
    %599 = vmatpush.bf16.msra.mxu0 0
    %600 = vmatpush.bf16.msra.mxu0 0
    %601 = vmatpush.bf16.msra.mxu0 0
    %602 = vmatpush.bf16.msra.mxu0 %v465
    %603 = vmatpush.bf16.msra.mxu0 %v456
    %604 = vmatmul.bf16.gmra.mxu0 %v594
    %v605 = vpop.f32.mrf.mxu0
    %v606 = vadd.f32 0.0, %v605
    %v607 = vpop.f32.mrf.mxu0
    %608 = vdwg.mxu0
    %v609 = vadd.f32 %v588, %v606
    %v610 = vxor.u32 %v609, 2147483648
    %v611 = vmul.f32 %v610, 1.442695
    %v612 = vpow.pop %v611
    %v613 = vadd.f32 %v612, 1.0
    %v614 = vrcp.pop %v613
    %v615 = vmul.f32 %v613, %v614
    %v616 = vsub.f32 1.0, %v615
    %v617 = vmul.f32 %v614, %v616
    %v618 = vadd.f32 %v614, %v617
    %vm619 = vweird.f32 %v613
    %vm620 = vweird.f32 %v614
    %vm621 = vmor %vm619, %vm620
    %v622 = vsel %vm621, %v614, %v618
    %v623 = vand.u32 2147483647, %v613
    %vm624 = vcmp.eq.f32.partialorder %v623, 8.507059e+37
    %v625 = vand.u32 %v613, 2147483648
    %v626 = vor.u32 1.1754944e-38, %v625
    %v627 = vsel %vm624, %v626, %v622
    %v628 = vmul.f32 1.0, %v627
    %v629 = vtanh.pop %v609
    %v630 = vmul.f32 %v628, %v576
    %632 = vrot.lane.b32.xlu0 %v629, 88
    %v633 = vpop.permute.xlu0 %632
    %v635 = vmul.f32 %v628, %v633
    %637 = vrot.lane.b32.xlu0 %v635, 20
    %v638 = vpop.permute.xlu0 %637
    %v640 = vadd.f32 %v630, %v638
    %v641 = vtanh.pop %v640
    %643 = vrot.lane.b32.xlu0 %v641, 40
    %v644 = vpop.permute.xlu0 %643
    %v646 = vmul.f32 %v628, %v644
    %648 = vrot.lane.b32.xlu0 %v646, 68
    %v649 = vpop.permute.xlu0 %648
    %651 = vst.msk [vmem:[#allocation3 + $0x2] sm:$0x1] %vm522, %v649
    %v652 = vld [vmem:[#allocation2 + $0x3] sm:$0x1]
    %v653 = vpack.c.bf16 %v646, %v646
    %655 = vrot.lane.b32.xlu0 %v653, 68
    %v656 = vpop.permute.xlu0 %655
    %v658 = vsel %vm459, %v656, 0
    %660 = vmatpush.bf16.msra.mxu0 0
    %661 = vmatpush.bf16.msra.mxu0 0
    %662 = vmatpush.bf16.msra.mxu0 0
    %663 = vmatpush.bf16.msra.mxu0 0
    %664 = vmatpush.bf16.msra.mxu0 0
    %665 = vmatpush.bf16.msra.mxu0 0
    %666 = vmatpush.bf16.msra.mxu0 %v465
    %667 = vmatpush.bf16.msra.mxu0 %v456
    %668 = vmatmul.bf16.gmra.mxu0 %v658
    %v669 = vpop.f32.mrf.mxu0
    %v670 = vadd.f32 0.0, %v669
    %v671 = vpop.f32.mrf.mxu0
    %672 = vdwg.mxu0
    %v673 = vadd.f32 %v652, %v670
    %v674 = vxor.u32 %v673, 2147483648
    %v675 = vmul.f32 %v674, 1.442695
    %v676 = vpow.pop %v675
    %v677 = vadd.f32 %v676, 1.0
    %v678 = vrcp.pop %v677
    %v679 = vmul.f32 %v677, %v678
    %v680 = vsub.f32 1.0, %v679
    %v681 = vmul.f32 %v678, %v680
    %v682 = vadd.f32 %v678, %v681
    %vm683 = vweird.f32 %v677
    %vm684 = vweird.f32 %v678
    %vm685 = vmor %vm683, %vm684
    %v686 = vsel %vm685, %v678, %v682
    %v687 = vand.u32 2147483647, %v677
    %vm688 = vcmp.eq.f32.partialorder %v687, 8.507059e+37
    %v689 = vand.u32 %v677, 2147483648
    %v690 = vor.u32 1.1754944e-38, %v689
    %v691 = vsel %vm688, %v690, %v686
    %v692 = vmul.f32 1.0, %v691
    %v693 = vtanh.pop %v673
    %v694 = vmul.f32 %v692, %v640
    %696 = vrot.lane.b32.xlu0 %v693, 88
    %v697 = vpop.permute.xlu0 %696
    %v699 = vmul.f32 %v692, %v697
    %701 = vrot.lane.b32.xlu0 %v699, 20
    %v702 = vpop.permute.xlu0 %701
    %v704 = vadd.f32 %v694, %v702
    %v705 = vtanh.pop %v704
    %707 = vrot.lane.b32.xlu0 %v705, 40
    %v708 = vpop.permute.xlu0 %707
    %v710 = vmul.f32 %v692, %v708
    %712 = vrot.lane.b32.xlu0 %v710, 68
    %v713 = vpop.permute.xlu0 %712
    %715 = vst.msk [vmem:[#allocation3 + $0x3] sm:$0x1] %vm522, %v713
    %v716 = vld [vmem:[#allocation2 + $0x4] sm:$0x1]
    %v717 = vpack.c.bf16 %v710, %v710
    %719 = vrot.lane.b32.xlu0 %v717, 68
    %v720 = vpop.permute.xlu0 %719
    %v722 = vsel %vm459, %v720, 0
    %724 = vmatpush.bf16.msra.mxu0 0
    %725 = vmatpush.bf16.msra.mxu0 0
    %726 = vmatpush.bf16.msra.mxu0 0
    %727 = vmatpush.bf16.msra.mxu0 0
    %728 = vmatpush.bf16.msra.mxu0 0
    %729 = vmatpush.bf16.msra.mxu0 0
    %730 = vmatpush.bf16.msra.mxu0 %v465
    %731 = vmatpush.bf16.msra.mxu0 %v456
    %732 = vmatmul.bf16.gmra.mxu0 %v722
    %v733 = vpop.f32.mrf.mxu0
    %v734 = vadd.f32 0.0, %v733
    %v735 = vpop.f32.mrf.mxu0
    %736 = vdwg.mxu0
    %v737 = vadd.f32 %v716, %v734
    %v738 = vxor.u32 %v737, 2147483648
    %v739 = vmul.f32 %v738, 1.442695
    %v740 = vpow.pop %v739
    %v741 = vadd.f32 %v740, 1.0
    %v742 = vrcp.pop %v741
    %v743 = vmul.f32 %v741, %v742
    %v744 = vsub.f32 1.0, %v743
    %v745 = vmul.f32 %v742, %v744
    %v746 = vadd.f32 %v742, %v745
    %vm747 = vweird.f32 %v741
    %vm748 = vweird.f32 %v742
    %vm749 = vmor %vm747, %vm748
    %v750 = vsel %vm749, %v742, %v746
    %v751 = vand.u32 2147483647, %v741
    %vm752 = vcmp.eq.f32.partialorder %v751, 8.507059e+37
    %v753 = vand.u32 %v741, 2147483648
    %v754 = vor.u32 1.1754944e-38, %v753
    %v755 = vsel %vm752, %v754, %v750
    %v756 = vmul.f32 1.0, %v755
    %v757 = vtanh.pop %v737
    %v758 = vmul.f32 %v756, %v704
    %760 = vrot.lane.b32.xlu0 %v757, 88
    %v761 = vpop.permute.xlu0 %760
    %v763 = vmul.f32 %v756, %v761
    %765 = vrot.lane.b32.xlu0 %v763, 20
    %v766 = vpop.permute.xlu0 %765
    %v768 = vadd.f32 %v758, %v766
    %v769 = vtanh.pop %v768
    %771 = vrot.lane.b32.xlu0 %v769, 40
    %v772 = vpop.permute.xlu0 %771
    %v774 = vmul.f32 %v756, %v772
    %776 = vrot.lane.b32.xlu0 %v774, 68
    %v777 = vpop.permute.xlu0 %776
    %779 = vst.msk [vmem:[#allocation3 + $0x4] sm:$0x1] %vm522, %v777
    %v780 = vld [vmem:[#allocation2 + $0x5] sm:$0x1]
    %v781 = vpack.c.bf16 %v774, %v774
    %783 = vrot.lane.b32.xlu0 %v781, 68
    %v784 = vpop.permute.xlu0 %783
    %v786 = vsel %vm459, %v784, 0
    %788 = vmatpush.bf16.msra.mxu0 0
    %789 = vmatpush.bf16.msra.mxu0 0
    %790 = vmatpush.bf16.msra.mxu0 0
    %791 = vmatpush.bf16.msra.mxu0 0
    %792 = vmatpush.bf16.msra.mxu0 0
    %793 = vmatpush.bf16.msra.mxu0 0
    %794 = vmatpush.bf16.msra.mxu0 %v465
    %795 = vmatpush.bf16.msra.mxu0 %v456
    %796 = vmatmul.bf16.gmra.mxu0 %v786
    %v797 = vpop.f32.mrf.mxu0
    %v798 = vadd.f32 0.0, %v797
    %v799 = vpop.f32.mrf.mxu0
    %800 = vdwg.mxu0
    %v801 = vadd.f32 %v780, %v798
    %v802 = vxor.u32 %v801, 2147483648
    %v803 = vmul.f32 %v802, 1.442695
    %v804 = vpow.pop %v803
    %v805 = vadd.f32 %v804, 1.0
    %v806 = vrcp.pop %v805
    %v807 = vmul.f32 %v805, %v806
    %v808 = vsub.f32 1.0, %v807
    %v809 = vmul.f32 %v806, %v808
    %v810 = vadd.f32 %v806, %v809
    %vm811 = vweird.f32 %v805
    %vm812 = vweird.f32 %v806
    %vm813 = vmor %vm811, %vm812
    %v814 = vsel %vm813, %v806, %v810
    %v815 = vand.u32 2147483647, %v805
    %vm816 = vcmp.eq.f32.partialorder %v815, 8.507059e+37
    %v817 = vand.u32 %v805, 2147483648
    %v818 = vor.u32 1.1754944e-38, %v817
    %v819 = vsel %vm816, %v818, %v814
    %v820 = vmul.f32 1.0, %v819
    %v821 = vtanh.pop %v801
    %v822 = vmul.f32 %v820, %v768
    %824 = vrot.lane.b32.xlu0 %v821, 88
    %v825 = vpop.permute.xlu0 %824
    %v827 = vmul.f32 %v820, %v825
    %829 = vrot.lane.b32.xlu0 %v827, 20
    %v830 = vpop.permute.xlu0 %829
    %v832 = vadd.f32 %v822, %v830
    %v833 = vtanh.pop %v832
    %835 = vrot.lane.b32.xlu0 %v833, 40
    %v836 = vpop.permute.xlu0 %835
    %v838 = vmul.f32 %v820, %v836
    %840 = vrot.lane.b32.xlu0 %v838, 68
    %v841 = vpop.permute.xlu0 %840
    %843 = vst.msk [vmem:[#allocation3 + $0x5] sm:$0x1] %vm522, %v841
    %v844 = vld [vmem:[#allocation2 + $0x6] sm:$0x1]
    %v845 = vpack.c.bf16 %v838, %v838
    %847 = vrot.lane.b32.xlu0 %v845, 68
    %v848 = vpop.permute.xlu0 %847
    %v850 = vsel %vm459, %v848, 0
    %852 = vmatpush.bf16.msra.mxu0 0
    %853 = vmatpush.bf16.msra.mxu0 0
    %854 = vmatpush.bf16.msra.mxu0 0
    %855 = vmatpush.bf16.msra.mxu0 0
    %856 = vmatpush.bf16.msra.mxu0 0
    %857 = vmatpush.bf16.msra.mxu0 0
    %858 = vmatpush.bf16.msra.mxu0 %v465
    %859 = vmatpush.bf16.msra.mxu0 %v456
    %860 = vmatmul.bf16.gmra.mxu0 %v850
    %v861 = vpop.f32.mrf.mxu0
    %v862 = vadd.f32 0.0, %v861
    %v863 = vpop.f32.mrf.mxu0
    %864 = vdwg.mxu0
    %v865 = vadd.f32 %v844, %v862
    %v866 = vxor.u32 %v865, 2147483648
    %v867 = vmul.f32 %v866, 1.442695
    %v868 = vpow.pop %v867
    %v869 = vadd.f32 %v868, 1.0
    %v870 = vrcp.pop %v869
    %v871 = vmul.f32 %v869, %v870
    %v872 = vsub.f32 1.0, %v871
    %v873 = vmul.f32 %v870, %v872
    %v874 = vadd.f32 %v870, %v873
    %vm875 = vweird.f32 %v869
    %vm876 = vweird.f32 %v870
    %vm877 = vmor %vm875, %vm876
    %v878 = vsel %vm877, %v870, %v874
    %v879 = vand.u32 2147483647, %v869
    %vm880 = vcmp.eq.f32.partialorder %v879, 8.507059e+37
    %v881 = vand.u32 %v869, 2147483648
    %v882 = vor.u32 1.1754944e-38, %v881
    %v883 = vsel %vm880, %v882, %v878
    %v884 = vmul.f32 1.0, %v883
    %v885 = vtanh.pop %v865
    %v886 = vmul.f32 %v884, %v832
    %888 = vrot.lane.b32.xlu0 %v885, 88
    %v889 = vpop.permute.xlu0 %888
    %v891 = vmul.f32 %v884, %v889
    %893 = vrot.lane.b32.xlu0 %v891, 20
    %v894 = vpop.permute.xlu0 %893
    %v896 = vadd.f32 %v886, %v894
    %v897 = vtanh.pop %v896
    %899 = vrot.lane.b32.xlu0 %v897, 40
    %v900 = vpop.permute.xlu0 %899
    %v902 = vmul.f32 %v884, %v900
    %904 = vrot.lane.b32.xlu0 %v902, 68
    %v905 = vpop.permute.xlu0 %904
    %907 = vst.msk [vmem:[#allocation3 + $0x6] sm:$0x1] %vm522, %v905
    %v908 = vld [vmem:[#allocation2 + $0x7] sm:$0x1]
    %v909 = vpack.c.bf16 %v902, %v902
    %911 = vrot.lane.b32.xlu0 %v909, 68
    %v912 = vpop.permute.xlu0 %911
    %v914 = vsel %vm459, %v912, 0
    %916 = vmatpush.bf16.msra.mxu0 0
    %917 = vmatpush.bf16.msra.mxu0 0
    %918 = vmatpush.bf16.msra.mxu0 0
    %919 = vmatpush.bf16.msra.mxu0 0
    %920 = vmatpush.bf16.msra.mxu0 0
    %921 = vmatpush.bf16.msra.mxu0 0
    %922 = vmatpush.bf16.msra.mxu0 %v465
    %923 = vmatpush.bf16.msra.mxu0 %v456
    %924 = vmatmul.bf16.gmra.mxu0 %v914
    %v925 = vpop.f32.mrf.mxu0
    %v926 = vadd.f32 0.0, %v925
    %v927 = vpop.f32.mrf.mxu0
    %928 = vdwg.mxu0
    %v929 = vadd.f32 %v908, %v926
    %v930 = vxor.u32 %v929, 2147483648
    %v931 = vmul.f32 %v930, 1.442695
    %v932 = vpow.pop %v931
    %v933 = vadd.f32 %v932, 1.0
    %v934 = vrcp.pop %v933
    %v935 = vmul.f32 %v933, %v934
    %v936 = vsub.f32 1.0, %v935
    %v937 = vmul.f32 %v934, %v936
    %v938 = vadd.f32 %v934, %v937
    %vm939 = vweird.f32 %v933
    %vm940 = vweird.f32 %v934
    %vm941 = vmor %vm939, %vm940
    %v942 = vsel %vm941, %v934, %v938
    %v943 = vand.u32 2147483647, %v933
    %vm944 = vcmp.eq.f32.partialorder %v943, 8.507059e+37
    %v945 = vand.u32 %v933, 2147483648
    %v946 = vor.u32 1.1754944e-38, %v945
    %v947 = vsel %vm944, %v946, %v942
    %v948 = vmul.f32 1.0, %v947
    %v949 = vtanh.pop %v929
    %v950 = vmul.f32 %v948, %v896
    %952 = vrot.lane.b32.xlu0 %v949, 88
    %v953 = vpop.permute.xlu0 %952
    %v955 = vmul.f32 %v948, %v953
    %957 = vrot.lane.b32.xlu0 %v955, 20
    %v958 = vpop.permute.xlu0 %957
    %v960 = vadd.f32 %v950, %v958
    %v961 = vtanh.pop %v960
    %963 = vrot.lane.b32.xlu0 %v961, 40
    %v964 = vpop.permute.xlu0 %963
    %v966 = vmul.f32 %v948, %v964
    %968 = vrot.lane.b32.xlu0 %v966, 68
    %v969 = vpop.permute.xlu0 %968
    %971 = vst.msk [vmem:[#allocation3 + $0x7] sm:$0x1] %vm522, %v969
    %v972 = vld [vmem:[#allocation2 + $0x8] sm:$0x1]
    %v973 = vpack.c.bf16 %v966, %v966
    %975 = vrot.lane.b32.xlu0 %v973, 68
    %v976 = vpop.permute.xlu0 %975
    %v978 = vsel %vm459, %v976, 0
    %980 = vmatpush.bf16.msra.mxu0 0
    %981 = vmatpush.bf16.msra.mxu0 0
    %982 = vmatpush.bf16.msra.mxu0 0
    %983 = vmatpush.bf16.msra.mxu0 0
    %984 = vmatpush.bf16.msra.mxu0 0
    %985 = vmatpush.bf16.msra.mxu0 0
    %986 = vmatpush.bf16.msra.mxu0 %v465
    %987 = vmatpush.bf16.msra.mxu0 %v456
    %988 = vmatmul.bf16.gmra.mxu0 %v978
    %v989 = vpop.f32.mrf.mxu0
    %v990 = vadd.f32 0.0, %v989
    %v991 = vpop.f32.mrf.mxu0
    %992 = vdwg.mxu0
    %v993 = vadd.f32 %v972, %v990
    %v994 = vxor.u32 %v993, 2147483648
    %v995 = vmul.f32 %v994, 1.442695
    %v996 = vpow.pop %v995
    %v997 = vadd.f32 %v996, 1.0
    %v998 = vrcp.pop %v997
    %v999 = vmul.f32 %v997, %v998
    %v1000 = vsub.f32 1.0, %v999
    %v1001 = vmul.f32 %v998, %v1000
    %v1002 = vadd.f32 %v998, %v1001
    %vm1003 = vweird.f32 %v997
    %vm1004 = vweird.f32 %v998
    %vm1005 = vmor %vm1003, %vm1004
    %v1006 = vsel %vm1005, %v998, %v1002
    %v1007 = vand.u32 2147483647, %v997
    %vm1008 = vcmp.eq.f32.partialorder %v1007, 8.507059e+37
    %v1009 = vand.u32 %v997, 2147483648
    %v1010 = vor.u32 1.1754944e-38, %v1009
    %v1011 = vsel %vm1008, %v1010, %v1006
    %v1012 = vmul.f32 1.0, %v1011
    %v1013 = vtanh.pop %v993
    %v1014 = vmul.f32 %v1012, %v960
    %1016 = vrot.lane.b32.xlu0 %v1013, 88
    %v1017 = vpop.permute.xlu0 %1016
    %v1019 = vmul.f32 %v1012, %v1017
    %1021 = vrot.lane.b32.xlu0 %v1019, 20
    %v1022 = vpop.permute.xlu0 %1021
    %v1024 = vadd.f32 %v1014, %v1022
    %v1025 = vtanh.pop %v1024
    %1027 = vrot.lane.b32.xlu0 %v1025, 40
    %v1028 = vpop.permute.xlu0 %1027
    %v1030 = vmul.f32 %v1012, %v1028
    %1032 = vrot.lane.b32.xlu0 %v1030, 68
    %v1033 = vpop.permute.xlu0 %1032
    %1035 = vst.msk [vmem:[#allocation3 + $0x8] sm:$0x1] %vm522, %v1033
    %v1036 = vld [vmem:[#allocation2 + $0x9] sm:$0x1]
    %v1037 = vpack.c.bf16 %v1030, %v1030
    %1039 = vrot.lane.b32.xlu0 %v1037, 68
    %v1040 = vpop.permute.xlu0 %1039
    %v1042 = vsel %vm459, %v1040, 0
    %1044 = vmatpush.bf16.msra.mxu0 0
    %1045 = vmatpush.bf16.msra.mxu0 0
    %1046 = vmatpush.bf16.msra.mxu0 0
    %1047 = vmatpush.bf16.msra.mxu0 0
    %1048 = vmatpush.bf16.msra.mxu0 0
    %1049 = vmatpush.bf16.msra.mxu0 0
    %1050 = vmatpush.bf16.msra.mxu0 %v465
    %1051 = vmatpush.bf16.msra.mxu0 %v456
    %1052 = vmatmul.bf16.gmra.mxu0 %v1042
    %v1053 = vpop.f32.mrf.mxu0
    %v1054 = vadd.f32 0.0, %v1053
    %v1055 = vpop.f32.mrf.mxu0
    %1056 = vdwg.mxu0
    %v1057 = vadd.f32 %v1036, %v1054
    %v1058 = vxor.u32 %v1057, 2147483648
    %v1059 = vmul.f32 %v1058, 1.442695
    %v1060 = vpow.pop %v1059
    %v1061 = vadd.f32 %v1060, 1.0
    %v1062 = vrcp.pop %v1061
    %v1063 = vmul.f32 %v1061, %v1062
    %v1064 = vsub.f32 1.0, %v1063
    %v1065 = vmul.f32 %v1062, %v1064
    %v1066 = vadd.f32 %v1062, %v1065
    %vm1067 = vweird.f32 %v1061
    %vm1068 = vweird.f32 %v1062
    %vm1069 = vmor %vm1067, %vm1068
    %v1070 = vsel %vm1069, %v1062, %v1066
    %v1071 = vand.u32 2147483647, %v1061
    %vm1072 = vcmp.eq.f32.partialorder %v1071, 8.507059e+37
    %v1073 = vand.u32 %v1061, 2147483648
    %v1074 = vor.u32 1.1754944e-38, %v1073
    %v1075 = vsel %vm1072, %v1074, %v1070
    %v1076 = vmul.f32 1.0, %v1075
    %v1077 = vtanh.pop %v1057
    %v1078 = vmul.f32 %v1076, %v1024
    %1080 = vrot.lane.b32.xlu0 %v1077, 88
    %v1081 = vpop.permute.xlu0 %1080
    %v1083 = vmul.f32 %v1076, %v1081
    %1085 = vrot.lane.b32.xlu0 %v1083, 20
    %v1086 = vpop.permute.xlu0 %1085
    %v1088 = vadd.f32 %v1078, %v1086
    %v1089 = vtanh.pop %v1088
    %1091 = vrot.lane.b32.xlu0 %v1089, 40
    %v1092 = vpop.permute.xlu0 %1091
    %v1094 = vmul.f32 %v1076, %v1092
    %1096 = vrot.lane.b32.xlu0 %v1094, 68
    %v1097 = vpop.permute.xlu0 %1096
    %1099 = vst.msk [vmem:[#allocation3 + $0x9] sm:$0x1] %vm522, %v1097
    %v1100 = vld [vmem:[#allocation2 + $0xa] sm:$0x1]
    %v1101 = vpack.c.bf16 %v1094, %v1094
    %1103 = vrot.lane.b32.xlu0 %v1101, 68
    %v1104 = vpop.permute.xlu0 %1103
    %v1106 = vsel %vm459, %v1104, 0
    %1108 = vmatpush.bf16.msra.mxu0 0
    %1109 = vmatpush.bf16.msra.mxu0 0
    %1110 = vmatpush.bf16.msra.mxu0 0
    %1111 = vmatpush.bf16.msra.mxu0 0
    %1112 = vmatpush.bf16.msra.mxu0 0
    %1113 = vmatpush.bf16.msra.mxu0 0
    %1114 = vmatpush.bf16.msra.mxu0 %v465
    %1115 = vmatpush.bf16.msra.mxu0 %v456
    %1116 = vmatmul.bf16.gmra.mxu0 %v1106
    %v1117 = vpop.f32.mrf.mxu0
    %v1118 = vadd.f32 0.0, %v1117
    %v1119 = vpop.f32.mrf.mxu0
    %1120 = vdwg.mxu0
    %v1121 = vadd.f32 %v1100, %v1118
    %v1122 = vxor.u32 %v1121, 2147483648
    %v1123 = vmul.f32 %v1122, 1.442695
    %v1124 = vpow.pop %v1123
    %v1125 = vadd.f32 %v1124, 1.0
    %v1126 = vrcp.pop %v1125
    %v1127 = vmul.f32 %v1125, %v1126
    %v1128 = vsub.f32 1.0, %v1127
    %v1129 = vmul.f32 %v1126, %v1128
    %v1130 = vadd.f32 %v1126, %v1129
    %vm1131 = vweird.f32 %v1125
    %vm1132 = vweird.f32 %v1126
    %vm1133 = vmor %vm1131, %vm1132
    %v1134 = vsel %vm1133, %v1126, %v1130
    %v1135 = vand.u32 2147483647, %v1125
    %vm1136 = vcmp.eq.f32.partialorder %v1135, 8.507059e+37
    %v1137 = vand.u32 %v1125, 2147483648
    %v1138 = vor.u32 1.1754944e-38, %v1137
    %v1139 = vsel %vm1136, %v1138, %v1134
    %v1140 = vmul.f32 1.0, %v1139
    %v1141 = vtanh.pop %v1121
    %v1142 = vmul.f32 %v1140, %v1088
    %1144 = vrot.lane.b32.xlu0 %v1141, 88
    %v1145 = vpop.permute.xlu0 %1144
    %v1147 = vmul.f32 %v1140, %v1145
    %1149 = vrot.lane.b32.xlu0 %v1147, 20
    %v1150 = vpop.permute.xlu0 %1149
    %v1152 = vadd.f32 %v1142, %v1150
    %v1153 = vtanh.pop %v1152
    %1155 = vrot.lane.b32.xlu0 %v1153, 40
    %v1156 = vpop.permute.xlu0 %1155
    %v1158 = vmul.f32 %v1140, %v1156
    %1160 = vrot.lane.b32.xlu0 %v1158, 68
    %v1161 = vpop.permute.xlu0 %1160
    %1163 = vst.msk [vmem:[#allocation3 + $0xa] sm:$0x1] %vm522, %v1161
    %v1164 = vld [vmem:[#allocation2 + $0xb] sm:$0x1]
    %v1165 = vpack.c.bf16 %v1158, %v1158
    %1167 = vrot.lane.b32.xlu0 %v1165, 68
    %v1168 = vpop.permute.xlu0 %1167
    %v1170 = vsel %vm459, %v1168, 0
    %1172 = vmatpush.bf16.msra.mxu0 0
    %1173 = vmatpush.bf16.msra.mxu0 0
    %1174 = vmatpush.bf16.msra.mxu0 0
    %1175 = vmatpush.bf16.msra.mxu0 0
    %1176 = vmatpush.bf16.msra.mxu0 0
    %1177 = vmatpush.bf16.msra.mxu0 0
    %1178 = vmatpush.bf16.msra.mxu0 %v465
    %1179 = vmatpush.bf16.msra.mxu0 %v456
    %1180 = vmatmul.bf16.gmra.mxu0 %v1170
    %v1181 = vpop.f32.mrf.mxu0
    %v1182 = vadd.f32 0.0, %v1181
    %v1183 = vpop.f32.mrf.mxu0
    %1184 = vdwg.mxu0
    %v1185 = vadd.f32 %v1164, %v1182
    %v1186 = vxor.u32 %v1185, 2147483648
    %v1187 = vmul.f32 %v1186, 1.442695
    %v1188 = vpow.pop %v1187
    %v1189 = vadd.f32 %v1188, 1.0
    %v1190 = vrcp.pop %v1189
    %v1191 = vmul.f32 %v1189, %v1190
    %v1192 = vsub.f32 1.0, %v1191
    %v1193 = vmul.f32 %v1190, %v1192
    %v1194 = vadd.f32 %v1190, %v1193
    %vm1195 = vweird.f32 %v1189
    %vm1196 = vweird.f32 %v1190
    %vm1197 = vmor %vm1195, %vm1196
    %v1198 = vsel %vm1197, %v1190, %v1194
    %v1199 = vand.u32 2147483647, %v1189
    %vm1200 = vcmp.eq.f32.partialorder %v1199, 8.507059e+37
    %v1201 = vand.u32 %v1189, 2147483648
    %v1202 = vor.u32 1.1754944e-38, %v1201
    %v1203 = vsel %vm1200, %v1202, %v1198
    %v1204 = vmul.f32 1.0, %v1203
    %v1205 = vtanh.pop %v1185
    %v1206 = vmul.f32 %v1204, %v1152
    %1208 = vrot.lane.b32.xlu0 %v1205, 88
    %v1209 = vpop.permute.xlu0 %1208
    %v1211 = vmul.f32 %v1204, %v1209
    %1213 = vrot.lane.b32.xlu0 %v1211, 20
    %v1214 = vpop.permute.xlu0 %1213
    %v1216 = vadd.f32 %v1206, %v1214
    %v1217 = vtanh.pop %v1216
    %1219 = vrot.lane.b32.xlu0 %v1217, 40
    %v1220 = vpop.permute.xlu0 %1219
    %v1222 = vmul.f32 %v1204, %v1220
    %1224 = vrot.lane.b32.xlu0 %v1222, 68
    %v1225 = vpop.permute.xlu0 %1224
    %1227 = vst.msk [vmem:[#allocation3 + $0xb] sm:$0x1] %vm522, %v1225
    %v1228 = vld [vmem:[#allocation2 + $0xc] sm:$0x1]
    %v1229 = vpack.c.bf16 %v1222, %v1222
    %1231 = vrot.lane.b32.xlu0 %v1229, 68
    %v1232 = vpop.permute.xlu0 %1231
    %v1234 = vsel %vm459, %v1232, 0
    %1236 = vmatpush.bf16.msra.mxu0 0
    %1237 = vmatpush.bf16.msra.mxu0 0
    %1238 = vmatpush.bf16.msra.mxu0 0
    %1239 = vmatpush.bf16.msra.mxu0 0
    %1240 = vmatpush.bf16.msra.mxu0 0
    %1241 = vmatpush.bf16.msra.mxu0 0
    %1242 = vmatpush.bf16.msra.mxu0 %v465
    %1243 = vmatpush.bf16.msra.mxu0 %v456
    %1244 = vmatmul.bf16.gmra.mxu0 %v1234
    %v1245 = vpop.f32.mrf.mxu0
    %v1246 = vadd.f32 0.0, %v1245
    %v1247 = vpop.f32.mrf.mxu0
    %1248 = vdwg.mxu0
    %v1249 = vadd.f32 %v1228, %v1246
    %v1250 = vxor.u32 %v1249, 2147483648
    %v1251 = vmul.f32 %v1250, 1.442695
    %v1252 = vpow.pop %v1251
    %v1253 = vadd.f32 %v1252, 1.0
    %v1254 = vrcp.pop %v1253
    %v1255 = vmul.f32 %v1253, %v1254
    %v1256 = vsub.f32 1.0, %v1255
    %v1257 = vmul.f32 %v1254, %v1256
    %v1258 = vadd.f32 %v1254, %v1257
    %vm1259 = vweird.f32 %v1253
    %vm1260 = vweird.f32 %v1254
    %vm1261 = vmor %vm1259, %vm1260
    %v1262 = vsel %vm1261, %v1254, %v1258
    %v1263 = vand.u32 2147483647, %v1253
    %vm1264 = vcmp.eq.f32.partialorder %v1263, 8.507059e+37
    %v1265 = vand.u32 %v1253, 2147483648
    %v1266 = vor.u32 1.1754944e-38, %v1265
    %v1267 = vsel %vm1264, %v1266, %v1262
    %v1268 = vmul.f32 1.0, %v1267
    %v1269 = vtanh.pop %v1249
    %v1270 = vmul.f32 %v1268, %v1216
    %1272 = vrot.lane.b32.xlu0 %v1269, 88
    %v1273 = vpop.permute.xlu0 %1272
    %v1275 = vmul.f32 %v1268, %v1273
    %1277 = vrot.lane.b32.xlu0 %v1275, 20
    %v1278 = vpop.permute.xlu0 %1277
    %v1280 = vadd.f32 %v1270, %v1278
    %v1281 = vtanh.pop %v1280
    %1283 = vrot.lane.b32.xlu0 %v1281, 40
    %v1284 = vpop.permute.xlu0 %1283
    %v1286 = vmul.f32 %v1268, %v1284
    %1288 = vrot.lane.b32.xlu0 %v1286, 68
    %v1289 = vpop.permute.xlu0 %1288
    %1291 = vst.msk [vmem:[#allocation3 + $0xc] sm:$0x1] %vm522, %v1289
    %v1292 = vld [vmem:[#allocation2 + $0xd] sm:$0x1]
    %v1293 = vpack.c.bf16 %v1286, %v1286
    %1295 = vrot.lane.b32.xlu0 %v1293, 68
    %v1296 = vpop.permute.xlu0 %1295
    %v1298 = vsel %vm459, %v1296, 0
    %1300 = vmatpush.bf16.msra.mxu0 0
    %1301 = vmatpush.bf16.msra.mxu0 0
    %1302 = vmatpush.bf16.msra.mxu0 0
    %1303 = vmatpush.bf16.msra.mxu0 0
    %1304 = vmatpush.bf16.msra.mxu0 0
    %1305 = vmatpush.bf16.msra.mxu0 0
    %1306 = vmatpush.bf16.msra.mxu0 %v465
    %1307 = vmatpush.bf16.msra.mxu0 %v456
    %1308 = vmatmul.bf16.gmra.mxu0 %v1298
    %v1309 = vpop.f32.mrf.mxu0
    %v1310 = vadd.f32 0.0, %v1309
    %v1311 = vpop.f32.mrf.mxu0
    %1312 = vdwg.mxu0
    %v1313 = vadd.f32 %v1292, %v1310
    %v1314 = vxor.u32 %v1313, 2147483648
    %v1315 = vmul.f32 %v1314, 1.442695
    %v1316 = vpow.pop %v1315
    %v1317 = vadd.f32 %v1316, 1.0
    %v1318 = vrcp.pop %v1317
    %v1319 = vmul.f32 %v1317, %v1318
    %v1320 = vsub.f32 1.0, %v1319
    %v1321 = vmul.f32 %v1318, %v1320
    %v1322 = vadd.f32 %v1318, %v1321
    %vm1323 = vweird.f32 %v1317
    %vm1324 = vweird.f32 %v1318
    %vm1325 = vmor %vm1323, %vm1324
    %v1326 = vsel %vm1325, %v1318, %v1322
    %v1327 = vand.u32 2147483647, %v1317
    %vm1328 = vcmp.eq.f32.partialorder %v1327, 8.507059e+37
    %v1329 = vand.u32 %v1317, 2147483648
    %v1330 = vor.u32 1.1754944e-38, %v1329
    %v1331 = vsel %vm1328, %v1330, %v1326
    %v1332 = vmul.f32 1.0, %v1331
    %v1333 = vtanh.pop %v1313
    %v1334 = vmul.f32 %v1332, %v1280
    %1336 = vrot.lane.b32.xlu0 %v1333, 88
    %v1337 = vpop.permute.xlu0 %1336
    %v1339 = vmul.f32 %v1332, %v1337
    %1341 = vrot.lane.b32.xlu0 %v1339, 20
    %v1342 = vpop.permute.xlu0 %1341
    %v1344 = vadd.f32 %v1334, %v1342
    %v1345 = vtanh.pop %v1344
    %1347 = vrot.lane.b32.xlu0 %v1345, 40
    %v1348 = vpop.permute.xlu0 %1347
    %v1350 = vmul.f32 %v1332, %v1348
    %1352 = vrot.lane.b32.xlu0 %v1350, 68
    %v1353 = vpop.permute.xlu0 %1352
    %1355 = vst.msk [vmem:[#allocation3 + $0xd] sm:$0x1] %vm522, %v1353
    %v1356 = vld [vmem:[#allocation2 + $0xe] sm:$0x1]
    %v1357 = vpack.c.bf16 %v1350, %v1350
    %1359 = vrot.lane.b32.xlu0 %v1357, 68
    %v1360 = vpop.permute.xlu0 %1359
    %v1362 = vsel %vm459, %v1360, 0
    %1364 = vmatpush.bf16.msra.mxu0 0
    %1365 = vmatpush.bf16.msra.mxu0 0
    %1366 = vmatpush.bf16.msra.mxu0 0
    %1367 = vmatpush.bf16.msra.mxu0 0
    %1368 = vmatpush.bf16.msra.mxu0 0
    %1369 = vmatpush.bf16.msra.mxu0 0
    %1370 = vmatpush.bf16.msra.mxu0 %v465
    %1371 = vmatpush.bf16.msra.mxu0 %v456
    %1372 = vmatmul.bf16.gmra.mxu0 %v1362
    %v1373 = vpop.f32.mrf.mxu0
    %v1374 = vadd.f32 0.0, %v1373
    %v1375 = vpop.f32.mrf.mxu0
    %1376 = vdwg.mxu0
    %v1377 = vadd.f32 %v1356, %v1374
    %v1378 = vxor.u32 %v1377, 2147483648
    %v1379 = vmul.f32 %v1378, 1.442695
    %v1380 = vpow.pop %v1379
    %v1381 = vadd.f32 %v1380, 1.0
    %v1382 = vrcp.pop %v1381
    %v1383 = vmul.f32 %v1381, %v1382
    %v1384 = vsub.f32 1.0, %v1383
    %v1385 = vmul.f32 %v1382, %v1384
    %v1386 = vadd.f32 %v1382, %v1385
    %vm1387 = vweird.f32 %v1381
    %vm1388 = vweird.f32 %v1382
    %vm1389 = vmor %vm1387, %vm1388
    %v1390 = vsel %vm1389, %v1382, %v1386
    %v1391 = vand.u32 2147483647, %v1381
    %vm1392 = vcmp.eq.f32.partialorder %v1391, 8.507059e+37
    %v1393 = vand.u32 %v1381, 2147483648
    %v1394 = vor.u32 1.1754944e-38, %v1393
    %v1395 = vsel %vm1392, %v1394, %v1390
    %v1396 = vmul.f32 1.0, %v1395
    %v1397 = vtanh.pop %v1377
    %v1398 = vmul.f32 %v1396, %v1344
    %1400 = vrot.lane.b32.xlu0 %v1397, 88
    %v1401 = vpop.permute.xlu0 %1400
    %v1403 = vmul.f32 %v1396, %v1401
    %1405 = vrot.lane.b32.xlu0 %v1403, 20
    %v1406 = vpop.permute.xlu0 %1405
    %v1408 = vadd.f32 %v1398, %v1406
    %v1409 = vtanh.pop %v1408
    %1411 = vrot.lane.b32.xlu0 %v1409, 40
    %v1412 = vpop.permute.xlu0 %1411
    %v1414 = vmul.f32 %v1396, %v1412
    %1416 = vrot.lane.b32.xlu0 %v1414, 68
    %v1417 = vpop.permute.xlu0 %1416
    %1419 = vst.msk [vmem:[#allocation3 + $0xe] sm:$0x1] %vm522, %v1417
    %v1420 = vld [vmem:[#allocation2 + $0xf] sm:$0x1]
    %v1421 = vpack.c.bf16 %v1414, %v1414
    %1423 = vrot.lane.b32.xlu0 %v1421, 68
    %v1424 = vpop.permute.xlu0 %1423
    %v1426 = vsel %vm459, %v1424, 0
    %1428 = vmatpush.bf16.msra.mxu0 0
    %1429 = vmatpush.bf16.msra.mxu0 0
    %1430 = vmatpush.bf16.msra.mxu0 0
    %1431 = vmatpush.bf16.msra.mxu0 0
    %1432 = vmatpush.bf16.msra.mxu0 0
    %1433 = vmatpush.bf16.msra.mxu0 0
    %1434 = vmatpush.bf16.msra.mxu0 %v465
    %1435 = vmatpush.bf16.msra.mxu0 %v456
    %1436 = vmatmul.bf16.gmra.mxu0 %v1426
    %v1437 = vpop.f32.mrf.mxu0
    %v1438 = vadd.f32 0.0, %v1437
    %v1439 = vpop.f32.mrf.mxu0
    %1440 = vdwg.mxu0
    %v1441 = vadd.f32 %v1420, %v1438
    %v1442 = vxor.u32 %v1441, 2147483648
    %v1443 = vmul.f32 %v1442, 1.442695
    %v1444 = vpow.pop %v1443
    %v1445 = vadd.f32 %v1444, 1.0
    %v1446 = vrcp.pop %v1445
    %v1447 = vmul.f32 %v1445, %v1446
    %v1448 = vsub.f32 1.0, %v1447
    %v1449 = vmul.f32 %v1446, %v1448
    %v1450 = vadd.f32 %v1446, %v1449
    %vm1451 = vweird.f32 %v1445
    %vm1452 = vweird.f32 %v1446
    %vm1453 = vmor %vm1451, %vm1452
    %v1454 = vsel %vm1453, %v1446, %v1450
    %v1455 = vand.u32 2147483647, %v1445
    %vm1456 = vcmp.eq.f32.partialorder %v1455, 8.507059e+37
    %v1457 = vand.u32 %v1445, 2147483648
    %v1458 = vor.u32 1.1754944e-38, %v1457
    %v1459 = vsel %vm1456, %v1458, %v1454
    %v1460 = vmul.f32 1.0, %v1459
    %v1461 = vtanh.pop %v1441
    %v1462 = vmul.f32 %v1460, %v1408
    %1464 = vrot.lane.b32.xlu0 %v1461, 88
    %v1465 = vpop.permute.xlu0 %1464
    %v1467 = vmul.f32 %v1460, %v1465
    %1469 = vrot.lane.b32.xlu0 %v1467, 20
    %v1470 = vpop.permute.xlu0 %1469
    %v1472 = vadd.f32 %v1462, %v1470
    %v1473 = vtanh.pop %v1472
    %1475 = vrot.lane.b32.xlu0 %v1473, 40
    %v1476 = vpop.permute.xlu0 %1475
    %v1478 = vmul.f32 %v1460, %v1476
    %1480 = vrot.lane.b32.xlu0 %v1478, 68
    %v1481 = vpop.permute.xlu0 %1480
    %1483 = vst.msk [vmem:[#allocation3 + $0xf] sm:$0x1] %vm522, %v1481
    %v1484 = vld [vmem:[#allocation2 + $0x10] sm:$0x1]
    %v1485 = vpack.c.bf16 %v1478, %v1478
    %1487 = vrot.lane.b32.xlu0 %v1485, 68
    %v1488 = vpop.permute.xlu0 %1487
    %v1490 = vsel %vm459, %v1488, 0
    %1492 = vmatpush.bf16.msra.mxu0 0
    %1493 = vmatpush.bf16.msra.mxu0 0
    %1494 = vmatpush.bf16.msra.mxu0 0
    %1495 = vmatpush.bf16.msra.mxu0 0
    %1496 = vmatpush.bf16.msra.mxu0 0
    %1497 = vmatpush.bf16.msra.mxu0 0
    %1498 = vmatpush.bf16.msra.mxu0 %v465
    %1499 = vmatpush.bf16.msra.mxu0 %v456
    %1500 = vmatmul.bf16.gmra.mxu0 %v1490
    %v1501 = vpop.f32.mrf.mxu0
    %v1502 = vadd.f32 0.0, %v1501
    %v1503 = vpop.f32.mrf.mxu0
    %1504 = vdwg.mxu0
    %v1505 = vadd.f32 %v1484, %v1502
    %v1506 = vxor.u32 %v1505, 2147483648
    %v1507 = vmul.f32 %v1506, 1.442695
    %v1508 = vpow.pop %v1507
    %v1509 = vadd.f32 %v1508, 1.0
    %v1510 = vrcp.pop %v1509
    %v1511 = vmul.f32 %v1509, %v1510
    %v1512 = vsub.f32 1.0, %v1511
    %v1513 = vmul.f32 %v1510, %v1512
    %v1514 = vadd.f32 %v1510, %v1513
    %vm1515 = vweird.f32 %v1509
    %vm1516 = vweird.f32 %v1510
    %vm1517 = vmor %vm1515, %vm1516
    %v1518 = vsel %vm1517, %v1510, %v1514
    %v1519 = vand.u32 2147483647, %v1509
    %vm1520 = vcmp.eq.f32.partialorder %v1519, 8.507059e+37
    %v1521 = vand.u32 %v1509, 2147483648
    %v1522 = vor.u32 1.1754944e-38, %v1521
    %v1523 = vsel %vm1520, %v1522, %v1518
    %v1524 = vmul.f32 1.0, %v1523
    %v1525 = vtanh.pop %v1505
    %v1526 = vmul.f32 %v1524, %v1472
    %1528 = vrot.lane.b32.xlu0 %v1525, 88
    %v1529 = vpop.permute.xlu0 %1528
    %v1531 = vmul.f32 %v1524, %v1529
    %1533 = vrot.lane.b32.xlu0 %v1531, 20
    %v1534 = vpop.permute.xlu0 %1533
    %v1536 = vadd.f32 %v1526, %v1534
    %v1537 = vtanh.pop %v1536
    %1539 = vrot.lane.b32.xlu0 %v1537, 40
    %v1540 = vpop.permute.xlu0 %1539
    %v1542 = vmul.f32 %v1524, %v1540
    %1544 = vrot.lane.b32.xlu0 %v1542, 68
    %v1545 = vpop.permute.xlu0 %1544
    %1547 = vst.msk [vmem:[#allocation3 + $0x10] sm:$0x1] %vm522, %v1545
    %v1548 = vld [vmem:[#allocation2 + $0x11] sm:$0x1]
    %v1549 = vpack.c.bf16 %v1542, %v1542
    %1551 = vrot.lane.b32.xlu0 %v1549, 68
    %v1552 = vpop.permute.xlu0 %1551
    %v1554 = vsel %vm459, %v1552, 0
    %1556 = vmatpush.bf16.msra.mxu0 0
    %1557 = vmatpush.bf16.msra.mxu0 0
    %1558 = vmatpush.bf16.msra.mxu0 0
    %1559 = vmatpush.bf16.msra.mxu0 0
    %1560 = vmatpush.bf16.msra.mxu0 0
    %1561 = vmatpush.bf16.msra.mxu0 0
    %1562 = vmatpush.bf16.msra.mxu0 %v465
    %1563 = vmatpush.bf16.msra.mxu0 %v456
    %1564 = vmatmul.bf16.gmra.mxu0 %v1554
    %v1565 = vpop.f32.mrf.mxu0
    %v1566 = vadd.f32 0.0, %v1565
    %v1567 = vpop.f32.mrf.mxu0
    %1568 = vdwg.mxu0
    %v1569 = vadd.f32 %v1548, %v1566
    %v1570 = vxor.u32 %v1569, 2147483648
    %v1571 = vmul.f32 %v1570, 1.442695
    %v1572 = vpow.pop %v1571
    %v1573 = vadd.f32 %v1572, 1.0
    %v1574 = vrcp.pop %v1573
    %v1575 = vmul.f32 %v1573, %v1574
    %v1576 = vsub.f32 1.0, %v1575
    %v1577 = vmul.f32 %v1574, %v1576
    %v1578 = vadd.f32 %v1574, %v1577
    %vm1579 = vweird.f32 %v1573
    %vm1580 = vweird.f32 %v1574
    %vm1581 = vmor %vm1579, %vm1580
    %v1582 = vsel %vm1581, %v1574, %v1578
    %v1583 = vand.u32 2147483647, %v1573
    %vm1584 = vcmp.eq.f32.partialorder %v1583, 8.507059e+37
    %v1585 = vand.u32 %v1573, 2147483648
    %v1586 = vor.u32 1.1754944e-38, %v1585
    %v1587 = vsel %vm1584, %v1586, %v1582
    %v1588 = vmul.f32 1.0, %v1587
    %v1589 = vtanh.pop %v1569
    %v1590 = vmul.f32 %v1588, %v1536
    %1592 = vrot.lane.b32.xlu0 %v1589, 88
    %v1593 = vpop.permute.xlu0 %1592
    %v1595 = vmul.f32 %v1588, %v1593
    %1597 = vrot.lane.b32.xlu0 %v1595, 20
    %v1598 = vpop.permute.xlu0 %1597
    %v1600 = vadd.f32 %v1590, %v1598
    %v1601 = vtanh.pop %v1600
    %1603 = vrot.lane.b32.xlu0 %v1601, 40
    %v1604 = vpop.permute.xlu0 %1603
    %v1606 = vmul.f32 %v1588, %v1604
    %1608 = vrot.lane.b32.xlu0 %v1606, 68
    %v1609 = vpop.permute.xlu0 %1608
    %1611 = vst.msk [vmem:[#allocation3 + $0x11] sm:$0x1] %vm522, %v1609
    %v1612 = vld [vmem:[#allocation2 + $0x12] sm:$0x1]
    %v1613 = vpack.c.bf16 %v1606, %v1606
    %1615 = vrot.lane.b32.xlu0 %v1613, 68
    %v1616 = vpop.permute.xlu0 %1615
    %v1618 = vsel %vm459, %v1616, 0
    %1620 = vmatpush.bf16.msra.mxu0 0
    %1621 = vmatpush.bf16.msra.mxu0 0
    %1622 = vmatpush.bf16.msra.mxu0 0
    %1623 = vmatpush.bf16.msra.mxu0 0
    %1624 = vmatpush.bf16.msra.mxu0 0
    %1625 = vmatpush.bf16.msra.mxu0 0
    %1626 = vmatpush.bf16.msra.mxu0 %v465
    %1627 = vmatpush.bf16.msra.mxu0 %v456
    %1628 = vmatmul.bf16.gmra.mxu0 %v1618
    %v1629 = vpop.f32.mrf.mxu0
    %v1630 = vadd.f32 0.0, %v1629
    %v1631 = vpop.f32.mrf.mxu0
    %1632 = vdwg.mxu0
    %v1633 = vadd.f32 %v1612, %v1630
    %v1634 = vxor.u32 %v1633, 2147483648
    %v1635 = vmul.f32 %v1634, 1.442695
    %v1636 = vpow.pop %v1635
    %v1637 = vadd.f32 %v1636, 1.0
    %v1638 = vrcp.pop %v1637
    %v1639 = vmul.f32 %v1637, %v1638
    %v1640 = vsub.f32 1.0, %v1639
    %v1641 = vmul.f32 %v1638, %v1640
    %v1642 = vadd.f32 %v1638, %v1641
    %vm1643 = vweird.f32 %v1637
    %vm1644 = vweird.f32 %v1638
    %vm1645 = vmor %vm1643, %vm1644
    %v1646 = vsel %vm1645, %v1638, %v1642
    %v1647 = vand.u32 2147483647, %v1637
    %vm1648 = vcmp.eq.f32.partialorder %v1647, 8.507059e+37
    %v1649 = vand.u32 %v1637, 2147483648
    %v1650 = vor.u32 1.1754944e-38, %v1649
    %v1651 = vsel %vm1648, %v1650, %v1646
    %v1652 = vmul.f32 1.0, %v1651
    %v1653 = vtanh.pop %v1633
    %v1654 = vmul.f32 %v1652, %v1600
    %1656 = vrot.lane.b32.xlu0 %v1653, 88
    %v1657 = vpop.permute.xlu0 %1656
    %v1659 = vmul.f32 %v1652, %v1657
    %1661 = vrot.lane.b32.xlu0 %v1659, 20
    %v1662 = vpop.permute.xlu0 %1661
    %v1664 = vadd.f32 %v1654, %v1662
    %v1665 = vtanh.pop %v1664
    %1667 = vrot.lane.b32.xlu0 %v1665, 40
    %v1668 = vpop.permute.xlu0 %1667
    %v1670 = vmul.f32 %v1652, %v1668
    %1672 = vrot.lane.b32.xlu0 %v1670, 68
    %v1673 = vpop.permute.xlu0 %1672
    %1675 = vst.msk [vmem:[#allocation3 + $0x12] sm:$0x1] %vm522, %v1673
    %v1676 = vld [vmem:[#allocation2 + $0x13] sm:$0x1]
    %v1677 = vpack.c.bf16 %v1670, %v1670
    %1679 = vrot.lane.b32.xlu0 %v1677, 68
    %v1680 = vpop.permute.xlu0 %1679
    %v1682 = vsel %vm459, %v1680, 0
    %1684 = vmatpush.bf16.msra.mxu0 0
    %1685 = vmatpush.bf16.msra.mxu0 0
    %1686 = vmatpush.bf16.msra.mxu0 0
    %1687 = vmatpush.bf16.msra.mxu0 0
    %1688 = vmatpush.bf16.msra.mxu0 0
    %1689 = vmatpush.bf16.msra.mxu0 0
    %1690 = vmatpush.bf16.msra.mxu0 %v465
    %1691 = vmatpush.bf16.msra.mxu0 %v456
    %1692 = vmatmul.bf16.gmra.mxu0 %v1682
    %v1693 = vpop.f32.mrf.mxu0
    %v1694 = vadd.f32 0.0, %v1693
    %v1695 = vpop.f32.mrf.mxu0
    %1696 = vdwg.mxu0
    %v1697 = vadd.f32 %v1676, %v1694
    %v1698 = vxor.u32 %v1697, 2147483648
    %v1699 = vmul.f32 %v1698, 1.442695
    %v1700 = vpow.pop %v1699
    %v1701 = vadd.f32 %v1700, 1.0
    %v1702 = vrcp.pop %v1701
    %v1703 = vmul.f32 %v1701, %v1702
    %v1704 = vsub.f32 1.0, %v1703
    %v1705 = vmul.f32 %v1702, %v1704
    %v1706 = vadd.f32 %v1702, %v1705
    %vm1707 = vweird.f32 %v1701
    %vm1708 = vweird.f32 %v1702
    %vm1709 = vmor %vm1707, %vm1708
    %v1710 = vsel %vm1709, %v1702, %v1706
    %v1711 = vand.u32 2147483647, %v1701
    %vm1712 = vcmp.eq.f32.partialorder %v1711, 8.507059e+37
    %v1713 = vand.u32 %v1701, 2147483648
    %v1714 = vor.u32 1.1754944e-38, %v1713
    %v1715 = vsel %vm1712, %v1714, %v1710
    %v1716 = vmul.f32 1.0, %v1715
    %v1717 = vtanh.pop %v1697
    %v1718 = vmul.f32 %v1716, %v1664
    %1720 = vrot.lane.b32.xlu0 %v1717, 88
    %v1721 = vpop.permute.xlu0 %1720
    %v1723 = vmul.f32 %v1716, %v1721
    %1725 = vrot.lane.b32.xlu0 %v1723, 20
    %v1726 = vpop.permute.xlu0 %1725
    %v1728 = vadd.f32 %v1718, %v1726
    %v1729 = vtanh.pop %v1728
    %1731 = vrot.lane.b32.xlu0 %v1729, 40
    %v1732 = vpop.permute.xlu0 %1731
    %v1734 = vmul.f32 %v1716, %v1732
    %1736 = vrot.lane.b32.xlu0 %v1734, 68
    %v1737 = vpop.permute.xlu0 %1736
    %1739 = vst.msk [vmem:[#allocation3 + $0x13] sm:$0x1] %vm522, %v1737
    %v1740 = vld [vmem:[#allocation2 + $0x14] sm:$0x1]
    %v1741 = vpack.c.bf16 %v1734, %v1734
    %1743 = vrot.lane.b32.xlu0 %v1741, 68
    %v1744 = vpop.permute.xlu0 %1743
    %v1746 = vsel %vm459, %v1744, 0
    %1748 = vmatpush.bf16.msra.mxu0 0
    %1749 = vmatpush.bf16.msra.mxu0 0
    %1750 = vmatpush.bf16.msra.mxu0 0
    %1751 = vmatpush.bf16.msra.mxu0 0
    %1752 = vmatpush.bf16.msra.mxu0 0
    %1753 = vmatpush.bf16.msra.mxu0 0
    %1754 = vmatpush.bf16.msra.mxu0 %v465
    %1755 = vmatpush.bf16.msra.mxu0 %v456
    %1756 = vmatmul.bf16.gmra.mxu0 %v1746
    %v1757 = vpop.f32.mrf.mxu0
    %v1758 = vadd.f32 0.0, %v1757
    %v1759 = vpop.f32.mrf.mxu0
    %1760 = vdwg.mxu0
    %v1761 = vadd.f32 %v1740, %v1758
    %v1762 = vxor.u32 %v1761, 2147483648
    %v1763 = vmul.f32 %v1762, 1.442695
    %v1764 = vpow.pop %v1763
    %v1765 = vadd.f32 %v1764, 1.0
    %v1766 = vrcp.pop %v1765
    %v1767 = vmul.f32 %v1765, %v1766
    %v1768 = vsub.f32 1.0, %v1767
    %v1769 = vmul.f32 %v1766, %v1768
    %v1770 = vadd.f32 %v1766, %v1769
    %vm1771 = vweird.f32 %v1765
    %vm1772 = vweird.f32 %v1766
    %vm1773 = vmor %vm1771, %vm1772
    %v1774 = vsel %vm1773, %v1766, %v1770
    %v1775 = vand.u32 2147483647, %v1765
    %vm1776 = vcmp.eq.f32.partialorder %v1775, 8.507059e+37
    %v1777 = vand.u32 %v1765, 2147483648
    %v1778 = vor.u32 1.1754944e-38, %v1777
    %v1779 = vsel %vm1776, %v1778, %v1774
    %v1780 = vmul.f32 1.0, %v1779
    %v1781 = vtanh.pop %v1761
    %v1782 = vmul.f32 %v1780, %v1728
    %1784 = vrot.lane.b32.xlu0 %v1781, 88
    %v1785 = vpop.permute.xlu0 %1784
    %v1787 = vmul.f32 %v1780, %v1785
    %1789 = vrot.lane.b32.xlu0 %v1787, 20
    %v1790 = vpop.permute.xlu0 %1789
    %v1792 = vadd.f32 %v1782, %v1790
    %v1793 = vtanh.pop %v1792
    %1795 = vrot.lane.b32.xlu0 %v1793, 40
    %v1796 = vpop.permute.xlu0 %1795
    %v1798 = vmul.f32 %v1780, %v1796
    %1800 = vrot.lane.b32.xlu0 %v1798, 68
    %v1801 = vpop.permute.xlu0 %1800
    %1803 = vst.msk [vmem:[#allocation3 + $0x14] sm:$0x1] %vm522, %v1801
    %v1804 = vld [vmem:[#allocation2 + $0x15] sm:$0x1]
    %v1805 = vpack.c.bf16 %v1798, %v1798
    %1807 = vrot.lane.b32.xlu0 %v1805, 68
    %v1808 = vpop.permute.xlu0 %1807
    %v1810 = vsel %vm459, %v1808, 0
    %1812 = vmatpush.bf16.msra.mxu0 0
    %1813 = vmatpush.bf16.msra.mxu0 0
    %1814 = vmatpush.bf16.msra.mxu0 0
    %1815 = vmatpush.bf16.msra.mxu0 0
    %1816 = vmatpush.bf16.msra.mxu0 0
    %1817 = vmatpush.bf16.msra.mxu0 0
    %1818 = vmatpush.bf16.msra.mxu0 %v465
    %1819 = vmatpush.bf16.msra.mxu0 %v456
    %1820 = vmatmul.bf16.gmra.mxu0 %v1810
    %v1821 = vpop.f32.mrf.mxu0
    %v1822 = vadd.f32 0.0, %v1821
    %v1823 = vpop.f32.mrf.mxu0
    %1824 = vdwg.mxu0
    %v1825 = vadd.f32 %v1804, %v1822
    %v1826 = vxor.u32 %v1825, 2147483648
    %v1827 = vmul.f32 %v1826, 1.442695
    %v1828 = vpow.pop %v1827
    %v1829 = vadd.f32 %v1828, 1.0
    %v1830 = vrcp.pop %v1829
    %v1831 = vmul.f32 %v1829, %v1830
    %v1832 = vsub.f32 1.0, %v1831
    %v1833 = vmul.f32 %v1830, %v1832
    %v1834 = vadd.f32 %v1830, %v1833
    %vm1835 = vweird.f32 %v1829
    %vm1836 = vweird.f32 %v1830
    %vm1837 = vmor %vm1835, %vm1836
    %v1838 = vsel %vm1837, %v1830, %v1834
    %v1839 = vand.u32 2147483647, %v1829
    %vm1840 = vcmp.eq.f32.partialorder %v1839, 8.507059e+37
    %v1841 = vand.u32 %v1829, 2147483648
    %v1842 = vor.u32 1.1754944e-38, %v1841
    %v1843 = vsel %vm1840, %v1842, %v1838
    %v1844 = vmul.f32 1.0, %v1843
    %v1845 = vtanh.pop %v1825
    %v1846 = vmul.f32 %v1844, %v1792
    %1848 = vrot.lane.b32.xlu0 %v1845, 88
    %v1849 = vpop.permute.xlu0 %1848
    %v1851 = vmul.f32 %v1844, %v1849
    %1853 = vrot.lane.b32.xlu0 %v1851, 20
    %v1854 = vpop.permute.xlu0 %1853
    %v1856 = vadd.f32 %v1846, %v1854
    %v1857 = vtanh.pop %v1856
    %1859 = vrot.lane.b32.xlu0 %v1857, 40
    %v1860 = vpop.permute.xlu0 %1859
    %v1862 = vmul.f32 %v1844, %v1860
    %1864 = vrot.lane.b32.xlu0 %v1862, 68
    %v1865 = vpop.permute.xlu0 %1864
    %1867 = vst.msk [vmem:[#allocation3 + $0x15] sm:$0x1] %vm522, %v1865
    %v1868 = vld [vmem:[#allocation2 + $0x16] sm:$0x1]
    %v1869 = vpack.c.bf16 %v1862, %v1862
    %1871 = vrot.lane.b32.xlu0 %v1869, 68
    %v1872 = vpop.permute.xlu0 %1871
    %v1874 = vsel %vm459, %v1872, 0
    %1876 = vmatpush.bf16.msra.mxu0 0
    %1877 = vmatpush.bf16.msra.mxu0 0
    %1878 = vmatpush.bf16.msra.mxu0 0
    %1879 = vmatpush.bf16.msra.mxu0 0
    %1880 = vmatpush.bf16.msra.mxu0 0
    %1881 = vmatpush.bf16.msra.mxu0 0
    %1882 = vmatpush.bf16.msra.mxu0 %v465
    %1883 = vmatpush.bf16.msra.mxu0 %v456
    %1884 = vmatmul.bf16.gmra.mxu0 %v1874
    %v1885 = vpop.f32.mrf.mxu0
    %v1886 = vadd.f32 0.0, %v1885
    %v1887 = vpop.f32.mrf.mxu0
    %1888 = vdwg.mxu0
    %v1889 = vadd.f32 %v1868, %v1886
    %v1890 = vxor.u32 %v1889, 2147483648
    %v1891 = vmul.f32 %v1890, 1.442695
    %v1892 = vpow.pop %v1891
    %v1893 = vadd.f32 %v1892, 1.0
    %v1894 = vrcp.pop %v1893
    %v1895 = vmul.f32 %v1893, %v1894
    %v1896 = vsub.f32 1.0, %v1895
    %v1897 = vmul.f32 %v1894, %v1896
    %v1898 = vadd.f32 %v1894, %v1897
    %vm1899 = vweird.f32 %v1893
    %vm1900 = vweird.f32 %v1894
    %vm1901 = vmor %vm1899, %vm1900
    %v1902 = vsel %vm1901, %v1894, %v1898
    %v1903 = vand.u32 2147483647, %v1893
    %vm1904 = vcmp.eq.f32.partialorder %v1903, 8.507059e+37
    %v1905 = vand.u32 %v1893, 2147483648
    %v1906 = vor.u32 1.1754944e-38, %v1905
    %v1907 = vsel %vm1904, %v1906, %v1902
    %v1908 = vmul.f32 1.0, %v1907
    %v1909 = vtanh.pop %v1889
    %v1910 = vmul.f32 %v1908, %v1856
    %1912 = vrot.lane.b32.xlu0 %v1909, 88
    %v1913 = vpop.permute.xlu0 %1912
    %v1915 = vmul.f32 %v1908, %v1913
    %1917 = vrot.lane.b32.xlu0 %v1915, 20
    %v1918 = vpop.permute.xlu0 %1917
    %v1920 = vadd.f32 %v1910, %v1918
    %v1921 = vtanh.pop %v1920
    %1923 = vrot.lane.b32.xlu0 %v1921, 40
    %v1924 = vpop.permute.xlu0 %1923
    %v1926 = vmul.f32 %v1908, %v1924
    %1928 = vrot.lane.b32.xlu0 %v1926, 68
    %v1929 = vpop.permute.xlu0 %1928
    %1931 = vst.msk [vmem:[#allocation3 + $0x16] sm:$0x1] %vm522, %v1929
    %v1932 = vld [vmem:[#allocation2 + $0x17] sm:$0x1]
    %v1933 = vpack.c.bf16 %v1926, %v1926
    %1935 = vrot.lane.b32.xlu0 %v1933, 68
    %v1936 = vpop.permute.xlu0 %1935
    %v1938 = vsel %vm459, %v1936, 0
    %1940 = vmatpush.bf16.msra.mxu0 0
    %1941 = vmatpush.bf16.msra.mxu0 0
    %1942 = vmatpush.bf16.msra.mxu0 0
    %1943 = vmatpush.bf16.msra.mxu0 0
    %1944 = vmatpush.bf16.msra.mxu0 0
    %1945 = vmatpush.bf16.msra.mxu0 0
    %1946 = vmatpush.bf16.msra.mxu0 %v465
    %1947 = vmatpush.bf16.msra.mxu0 %v456
    %1948 = vmatmul.bf16.gmra.mxu0 %v1938
    %v1949 = vpop.f32.mrf.mxu0
    %v1950 = vadd.f32 0.0, %v1949
    %v1951 = vpop.f32.mrf.mxu0
    %1952 = vdwg.mxu0
    %v1953 = vadd.f32 %v1932, %v1950
    %v1954 = vxor.u32 %v1953, 2147483648
    %v1955 = vmul.f32 %v1954, 1.442695
    %v1956 = vpow.pop %v1955
    %v1957 = vadd.f32 %v1956, 1.0
    %v1958 = vrcp.pop %v1957
    %v1959 = vmul.f32 %v1957, %v1958
    %v1960 = vsub.f32 1.0, %v1959
    %v1961 = vmul.f32 %v1958, %v1960
    %v1962 = vadd.f32 %v1958, %v1961
    %vm1963 = vweird.f32 %v1957
    %vm1964 = vweird.f32 %v1958
    %vm1965 = vmor %vm1963, %vm1964
    %v1966 = vsel %vm1965, %v1958, %v1962
    %v1967 = vand.u32 2147483647, %v1957
    %vm1968 = vcmp.eq.f32.partialorder %v1967, 8.507059e+37
    %v1969 = vand.u32 %v1957, 2147483648
    %v1970 = vor.u32 1.1754944e-38, %v1969
    %v1971 = vsel %vm1968, %v1970, %v1966
    %v1972 = vmul.f32 1.0, %v1971
    %v1973 = vtanh.pop %v1953
    %v1974 = vmul.f32 %v1972, %v1920
    %1976 = vrot.lane.b32.xlu0 %v1973, 88
    %v1977 = vpop.permute.xlu0 %1976
    %v1979 = vmul.f32 %v1972, %v1977
    %1981 = vrot.lane.b32.xlu0 %v1979, 20
    %v1982 = vpop.permute.xlu0 %1981
    %v1984 = vadd.f32 %v1974, %v1982
    %v1985 = vtanh.pop %v1984
    %1987 = vrot.lane.b32.xlu0 %v1985, 40
    %v1988 = vpop.permute.xlu0 %1987
    %v1990 = vmul.f32 %v1972, %v1988
    %1992 = vrot.lane.b32.xlu0 %v1990, 68
    %v1993 = vpop.permute.xlu0 %1992
    %1995 = vst.msk [vmem:[#allocation3 + $0x17] sm:$0x1] %vm522, %v1993
    %v1996 = vld [vmem:[#allocation2 + $0x18] sm:$0x1]
    %v1997 = vpack.c.bf16 %v1990, %v1990
    %1999 = vrot.lane.b32.xlu0 %v1997, 68
    %v2000 = vpop.permute.xlu0 %1999
    %v2002 = vsel %vm459, %v2000, 0
    %2004 = vmatpush.bf16.msra.mxu0 0
    %2005 = vmatpush.bf16.msra.mxu0 0
    %2006 = vmatpush.bf16.msra.mxu0 0
    %2007 = vmatpush.bf16.msra.mxu0 0
    %2008 = vmatpush.bf16.msra.mxu0 0
    %2009 = vmatpush.bf16.msra.mxu0 0
    %2010 = vmatpush.bf16.msra.mxu0 %v465
    %2011 = vmatpush.bf16.msra.mxu0 %v456
    %2012 = vmatmul.bf16.gmra.mxu0 %v2002
    %v2013 = vpop.f32.mrf.mxu0
    %v2014 = vadd.f32 0.0, %v2013
    %v2015 = vpop.f32.mrf.mxu0
    %2016 = vdwg.mxu0
    %v2017 = vadd.f32 %v1996, %v2014
    %v2018 = vxor.u32 %v2017, 2147483648
    %v2019 = vmul.f32 %v2018, 1.442695
    %v2020 = vpow.pop %v2019
    %v2021 = vadd.f32 %v2020, 1.0
    %v2022 = vrcp.pop %v2021
    %v2023 = vmul.f32 %v2021, %v2022
    %v2024 = vsub.f32 1.0, %v2023
    %v2025 = vmul.f32 %v2022, %v2024
    %v2026 = vadd.f32 %v2022, %v2025
    %vm2027 = vweird.f32 %v2021
    %vm2028 = vweird.f32 %v2022
    %vm2029 = vmor %vm2027, %vm2028
    %v2030 = vsel %vm2029, %v2022, %v2026
    %v2031 = vand.u32 2147483647, %v2021
    %vm2032 = vcmp.eq.f32.partialorder %v2031, 8.507059e+37
    %v2033 = vand.u32 %v2021, 2147483648
    %v2034 = vor.u32 1.1754944e-38, %v2033
    %v2035 = vsel %vm2032, %v2034, %v2030
    %v2036 = vmul.f32 1.0, %v2035
    %v2037 = vtanh.pop %v2017
    %v2038 = vmul.f32 %v2036, %v1984
    %2040 = vrot.lane.b32.xlu0 %v2037, 88
    %v2041 = vpop.permute.xlu0 %2040
    %v2043 = vmul.f32 %v2036, %v2041
    %2045 = vrot.lane.b32.xlu0 %v2043, 20
    %v2046 = vpop.permute.xlu0 %2045
    %v2048 = vadd.f32 %v2038, %v2046
    %v2049 = vtanh.pop %v2048
    %2051 = vrot.lane.b32.xlu0 %v2049, 40
    %v2052 = vpop.permute.xlu0 %2051
    %v2054 = vmul.f32 %v2036, %v2052
    %2056 = vrot.lane.b32.xlu0 %v2054, 68
    %v2057 = vpop.permute.xlu0 %2056
    %2059 = vst.msk [vmem:[#allocation3 + $0x18] sm:$0x1] %vm522, %v2057
    %v2060 = vld [vmem:[#allocation2 + $0x19] sm:$0x1]
    %v2061 = vpack.c.bf16 %v2054, %v2054
    %2063 = vrot.lane.b32.xlu0 %v2061, 68
    %v2064 = vpop.permute.xlu0 %2063
    %v2066 = vsel %vm459, %v2064, 0
    %2068 = vmatpush.bf16.msra.mxu0 0
    %2069 = vmatpush.bf16.msra.mxu0 0
    %2070 = vmatpush.bf16.msra.mxu0 0
    %2071 = vmatpush.bf16.msra.mxu0 0
    %2072 = vmatpush.bf16.msra.mxu0 0
    %2073 = vmatpush.bf16.msra.mxu0 0
    %2074 = vmatpush.bf16.msra.mxu0 %v465
    %2075 = vmatpush.bf16.msra.mxu0 %v456
    %2076 = vmatmul.bf16.gmra.mxu0 %v2066
    %v2077 = vpop.f32.mrf.mxu0
    %v2078 = vadd.f32 0.0, %v2077
    %v2079 = vpop.f32.mrf.mxu0
    %2080 = vdwg.mxu0
    %v2081 = vadd.f32 %v2060, %v2078
    %v2082 = vxor.u32 %v2081, 2147483648
    %v2083 = vmul.f32 %v2082, 1.442695
    %v2084 = vpow.pop %v2083
    %v2085 = vadd.f32 %v2084, 1.0
    %v2086 = vrcp.pop %v2085
    %v2087 = vmul.f32 %v2085, %v2086
    %v2088 = vsub.f32 1.0, %v2087
    %v2089 = vmul.f32 %v2086, %v2088
    %v2090 = vadd.f32 %v2086, %v2089
    %vm2091 = vweird.f32 %v2085
    %vm2092 = vweird.f32 %v2086
    %vm2093 = vmor %vm2091, %vm2092
    %v2094 = vsel %vm2093, %v2086, %v2090
    %v2095 = vand.u32 2147483647, %v2085
    %vm2096 = vcmp.eq.f32.partialorder %v2095, 8.507059e+37
    %v2097 = vand.u32 %v2085, 2147483648
    %v2098 = vor.u32 1.1754944e-38, %v2097
    %v2099 = vsel %vm2096, %v2098, %v2094
    %v2100 = vmul.f32 1.0, %v2099
    %v2101 = vtanh.pop %v2081
    %v2102 = vmul.f32 %v2100, %v2048
    %2104 = vrot.lane.b32.xlu0 %v2101, 88
    %v2105 = vpop.permute.xlu0 %2104
    %v2107 = vmul.f32 %v2100, %v2105
    %2109 = vrot.lane.b32.xlu0 %v2107, 20
    %v2110 = vpop.permute.xlu0 %2109
    %v2112 = vadd.f32 %v2102, %v2110
    %v2113 = vtanh.pop %v2112
    %2115 = vrot.lane.b32.xlu0 %v2113, 40
    %v2116 = vpop.permute.xlu0 %2115
    %v2118 = vmul.f32 %v2100, %v2116
    %2120 = vrot.lane.b32.xlu0 %v2118, 68
    %v2121 = vpop.permute.xlu0 %2120
    %2123 = vst.msk [vmem:[#allocation3 + $0x19] sm:$0x1] %vm522, %v2121
    %v2124 = vld [vmem:[#allocation2 + $0x1a] sm:$0x1]
    %v2125 = vpack.c.bf16 %v2118, %v2118
    %2127 = vrot.lane.b32.xlu0 %v2125, 68
    %v2128 = vpop.permute.xlu0 %2127
    %v2130 = vsel %vm459, %v2128, 0
    %2132 = vmatpush.bf16.msra.mxu0 0
    %2133 = vmatpush.bf16.msra.mxu0 0
    %2134 = vmatpush.bf16.msra.mxu0 0
    %2135 = vmatpush.bf16.msra.mxu0 0
    %2136 = vmatpush.bf16.msra.mxu0 0
    %2137 = vmatpush.bf16.msra.mxu0 0
    %2138 = vmatpush.bf16.msra.mxu0 %v465
    %2139 = vmatpush.bf16.msra.mxu0 %v456
    %2140 = vmatmul.bf16.gmra.mxu0 %v2130
    %v2141 = vpop.f32.mrf.mxu0
    %v2142 = vadd.f32 0.0, %v2141
    %v2143 = vpop.f32.mrf.mxu0
    %2144 = vdwg.mxu0
    %v2145 = vadd.f32 %v2124, %v2142
    %v2146 = vxor.u32 %v2145, 2147483648
    %v2147 = vmul.f32 %v2146, 1.442695
    %v2148 = vpow.pop %v2147
    %v2149 = vadd.f32 %v2148, 1.0
    %v2150 = vrcp.pop %v2149
    %v2151 = vmul.f32 %v2149, %v2150
    %v2152 = vsub.f32 1.0, %v2151
    %v2153 = vmul.f32 %v2150, %v2152
    %v2154 = vadd.f32 %v2150, %v2153
    %vm2155 = vweird.f32 %v2149
    %vm2156 = vweird.f32 %v2150
    %vm2157 = vmor %vm2155, %vm2156
    %v2158 = vsel %vm2157, %v2150, %v2154
    %v2159 = vand.u32 2147483647, %v2149
    %vm2160 = vcmp.eq.f32.partialorder %v2159, 8.507059e+37
    %v2161 = vand.u32 %v2149, 2147483648
    %v2162 = vor.u32 1.1754944e-38, %v2161
    %v2163 = vsel %vm2160, %v2162, %v2158
    %v2164 = vmul.f32 1.0, %v2163
    %v2165 = vtanh.pop %v2145
    %v2166 = vmul.f32 %v2164, %v2112
    %2168 = vrot.lane.b32.xlu0 %v2165, 88
    %v2169 = vpop.permute.xlu0 %2168
    %v2171 = vmul.f32 %v2164, %v2169
    %2173 = vrot.lane.b32.xlu0 %v2171, 20
    %v2174 = vpop.permute.xlu0 %2173
    %v2176 = vadd.f32 %v2166, %v2174
    %v2177 = vtanh.pop %v2176
    %2179 = vrot.lane.b32.xlu0 %v2177, 40
    %v2180 = vpop.permute.xlu0 %2179
    %v2182 = vmul.f32 %v2164, %v2180
    %2184 = vrot.lane.b32.xlu0 %v2182, 68
    %v2185 = vpop.permute.xlu0 %2184
    %2187 = vst.msk [vmem:[#allocation3 + $0x1a] sm:$0x1] %vm522, %v2185
    %v2188 = vld [vmem:[#allocation2 + $0x1b] sm:$0x1]
    %v2189 = vpack.c.bf16 %v2182, %v2182
    %2191 = vrot.lane.b32.xlu0 %v2189, 68
    %v2192 = vpop.permute.xlu0 %2191
    %v2194 = vsel %vm459, %v2192, 0
    %2196 = vmatpush.bf16.msra.mxu0 0
    %2197 = vmatpush.bf16.msra.mxu0 0
    %2198 = vmatpush.bf16.msra.mxu0 0
    %2199 = vmatpush.bf16.msra.mxu0 0
    %2200 = vmatpush.bf16.msra.mxu0 0
    %2201 = vmatpush.bf16.msra.mxu0 0
    %2202 = vmatpush.bf16.msra.mxu0 %v465
    %2203 = vmatpush.bf16.msra.mxu0 %v456
    %2204 = vmatmul.bf16.gmra.mxu0 %v2194
    %v2205 = vpop.f32.mrf.mxu0
    %v2206 = vadd.f32 0.0, %v2205
    %v2207 = vpop.f32.mrf.mxu0
    %2208 = vdwg.mxu0
    %v2209 = vadd.f32 %v2188, %v2206
    %v2210 = vxor.u32 %v2209, 2147483648
    %v2211 = vmul.f32 %v2210, 1.442695
    %v2212 = vpow.pop %v2211
    %v2213 = vadd.f32 %v2212, 1.0
    %v2214 = vrcp.pop %v2213
    %v2215 = vmul.f32 %v2213, %v2214
    %v2216 = vsub.f32 1.0, %v2215
    %v2217 = vmul.f32 %v2214, %v2216
    %v2218 = vadd.f32 %v2214, %v2217
    %vm2219 = vweird.f32 %v2213
    %vm2220 = vweird.f32 %v2214
    %vm2221 = vmor %vm2219, %vm2220
    %v2222 = vsel %vm2221, %v2214, %v2218
    %v2223 = vand.u32 2147483647, %v2213
    %vm2224 = vcmp.eq.f32.partialorder %v2223, 8.507059e+37
    %v2225 = vand.u32 %v2213, 2147483648
    %v2226 = vor.u32 1.1754944e-38, %v2225
    %v2227 = vsel %vm2224, %v2226, %v2222
    %v2228 = vmul.f32 1.0, %v2227
    %v2229 = vtanh.pop %v2209
    %v2230 = vmul.f32 %v2228, %v2176
    %2232 = vrot.lane.b32.xlu0 %v2229, 88
    %v2233 = vpop.permute.xlu0 %2232
    %v2235 = vmul.f32 %v2228, %v2233
    %2237 = vrot.lane.b32.xlu0 %v2235, 20
    %v2238 = vpop.permute.xlu0 %2237
    %v2240 = vadd.f32 %v2230, %v2238
    %v2241 = vtanh.pop %v2240
    %2243 = vrot.lane.b32.xlu0 %v2241, 40
    %v2244 = vpop.permute.xlu0 %2243
    %v2246 = vmul.f32 %v2228, %v2244
    %2248 = vrot.lane.b32.xlu0 %v2246, 68
    %v2249 = vpop.permute.xlu0 %2248
    %2251 = vst.msk [vmem:[#allocation3 + $0x1b] sm:$0x1] %vm522, %v2249
    %v2252 = vld [vmem:[#allocation2 + $0x1c] sm:$0x1]
    %v2253 = vpack.c.bf16 %v2246, %v2246
    %2255 = vrot.lane.b32.xlu0 %v2253, 68
    %v2256 = vpop.permute.xlu0 %2255
    %v2258 = vsel %vm459, %v2256, 0
    %2260 = vmatpush.bf16.msra.mxu0 0
    %2261 = vmatpush.bf16.msra.mxu0 0
    %2262 = vmatpush.bf16.msra.mxu0 0
    %2263 = vmatpush.bf16.msra.mxu0 0
    %2264 = vmatpush.bf16.msra.mxu0 0
    %2265 = vmatpush.bf16.msra.mxu0 0
    %2266 = vmatpush.bf16.msra.mxu0 %v465
    %2267 = vmatpush.bf16.msra.mxu0 %v456
    %2268 = vmatmul.bf16.gmra.mxu0 %v2258
    %v2269 = vpop.f32.mrf.mxu0
    %v2270 = vadd.f32 0.0, %v2269
    %v2271 = vpop.f32.mrf.mxu0
    %2272 = vdwg.mxu0
    %v2273 = vadd.f32 %v2252, %v2270
    %v2274 = vxor.u32 %v2273, 2147483648
    %v2275 = vmul.f32 %v2274, 1.442695
    %v2276 = vpow.pop %v2275
    %v2277 = vadd.f32 %v2276, 1.0
    %v2278 = vrcp.pop %v2277
    %v2279 = vmul.f32 %v2277, %v2278
    %v2280 = vsub.f32 1.0, %v2279
    %v2281 = vmul.f32 %v2278, %v2280
    %v2282 = vadd.f32 %v2278, %v2281
    %vm2283 = vweird.f32 %v2277
    %vm2284 = vweird.f32 %v2278
    %vm2285 = vmor %vm2283, %vm2284
    %v2286 = vsel %vm2285, %v2278, %v2282
    %v2287 = vand.u32 2147483647, %v2277
    %vm2288 = vcmp.eq.f32.partialorder %v2287, 8.507059e+37
    %v2289 = vand.u32 %v2277, 2147483648
    %v2290 = vor.u32 1.1754944e-38, %v2289
    %v2291 = vsel %vm2288, %v2290, %v2286
    %v2292 = vmul.f32 1.0, %v2291
    %v2293 = vtanh.pop %v2273
    %v2294 = vmul.f32 %v2292, %v2240
    %2296 = vrot.lane.b32.xlu0 %v2293, 88
    %v2297 = vpop.permute.xlu0 %2296
    %v2299 = vmul.f32 %v2292, %v2297
    %2301 = vrot.lane.b32.xlu0 %v2299, 20
    %v2302 = vpop.permute.xlu0 %2301
    %v2304 = vadd.f32 %v2294, %v2302
    %v2305 = vtanh.pop %v2304
    %2307 = vrot.lane.b32.xlu0 %v2305, 40
    %v2308 = vpop.permute.xlu0 %2307
    %v2310 = vmul.f32 %v2292, %v2308
    %2312 = vrot.lane.b32.xlu0 %v2310, 68
    %v2313 = vpop.permute.xlu0 %2312
    %2315 = vst.msk [vmem:[#allocation3 + $0x1c] sm:$0x1] %vm522, %v2313
    %v2316 = vld [vmem:[#allocation2 + $0x1d] sm:$0x1]
    %v2317 = vpack.c.bf16 %v2310, %v2310
    %2319 = vrot.lane.b32.xlu0 %v2317, 68
    %v2320 = vpop.permute.xlu0 %2319
    %v2322 = vsel %vm459, %v2320, 0
    %2324 = vmatpush.bf16.msra.mxu0 0
    %2325 = vmatpush.bf16.msra.mxu0 0
    %2326 = vmatpush.bf16.msra.mxu0 0
    %2327 = vmatpush.bf16.msra.mxu0 0
    %2328 = vmatpush.bf16.msra.mxu0 0
    %2329 = vmatpush.bf16.msra.mxu0 0
    %2330 = vmatpush.bf16.msra.mxu0 %v465
    %2331 = vmatpush.bf16.msra.mxu0 %v456
    %2332 = vmatmul.bf16.gmra.mxu0 %v2322
    %v2333 = vpop.f32.mrf.mxu0
    %v2334 = vadd.f32 0.0, %v2333
    %v2335 = vpop.f32.mrf.mxu0
    %2336 = vdwg.mxu0
    %v2337 = vadd.f32 %v2316, %v2334
    %v2338 = vxor.u32 %v2337, 2147483648
    %v2339 = vmul.f32 %v2338, 1.442695
    %v2340 = vpow.pop %v2339
    %v2341 = vadd.f32 %v2340, 1.0
    %v2342 = vrcp.pop %v2341
    %v2343 = vmul.f32 %v2341, %v2342
    %v2344 = vsub.f32 1.0, %v2343
    %v2345 = vmul.f32 %v2342, %v2344
    %v2346 = vadd.f32 %v2342, %v2345
    %vm2347 = vweird.f32 %v2341
    %vm2348 = vweird.f32 %v2342
    %vm2349 = vmor %vm2347, %vm2348
    %v2350 = vsel %vm2349, %v2342, %v2346
    %v2351 = vand.u32 2147483647, %v2341
    %vm2352 = vcmp.eq.f32.partialorder %v2351, 8.507059e+37
    %v2353 = vand.u32 %v2341, 2147483648
    %v2354 = vor.u32 1.1754944e-38, %v2353
    %v2355 = vsel %vm2352, %v2354, %v2350
    %v2356 = vmul.f32 1.0, %v2355
    %v2357 = vtanh.pop %v2337
    %v2358 = vmul.f32 %v2356, %v2304
    %2360 = vrot.lane.b32.xlu0 %v2357, 88
    %v2361 = vpop.permute.xlu0 %2360
    %v2363 = vmul.f32 %v2356, %v2361
    %2365 = vrot.lane.b32.xlu0 %v2363, 20
    %v2366 = vpop.permute.xlu0 %2365
    %v2368 = vadd.f32 %v2358, %v2366
    %v2369 = vtanh.pop %v2368
    %2371 = vrot.lane.b32.xlu0 %v2369, 40
    %v2372 = vpop.permute.xlu0 %2371
    %v2374 = vmul.f32 %v2356, %v2372
    %2376 = vrot.lane.b32.xlu0 %v2374, 68
    %v2377 = vpop.permute.xlu0 %2376
    %2379 = vst.msk [vmem:[#allocation3 + $0x1d] sm:$0x1] %vm522, %v2377
    %v2380 = vld [vmem:[#allocation2 + $0x1e] sm:$0x1]
    %v2381 = vpack.c.bf16 %v2374, %v2374
    %2383 = vrot.lane.b32.xlu0 %v2381, 68
    %v2384 = vpop.permute.xlu0 %2383
    %v2386 = vsel %vm459, %v2384, 0
    %2388 = vmatpush.bf16.msra.mxu0 0
    %2389 = vmatpush.bf16.msra.mxu0 0
    %2390 = vmatpush.bf16.msra.mxu0 0
    %2391 = vmatpush.bf16.msra.mxu0 0
    %2392 = vmatpush.bf16.msra.mxu0 0
    %2393 = vmatpush.bf16.msra.mxu0 0
    %2394 = vmatpush.bf16.msra.mxu0 %v465
    %2395 = vmatpush.bf16.msra.mxu0 %v456
    %2396 = vmatmul.bf16.gmra.mxu0 %v2386
    %v2397 = vpop.f32.mrf.mxu0
    %v2398 = vadd.f32 0.0, %v2397
    %v2399 = vpop.f32.mrf.mxu0
    %2400 = vdwg.mxu0
    %v2401 = vadd.f32 %v2380, %v2398
    %v2402 = vxor.u32 %v2401, 2147483648
    %v2403 = vmul.f32 %v2402, 1.442695
    %v2404 = vpow.pop %v2403
    %v2405 = vadd.f32 %v2404, 1.0
    %v2406 = vrcp.pop %v2405
    %v2407 = vmul.f32 %v2405, %v2406
    %v2408 = vsub.f32 1.0, %v2407
    %v2409 = vmul.f32 %v2406, %v2408
    %v2410 = vadd.f32 %v2406, %v2409
    %vm2411 = vweird.f32 %v2405
    %vm2412 = vweird.f32 %v2406
    %vm2413 = vmor %vm2411, %vm2412
    %v2414 = vsel %vm2413, %v2406, %v2410
    %v2415 = vand.u32 2147483647, %v2405
    %vm2416 = vcmp.eq.f32.partialorder %v2415, 8.507059e+37
    %v2417 = vand.u32 %v2405, 2147483648
    %v2418 = vor.u32 1.1754944e-38, %v2417
    %v2419 = vsel %vm2416, %v2418, %v2414
    %v2420 = vmul.f32 1.0, %v2419
    %v2421 = vtanh.pop %v2401
    %v2422 = vmul.f32 %v2420, %v2368
    %2424 = vrot.lane.b32.xlu0 %v2421, 88
    %v2425 = vpop.permute.xlu0 %2424
    %v2427 = vmul.f32 %v2420, %v2425
    %2429 = vrot.lane.b32.xlu0 %v2427, 20
    %v2430 = vpop.permute.xlu0 %2429
    %v2432 = vadd.f32 %v2422, %v2430
    %v2433 = vtanh.pop %v2432
    %2435 = vrot.lane.b32.xlu0 %v2433, 40
    %v2436 = vpop.permute.xlu0 %2435
    %v2438 = vmul.f32 %v2420, %v2436
    %2440 = vrot.lane.b32.xlu0 %v2438, 68
    %v2441 = vpop.permute.xlu0 %2440
    %2443 = vst.msk [vmem:[#allocation3 + $0x1e] sm:$0x1] %vm522, %v2441
    %v2444 = vld [vmem:[#allocation2 + $0x1f] sm:$0x1]
    %v2445 = vpack.c.bf16 %v2438, %v2438
    %2447 = vrot.lane.b32.xlu0 %v2445, 68
    %v2448 = vpop.permute.xlu0 %2447
    %v2450 = vsel %vm459, %v2448, 0
    %2452 = vmatpush.bf16.msra.mxu0 0
    %2453 = vmatpush.bf16.msra.mxu0 0
    %2454 = vmatpush.bf16.msra.mxu0 0
    %2455 = vmatpush.bf16.msra.mxu0 0
    %2456 = vmatpush.bf16.msra.mxu0 0
    %2457 = vmatpush.bf16.msra.mxu0 0
    %2458 = vmatpush.bf16.msra.mxu0 %v465
    %2459 = vmatpush.bf16.msra.mxu0 %v456
    %2460 = vmatmul.bf16.gmra.mxu0 %v2450
    %v2461 = vpop.f32.mrf.mxu0
    %v2462 = vadd.f32 0.0, %v2461
    %v2463 = vpop.f32.mrf.mxu0
    %2464 = vdwg.mxu0
    %v2465 = vadd.f32 %v2444, %v2462
    %v2466 = vxor.u32 %v2465, 2147483648
    %v2467 = vmul.f32 %v2466, 1.442695
    %v2468 = vpow.pop %v2467
    %v2469 = vadd.f32 %v2468, 1.0
    %v2470 = vrcp.pop %v2469
    %v2471 = vmul.f32 %v2469, %v2470
    %v2472 = vsub.f32 1.0, %v2471
    %v2473 = vmul.f32 %v2470, %v2472
    %v2474 = vadd.f32 %v2470, %v2473
    %vm2475 = vweird.f32 %v2469
    %vm2476 = vweird.f32 %v2470
    %vm2477 = vmor %vm2475, %vm2476
    %v2478 = vsel %vm2477, %v2470, %v2474
    %v2479 = vand.u32 2147483647, %v2469
    %vm2480 = vcmp.eq.f32.partialorder %v2479, 8.507059e+37
    %v2481 = vand.u32 %v2469, 2147483648
    %v2482 = vor.u32 1.1754944e-38, %v2481
    %v2483 = vsel %vm2480, %v2482, %v2478
    %v2484 = vmul.f32 1.0, %v2483
    %v2485 = vtanh.pop %v2465
    %v2486 = vmul.f32 %v2484, %v2432
    %2488 = vrot.lane.b32.xlu0 %v2485, 88
    %v2489 = vpop.permute.xlu0 %2488
    %v2491 = vmul.f32 %v2484, %v2489
    %2493 = vrot.lane.b32.xlu0 %v2491, 20
    %v2494 = vpop.permute.xlu0 %2493
    %v2496 = vadd.f32 %v2486, %v2494
    %v2497 = vtanh.pop %v2496
    %2499 = vrot.lane.b32.xlu0 %v2497, 40
    %v2500 = vpop.permute.xlu0 %2499
    %v2502 = vmul.f32 %v2484, %v2500
    %2504 = vrot.lane.b32.xlu0 %v2502, 68
    %v2505 = vpop.permute.xlu0 %2504
    %2507 = vst.msk [vmem:[#allocation3 + $0x1f] sm:$0x1] %vm522, %v2505
    %v2508 = vld [vmem:[#allocation2 + $0x20] sm:$0x1]
    %v2509 = vpack.c.bf16 %v2502, %v2502
    %2511 = vrot.lane.b32.xlu0 %v2509, 68
    %v2512 = vpop.permute.xlu0 %2511
    %v2514 = vsel %vm459, %v2512, 0
    %2516 = vmatpush.bf16.msra.mxu0 0
    %2517 = vmatpush.bf16.msra.mxu0 0
    %2518 = vmatpush.bf16.msra.mxu0 0
    %2519 = vmatpush.bf16.msra.mxu0 0
    %2520 = vmatpush.bf16.msra.mxu0 0
    %2521 = vmatpush.bf16.msra.mxu0 0
    %2522 = vmatpush.bf16.msra.mxu0 %v465
    %2523 = vmatpush.bf16.msra.mxu0 %v456
    %2524 = vmatmul.bf16.gmra.mxu0 %v2514
    %v2525 = vpop.f32.mrf.mxu0
    %v2526 = vadd.f32 0.0, %v2525
    %v2527 = vpop.f32.mrf.mxu0
    %2528 = vdwg.mxu0
    %v2529 = vadd.f32 %v2508, %v2526
    %v2530 = vxor.u32 %v2529, 2147483648
    %v2531 = vmul.f32 %v2530, 1.442695
    %v2532 = vpow.pop %v2531
    %v2533 = vadd.f32 %v2532, 1.0
    %v2534 = vrcp.pop %v2533
    %v2535 = vmul.f32 %v2533, %v2534
    %v2536 = vsub.f32 1.0, %v2535
    %v2537 = vmul.f32 %v2534, %v2536
    %v2538 = vadd.f32 %v2534, %v2537
    %vm2539 = vweird.f32 %v2533
    %vm2540 = vweird.f32 %v2534
    %vm2541 = vmor %vm2539, %vm2540
    %v2542 = vsel %vm2541, %v2534, %v2538
    %v2543 = vand.u32 2147483647, %v2533
    %vm2544 = vcmp.eq.f32.partialorder %v2543, 8.507059e+37
    %v2545 = vand.u32 %v2533, 2147483648
    %v2546 = vor.u32 1.1754944e-38, %v2545
    %v2547 = vsel %vm2544, %v2546, %v2542
    %v2548 = vmul.f32 1.0, %v2547
    %v2549 = vtanh.pop %v2529
    %v2550 = vmul.f32 %v2548, %v2496
    %2552 = vrot.lane.b32.xlu0 %v2549, 88
    %v2553 = vpop.permute.xlu0 %2552
    %v2555 = vmul.f32 %v2548, %v2553
    %2557 = vrot.lane.b32.xlu0 %v2555, 20
    %v2558 = vpop.permute.xlu0 %2557
    %v2560 = vadd.f32 %v2550, %v2558
    %v2561 = vtanh.pop %v2560
    %2563 = vrot.lane.b32.xlu0 %v2561, 40
    %v2564 = vpop.permute.xlu0 %2563
    %v2566 = vmul.f32 %v2548, %v2564
    %2568 = vrot.lane.b32.xlu0 %v2566, 68
    %v2569 = vpop.permute.xlu0 %2568
    %2571 = vst.msk [vmem:[#allocation3 + $0x20] sm:$0x1] %vm522, %v2569
    %v2572 = vld [vmem:[#allocation2 + $0x21] sm:$0x1]
    %v2573 = vpack.c.bf16 %v2566, %v2566
    %2575 = vrot.lane.b32.xlu0 %v2573, 68
    %v2576 = vpop.permute.xlu0 %2575
    %v2578 = vsel %vm459, %v2576, 0
    %2580 = vmatpush.bf16.msra.mxu0 0
    %2581 = vmatpush.bf16.msra.mxu0 0
    %2582 = vmatpush.bf16.msra.mxu0 0
    %2583 = vmatpush.bf16.msra.mxu0 0
    %2584 = vmatpush.bf16.msra.mxu0 0
    %2585 = vmatpush.bf16.msra.mxu0 0
    %2586 = vmatpush.bf16.msra.mxu0 %v465
    %2587 = vmatpush.bf16.msra.mxu0 %v456
    %2588 = vmatmul.bf16.gmra.mxu0 %v2578
    %v2589 = vpop.f32.mrf.mxu0
    %v2590 = vadd.f32 0.0, %v2589
    %v2591 = vpop.f32.mrf.mxu0
    %2592 = vdwg.mxu0
    %v2593 = vadd.f32 %v2572, %v2590
    %v2594 = vxor.u32 %v2593, 2147483648
    %v2595 = vmul.f32 %v2594, 1.442695
    %v2596 = vpow.pop %v2595
    %v2597 = vadd.f32 %v2596, 1.0
    %v2598 = vrcp.pop %v2597
    %v2599 = vmul.f32 %v2597, %v2598
    %v2600 = vsub.f32 1.0, %v2599
    %v2601 = vmul.f32 %v2598, %v2600
    %v2602 = vadd.f32 %v2598, %v2601
    %vm2603 = vweird.f32 %v2597
    %vm2604 = vweird.f32 %v2598
    %vm2605 = vmor %vm2603, %vm2604
    %v2606 = vsel %vm2605, %v2598, %v2602
    %v2607 = vand.u32 2147483647, %v2597
    %vm2608 = vcmp.eq.f32.partialorder %v2607, 8.507059e+37
    %v2609 = vand.u32 %v2597, 2147483648
    %v2610 = vor.u32 1.1754944e-38, %v2609
    %v2611 = vsel %vm2608, %v2610, %v2606
    %v2612 = vmul.f32 1.0, %v2611
    %v2613 = vtanh.pop %v2593
    %v2614 = vmul.f32 %v2612, %v2560
    %2616 = vrot.lane.b32.xlu0 %v2613, 88
    %v2617 = vpop.permute.xlu0 %2616
    %v2619 = vmul.f32 %v2612, %v2617
    %2621 = vrot.lane.b32.xlu0 %v2619, 20
    %v2622 = vpop.permute.xlu0 %2621
    %v2624 = vadd.f32 %v2614, %v2622
    %v2625 = vtanh.pop %v2624
    %2627 = vrot.lane.b32.xlu0 %v2625, 40
    %v2628 = vpop.permute.xlu0 %2627
    %v2630 = vmul.f32 %v2612, %v2628
    %2632 = vrot.lane.b32.xlu0 %v2630, 68
    %v2633 = vpop.permute.xlu0 %2632
    %2635 = vst.msk [vmem:[#allocation3 + $0x21] sm:$0x1] %vm522, %v2633
    %v2636 = vld [vmem:[#allocation2 + $0x22] sm:$0x1]
    %v2637 = vpack.c.bf16 %v2630, %v2630
    %2639 = vrot.lane.b32.xlu0 %v2637, 68
    %v2640 = vpop.permute.xlu0 %2639
    %v2642 = vsel %vm459, %v2640, 0
    %2644 = vmatpush.bf16.msra.mxu0 0
    %2645 = vmatpush.bf16.msra.mxu0 0
    %2646 = vmatpush.bf16.msra.mxu0 0
    %2647 = vmatpush.bf16.msra.mxu0 0
    %2648 = vmatpush.bf16.msra.mxu0 0
    %2649 = vmatpush.bf16.msra.mxu0 0
    %2650 = vmatpush.bf16.msra.mxu0 %v465
    %2651 = vmatpush.bf16.msra.mxu0 %v456
    %2652 = vmatmul.bf16.gmra.mxu0 %v2642
    %v2653 = vpop.f32.mrf.mxu0
    %v2654 = vadd.f32 0.0, %v2653
    %v2655 = vpop.f32.mrf.mxu0
    %2656 = vdwg.mxu0
    %v2657 = vadd.f32 %v2636, %v2654
    %v2658 = vxor.u32 %v2657, 2147483648
    %v2659 = vmul.f32 %v2658, 1.442695
    %v2660 = vpow.pop %v2659
    %v2661 = vadd.f32 %v2660, 1.0
    %v2662 = vrcp.pop %v2661
    %v2663 = vmul.f32 %v2661, %v2662
    %v2664 = vsub.f32 1.0, %v2663
    %v2665 = vmul.f32 %v2662, %v2664
    %v2666 = vadd.f32 %v2662, %v2665
    %vm2667 = vweird.f32 %v2661
    %vm2668 = vweird.f32 %v2662
    %vm2669 = vmor %vm2667, %vm2668
    %v2670 = vsel %vm2669, %v2662, %v2666
    %v2671 = vand.u32 2147483647, %v2661
    %vm2672 = vcmp.eq.f32.partialorder %v2671, 8.507059e+37
    %v2673 = vand.u32 %v2661, 2147483648
    %v2674 = vor.u32 1.1754944e-38, %v2673
    %v2675 = vsel %vm2672, %v2674, %v2670
    %v2676 = vmul.f32 1.0, %v2675
    %v2677 = vtanh.pop %v2657
    %v2678 = vmul.f32 %v2676, %v2624
    %2680 = vrot.lane.b32.xlu0 %v2677, 88
    %v2681 = vpop.permute.xlu0 %2680
    %v2683 = vmul.f32 %v2676, %v2681
    %2685 = vrot.lane.b32.xlu0 %v2683, 20
    %v2686 = vpop.permute.xlu0 %2685
    %v2688 = vadd.f32 %v2678, %v2686
    %v2689 = vtanh.pop %v2688
    %2691 = vrot.lane.b32.xlu0 %v2689, 40
    %v2692 = vpop.permute.xlu0 %2691
    %v2694 = vmul.f32 %v2676, %v2692
    %2696 = vrot.lane.b32.xlu0 %v2694, 68
    %v2697 = vpop.permute.xlu0 %2696
    %2699 = vst.msk [vmem:[#allocation3 + $0x22] sm:$0x1] %vm522, %v2697
    %v2700 = vld [vmem:[#allocation2 + $0x23] sm:$0x1]
    %v2701 = vpack.c.bf16 %v2694, %v2694
    %2703 = vrot.lane.b32.xlu0 %v2701, 68
    %v2704 = vpop.permute.xlu0 %2703
    %v2706 = vsel %vm459, %v2704, 0
    %2708 = vmatpush.bf16.msra.mxu0 0
    %2709 = vmatpush.bf16.msra.mxu0 0
    %2710 = vmatpush.bf16.msra.mxu0 0
    %2711 = vmatpush.bf16.msra.mxu0 0
    %2712 = vmatpush.bf16.msra.mxu0 0
    %2713 = vmatpush.bf16.msra.mxu0 0
    %2714 = vmatpush.bf16.msra.mxu0 %v465
    %2715 = vmatpush.bf16.msra.mxu0 %v456
    %2716 = vmatmul.bf16.gmra.mxu0 %v2706
    %v2717 = vpop.f32.mrf.mxu0
    %v2718 = vadd.f32 0.0, %v2717
    %v2719 = vpop.f32.mrf.mxu0
    %2720 = vdwg.mxu0
    %v2721 = vadd.f32 %v2700, %v2718
    %v2722 = vxor.u32 %v2721, 2147483648
    %v2723 = vmul.f32 %v2722, 1.442695
    %v2724 = vpow.pop %v2723
    %v2725 = vadd.f32 %v2724, 1.0
    %v2726 = vrcp.pop %v2725
    %v2727 = vmul.f32 %v2725, %v2726
    %v2728 = vsub.f32 1.0, %v2727
    %v2729 = vmul.f32 %v2726, %v2728
    %v2730 = vadd.f32 %v2726, %v2729
    %vm2731 = vweird.f32 %v2725
    %vm2732 = vweird.f32 %v2726
    %vm2733 = vmor %vm2731, %vm2732
    %v2734 = vsel %vm2733, %v2726, %v2730
    %v2735 = vand.u32 2147483647, %v2725
    %vm2736 = vcmp.eq.f32.partialorder %v2735, 8.507059e+37
    %v2737 = vand.u32 %v2725, 2147483648
    %v2738 = vor.u32 1.1754944e-38, %v2737
    %v2739 = vsel %vm2736, %v2738, %v2734
    %v2740 = vmul.f32 1.0, %v2739
    %v2741 = vtanh.pop %v2721
    %v2742 = vmul.f32 %v2740, %v2688
    %2744 = vrot.lane.b32.xlu0 %v2741, 88
    %v2745 = vpop.permute.xlu0 %2744
    %v2747 = vmul.f32 %v2740, %v2745
    %2749 = vrot.lane.b32.xlu0 %v2747, 20
    %v2750 = vpop.permute.xlu0 %2749
    %v2752 = vadd.f32 %v2742, %v2750
    %v2753 = vtanh.pop %v2752
    %2755 = vrot.lane.b32.xlu0 %v2753, 40
    %v2756 = vpop.permute.xlu0 %2755
    %v2758 = vmul.f32 %v2740, %v2756
    %2760 = vrot.lane.b32.xlu0 %v2758, 68
    %v2761 = vpop.permute.xlu0 %2760
    %2763 = vst.msk [vmem:[#allocation3 + $0x23] sm:$0x1] %vm522, %v2761
    %v2764 = vld [vmem:[#allocation2 + $0x24] sm:$0x1]
    %v2765 = vpack.c.bf16 %v2758, %v2758
    %2767 = vrot.lane.b32.xlu0 %v2765, 68
    %v2768 = vpop.permute.xlu0 %2767
    %v2770 = vsel %vm459, %v2768, 0
    %2772 = vmatpush.bf16.msra.mxu0 0
    %2773 = vmatpush.bf16.msra.mxu0 0
    %2774 = vmatpush.bf16.msra.mxu0 0
    %2775 = vmatpush.bf16.msra.mxu0 0
    %2776 = vmatpush.bf16.msra.mxu0 0
    %2777 = vmatpush.bf16.msra.mxu0 0
    %2778 = vmatpush.bf16.msra.mxu0 %v465
    %2779 = vmatpush.bf16.msra.mxu0 %v456
    %2780 = vmatmul.bf16.gmra.mxu0 %v2770
    %v2781 = vpop.f32.mrf.mxu0
    %v2782 = vadd.f32 0.0, %v2781
    %v2783 = vpop.f32.mrf.mxu0
    %2784 = vdwg.mxu0
    %v2785 = vadd.f32 %v2764, %v2782
    %v2786 = vxor.u32 %v2785, 2147483648
    %v2787 = vmul.f32 %v2786, 1.442695
    %v2788 = vpow.pop %v2787
    %v2789 = vadd.f32 %v2788, 1.0
    %v2790 = vrcp.pop %v2789
    %v2791 = vmul.f32 %v2789, %v2790
    %v2792 = vsub.f32 1.0, %v2791
    %v2793 = vmul.f32 %v2790, %v2792
    %v2794 = vadd.f32 %v2790, %v2793
    %vm2795 = vweird.f32 %v2789
    %vm2796 = vweird.f32 %v2790
    %vm2797 = vmor %vm2795, %vm2796
    %v2798 = vsel %vm2797, %v2790, %v2794
    %v2799 = vand.u32 2147483647, %v2789
    %vm2800 = vcmp.eq.f32.partialorder %v2799, 8.507059e+37
    %v2801 = vand.u32 %v2789, 2147483648
    %v2802 = vor.u32 1.1754944e-38, %v2801
    %v2803 = vsel %vm2800, %v2802, %v2798
    %v2804 = vmul.f32 1.0, %v2803
    %v2805 = vtanh.pop %v2785
    %v2806 = vmul.f32 %v2804, %v2752
    %2808 = vrot.lane.b32.xlu0 %v2805, 88
    %v2809 = vpop.permute.xlu0 %2808
    %v2811 = vmul.f32 %v2804, %v2809
    %2813 = vrot.lane.b32.xlu0 %v2811, 20
    %v2814 = vpop.permute.xlu0 %2813
    %v2816 = vadd.f32 %v2806, %v2814
    %v2817 = vtanh.pop %v2816
    %2819 = vrot.lane.b32.xlu0 %v2817, 40
    %v2820 = vpop.permute.xlu0 %2819
    %v2822 = vmul.f32 %v2804, %v2820
    %2824 = vrot.lane.b32.xlu0 %v2822, 68
    %v2825 = vpop.permute.xlu0 %2824
    %2827 = vst.msk [vmem:[#allocation3 + $0x24] sm:$0x1] %vm522, %v2825
    %v2828 = vld [vmem:[#allocation2 + $0x25] sm:$0x1]
    %v2829 = vpack.c.bf16 %v2822, %v2822
    %2831 = vrot.lane.b32.xlu0 %v2829, 68
    %v2832 = vpop.permute.xlu0 %2831
    %v2834 = vsel %vm459, %v2832, 0
    %2836 = vmatpush.bf16.msra.mxu0 0
    %2837 = vmatpush.bf16.msra.mxu0 0
    %2838 = vmatpush.bf16.msra.mxu0 0
    %2839 = vmatpush.bf16.msra.mxu0 0
    %2840 = vmatpush.bf16.msra.mxu0 0
    %2841 = vmatpush.bf16.msra.mxu0 0
    %2842 = vmatpush.bf16.msra.mxu0 %v465
    %2843 = vmatpush.bf16.msra.mxu0 %v456
    %2844 = vmatmul.bf16.gmra.mxu0 %v2834
    %v2845 = vpop.f32.mrf.mxu0
    %v2846 = vadd.f32 0.0, %v2845
    %v2847 = vpop.f32.mrf.mxu0
    %2848 = vdwg.mxu0
    %v2849 = vadd.f32 %v2828, %v2846
    %v2850 = vxor.u32 %v2849, 2147483648
    %v2851 = vmul.f32 %v2850, 1.442695
    %v2852 = vpow.pop %v2851
    %v2853 = vadd.f32 %v2852, 1.0
    %v2854 = vrcp.pop %v2853
    %v2855 = vmul.f32 %v2853, %v2854
    %v2856 = vsub.f32 1.0, %v2855
    %v2857 = vmul.f32 %v2854, %v2856
    %v2858 = vadd.f32 %v2854, %v2857
    %vm2859 = vweird.f32 %v2853
    %vm2860 = vweird.f32 %v2854
    %vm2861 = vmor %vm2859, %vm2860
    %v2862 = vsel %vm2861, %v2854, %v2858
    %v2863 = vand.u32 2147483647, %v2853
    %vm2864 = vcmp.eq.f32.partialorder %v2863, 8.507059e+37
    %v2865 = vand.u32 %v2853, 2147483648
    %v2866 = vor.u32 1.1754944e-38, %v2865
    %v2867 = vsel %vm2864, %v2866, %v2862
    %v2868 = vmul.f32 1.0, %v2867
    %v2869 = vtanh.pop %v2849
    %v2870 = vmul.f32 %v2868, %v2816
    %2872 = vrot.lane.b32.xlu0 %v2869, 88
    %v2873 = vpop.permute.xlu0 %2872
    %v2875 = vmul.f32 %v2868, %v2873
    %2877 = vrot.lane.b32.xlu0 %v2875, 20
    %v2878 = vpop.permute.xlu0 %2877
    %v2880 = vadd.f32 %v2870, %v2878
    %v2881 = vtanh.pop %v2880
    %2883 = vrot.lane.b32.xlu0 %v2881, 40
    %v2884 = vpop.permute.xlu0 %2883
    %v2886 = vmul.f32 %v2868, %v2884
    %2888 = vrot.lane.b32.xlu0 %v2886, 68
    %v2889 = vpop.permute.xlu0 %2888
    %2891 = vst.msk [vmem:[#allocation3 + $0x25] sm:$0x1] %vm522, %v2889
    %v2892 = vld [vmem:[#allocation2 + $0x26] sm:$0x1]
    %v2893 = vpack.c.bf16 %v2886, %v2886
    %2895 = vrot.lane.b32.xlu0 %v2893, 68
    %v2896 = vpop.permute.xlu0 %2895
    %v2898 = vsel %vm459, %v2896, 0
    %2900 = vmatpush.bf16.msra.mxu0 0
    %2901 = vmatpush.bf16.msra.mxu0 0
    %2902 = vmatpush.bf16.msra.mxu0 0
    %2903 = vmatpush.bf16.msra.mxu0 0
    %2904 = vmatpush.bf16.msra.mxu0 0
    %2905 = vmatpush.bf16.msra.mxu0 0
    %2906 = vmatpush.bf16.msra.mxu0 %v465
    %2907 = vmatpush.bf16.msra.mxu0 %v456
    %2908 = vmatmul.bf16.gmra.mxu0 %v2898
    %v2909 = vpop.f32.mrf.mxu0
    %v2910 = vadd.f32 0.0, %v2909
    %v2911 = vpop.f32.mrf.mxu0
    %2912 = vdwg.mxu0
    %v2913 = vadd.f32 %v2892, %v2910
    %v2914 = vxor.u32 %v2913, 2147483648
    %v2915 = vmul.f32 %v2914, 1.442695
    %v2916 = vpow.pop %v2915
    %v2917 = vadd.f32 %v2916, 1.0
    %v2918 = vrcp.pop %v2917
    %v2919 = vmul.f32 %v2917, %v2918
    %v2920 = vsub.f32 1.0, %v2919
    %v2921 = vmul.f32 %v2918, %v2920
    %v2922 = vadd.f32 %v2918, %v2921
    %vm2923 = vweird.f32 %v2917
    %vm2924 = vweird.f32 %v2918
    %vm2925 = vmor %vm2923, %vm2924
    %v2926 = vsel %vm2925, %v2918, %v2922
    %v2927 = vand.u32 2147483647, %v2917
    %vm2928 = vcmp.eq.f32.partialorder %v2927, 8.507059e+37
    %v2929 = vand.u32 %v2917, 2147483648
    %v2930 = vor.u32 1.1754944e-38, %v2929
    %v2931 = vsel %vm2928, %v2930, %v2926
    %v2932 = vmul.f32 1.0, %v2931
    %v2933 = vtanh.pop %v2913
    %v2934 = vmul.f32 %v2932, %v2880
    %2936 = vrot.lane.b32.xlu0 %v2933, 88
    %v2937 = vpop.permute.xlu0 %2936
    %v2939 = vmul.f32 %v2932, %v2937
    %2941 = vrot.lane.b32.xlu0 %v2939, 20
    %v2942 = vpop.permute.xlu0 %2941
    %v2944 = vadd.f32 %v2934, %v2942
    %v2945 = vtanh.pop %v2944
    %2947 = vrot.lane.b32.xlu0 %v2945, 40
    %v2948 = vpop.permute.xlu0 %2947
    %v2950 = vmul.f32 %v2932, %v2948
    %2952 = vrot.lane.b32.xlu0 %v2950, 68
    %v2953 = vpop.permute.xlu0 %2952
    %2955 = vst.msk [vmem:[#allocation3 + $0x26] sm:$0x1] %vm522, %v2953
    %v2956 = vld [vmem:[#allocation2 + $0x27] sm:$0x1]
    %v2957 = vpack.c.bf16 %v2950, %v2950
    %2959 = vrot.lane.b32.xlu0 %v2957, 68
    %v2960 = vpop.permute.xlu0 %2959
    %v2962 = vsel %vm459, %v2960, 0
    %2964 = vmatpush.bf16.msra.mxu0 0
    %2965 = vmatpush.bf16.msra.mxu0 0
    %2966 = vmatpush.bf16.msra.mxu0 0
    %2967 = vmatpush.bf16.msra.mxu0 0
    %2968 = vmatpush.bf16.msra.mxu0 0
    %2969 = vmatpush.bf16.msra.mxu0 0
    %2970 = vmatpush.bf16.msra.mxu0 %v465
    %2971 = vmatpush.bf16.msra.mxu0 %v456
    %2972 = vmatmul.bf16.gmra.mxu0 %v2962
    %v2973 = vpop.f32.mrf.mxu0
    %v2974 = vadd.f32 0.0, %v2973
    %v2975 = vpop.f32.mrf.mxu0
    %2976 = vdwg.mxu0
    %v2977 = vadd.f32 %v2956, %v2974
    %v2978 = vxor.u32 %v2977, 2147483648
    %v2979 = vmul.f32 %v2978, 1.442695
    %v2980 = vpow.pop %v2979
    %v2981 = vadd.f32 %v2980, 1.0
    %v2982 = vrcp.pop %v2981
    %v2983 = vmul.f32 %v2981, %v2982
    %v2984 = vsub.f32 1.0, %v2983
    %v2985 = vmul.f32 %v2982, %v2984
    %v2986 = vadd.f32 %v2982, %v2985
    %vm2987 = vweird.f32 %v2981
    %vm2988 = vweird.f32 %v2982
    %vm2989 = vmor %vm2987, %vm2988
    %v2990 = vsel %vm2989, %v2982, %v2986
    %v2991 = vand.u32 2147483647, %v2981
    %vm2992 = vcmp.eq.f32.partialorder %v2991, 8.507059e+37
    %v2993 = vand.u32 %v2981, 2147483648
    %v2994 = vor.u32 1.1754944e-38, %v2993
    %v2995 = vsel %vm2992, %v2994, %v2990
    %v2996 = vmul.f32 1.0, %v2995
    %v2997 = vtanh.pop %v2977
    %v2998 = vmul.f32 %v2996, %v2944
    %3000 = vrot.lane.b32.xlu0 %v2997, 88
    %v3001 = vpop.permute.xlu0 %3000
    %v3003 = vmul.f32 %v2996, %v3001
    %3005 = vrot.lane.b32.xlu0 %v3003, 20
    %v3006 = vpop.permute.xlu0 %3005
    %v3008 = vadd.f32 %v2998, %v3006
    %v3009 = vtanh.pop %v3008
    %3011 = vrot.lane.b32.xlu0 %v3009, 40
    %v3012 = vpop.permute.xlu0 %3011
    %v3014 = vmul.f32 %v2996, %v3012
    %3016 = vrot.lane.b32.xlu0 %v3014, 68
    %v3017 = vpop.permute.xlu0 %3016
    %3019 = vst.msk [vmem:[#allocation3 + $0x27] sm:$0x1] %vm522, %v3017
    %v3020 = vld [vmem:[#allocation2 + $0x28] sm:$0x1]
    %v3021 = vpack.c.bf16 %v3014, %v3014
    %3023 = vrot.lane.b32.xlu0 %v3021, 68
    %v3024 = vpop.permute.xlu0 %3023
    %v3026 = vsel %vm459, %v3024, 0
    %3028 = vmatpush.bf16.msra.mxu0 0
    %3029 = vmatpush.bf16.msra.mxu0 0
    %3030 = vmatpush.bf16.msra.mxu0 0
    %3031 = vmatpush.bf16.msra.mxu0 0
    %3032 = vmatpush.bf16.msra.mxu0 0
    %3033 = vmatpush.bf16.msra.mxu0 0
    %3034 = vmatpush.bf16.msra.mxu0 %v465
    %3035 = vmatpush.bf16.msra.mxu0 %v456
    %3036 = vmatmul.bf16.gmra.mxu0 %v3026
    %v3037 = vpop.f32.mrf.mxu0
    %v3038 = vadd.f32 0.0, %v3037
    %v3039 = vpop.f32.mrf.mxu0
    %3040 = vdwg.mxu0
    %v3041 = vadd.f32 %v3020, %v3038
    %v3042 = vxor.u32 %v3041, 2147483648
    %v3043 = vmul.f32 %v3042, 1.442695
    %v3044 = vpow.pop %v3043
    %v3045 = vadd.f32 %v3044, 1.0
    %v3046 = vrcp.pop %v3045
    %v3047 = vmul.f32 %v3045, %v3046
    %v3048 = vsub.f32 1.0, %v3047
    %v3049 = vmul.f32 %v3046, %v3048
    %v3050 = vadd.f32 %v3046, %v3049
    %vm3051 = vweird.f32 %v3045
    %vm3052 = vweird.f32 %v3046
    %vm3053 = vmor %vm3051, %vm3052
    %v3054 = vsel %vm3053, %v3046, %v3050
    %v3055 = vand.u32 2147483647, %v3045
    %vm3056 = vcmp.eq.f32.partialorder %v3055, 8.507059e+37
    %v3057 = vand.u32 %v3045, 2147483648
    %v3058 = vor.u32 1.1754944e-38, %v3057
    %v3059 = vsel %vm3056, %v3058, %v3054
    %v3060 = vmul.f32 1.0, %v3059
    %v3061 = vtanh.pop %v3041
    %v3062 = vmul.f32 %v3060, %v3008
    %3064 = vrot.lane.b32.xlu0 %v3061, 88
    %v3065 = vpop.permute.xlu0 %3064
    %v3067 = vmul.f32 %v3060, %v3065
    %3069 = vrot.lane.b32.xlu0 %v3067, 20
    %v3070 = vpop.permute.xlu0 %3069
    %v3072 = vadd.f32 %v3062, %v3070
    %v3073 = vtanh.pop %v3072
    %3075 = vrot.lane.b32.xlu0 %v3073, 40
    %v3076 = vpop.permute.xlu0 %3075
    %v3078 = vmul.f32 %v3060, %v3076
    %3080 = vrot.lane.b32.xlu0 %v3078, 68
    %v3081 = vpop.permute.xlu0 %3080
    %3083 = vst.msk [vmem:[#allocation3 + $0x28] sm:$0x1] %vm522, %v3081
    %v3084 = vld [vmem:[#allocation2 + $0x29] sm:$0x1]
    %v3085 = vpack.c.bf16 %v3078, %v3078
    %3087 = vrot.lane.b32.xlu0 %v3085, 68
    %v3088 = vpop.permute.xlu0 %3087
    %v3090 = vsel %vm459, %v3088, 0
    %3092 = vmatpush.bf16.msra.mxu0 0
    %3093 = vmatpush.bf16.msra.mxu0 0
    %3094 = vmatpush.bf16.msra.mxu0 0
    %3095 = vmatpush.bf16.msra.mxu0 0
    %3096 = vmatpush.bf16.msra.mxu0 0
    %3097 = vmatpush.bf16.msra.mxu0 0
    %3098 = vmatpush.bf16.msra.mxu0 %v465
    %3099 = vmatpush.bf16.msra.mxu0 %v456
    %3100 = vmatmul.bf16.gmra.mxu0 %v3090
    %v3101 = vpop.f32.mrf.mxu0
    %v3102 = vadd.f32 0.0, %v3101
    %v3103 = vpop.f32.mrf.mxu0
    %3104 = vdwg.mxu0
    %v3105 = vadd.f32 %v3084, %v3102
    %v3106 = vxor.u32 %v3105, 2147483648
    %v3107 = vmul.f32 %v3106, 1.442695
    %v3108 = vpow.pop %v3107
    %v3109 = vadd.f32 %v3108, 1.0
    %v3110 = vrcp.pop %v3109
    %v3111 = vmul.f32 %v3109, %v3110
    %v3112 = vsub.f32 1.0, %v3111
    %v3113 = vmul.f32 %v3110, %v3112
    %v3114 = vadd.f32 %v3110, %v3113
    %vm3115 = vweird.f32 %v3109
    %vm3116 = vweird.f32 %v3110
    %vm3117 = vmor %vm3115, %vm3116
    %v3118 = vsel %vm3117, %v3110, %v3114
    %v3119 = vand.u32 2147483647, %v3109
    %vm3120 = vcmp.eq.f32.partialorder %v3119, 8.507059e+37
    %v3121 = vand.u32 %v3109, 2147483648
    %v3122 = vor.u32 1.1754944e-38, %v3121
    %v3123 = vsel %vm3120, %v3122, %v3118
    %v3124 = vmul.f32 1.0, %v3123
    %v3125 = vtanh.pop %v3105
    %v3126 = vmul.f32 %v3124, %v3072
    %3128 = vrot.lane.b32.xlu0 %v3125, 88
    %v3129 = vpop.permute.xlu0 %3128
    %v3131 = vmul.f32 %v3124, %v3129
    %3133 = vrot.lane.b32.xlu0 %v3131, 20
    %v3134 = vpop.permute.xlu0 %3133
    %v3136 = vadd.f32 %v3126, %v3134
    %v3137 = vtanh.pop %v3136
    %3139 = vrot.lane.b32.xlu0 %v3137, 40
    %v3140 = vpop.permute.xlu0 %3139
    %v3142 = vmul.f32 %v3124, %v3140
    %3144 = vrot.lane.b32.xlu0 %v3142, 68
    %v3145 = vpop.permute.xlu0 %3144
    %3147 = vst.msk [vmem:[#allocation3 + $0x29] sm:$0x1] %vm522, %v3145
    %v3148 = vld [vmem:[#allocation2 + $0x2a] sm:$0x1]
    %v3149 = vpack.c.bf16 %v3142, %v3142
    %3151 = vrot.lane.b32.xlu0 %v3149, 68
    %v3152 = vpop.permute.xlu0 %3151
    %v3154 = vsel %vm459, %v3152, 0
    %3156 = vmatpush.bf16.msra.mxu0 0
    %3157 = vmatpush.bf16.msra.mxu0 0
    %3158 = vmatpush.bf16.msra.mxu0 0
    %3159 = vmatpush.bf16.msra.mxu0 0
    %3160 = vmatpush.bf16.msra.mxu0 0
    %3161 = vmatpush.bf16.msra.mxu0 0
    %3162 = vmatpush.bf16.msra.mxu0 %v465
    %3163 = vmatpush.bf16.msra.mxu0 %v456
    %3164 = vmatmul.bf16.gmra.mxu0 %v3154
    %v3165 = vpop.f32.mrf.mxu0
    %v3166 = vadd.f32 0.0, %v3165
    %v3167 = vpop.f32.mrf.mxu0
    %3168 = vdwg.mxu0
    %v3169 = vadd.f32 %v3148, %v3166
    %v3170 = vxor.u32 %v3169, 2147483648
    %v3171 = vmul.f32 %v3170, 1.442695
    %v3172 = vpow.pop %v3171
    %v3173 = vadd.f32 %v3172, 1.0
    %v3174 = vrcp.pop %v3173
    %v3175 = vmul.f32 %v3173, %v3174
    %v3176 = vsub.f32 1.0, %v3175
    %v3177 = vmul.f32 %v3174, %v3176
    %v3178 = vadd.f32 %v3174, %v3177
    %vm3179 = vweird.f32 %v3173
    %vm3180 = vweird.f32 %v3174
    %vm3181 = vmor %vm3179, %vm3180
    %v3182 = vsel %vm3181, %v3174, %v3178
    %v3183 = vand.u32 2147483647, %v3173
    %vm3184 = vcmp.eq.f32.partialorder %v3183, 8.507059e+37
    %v3185 = vand.u32 %v3173, 2147483648
    %v3186 = vor.u32 1.1754944e-38, %v3185
    %v3187 = vsel %vm3184, %v3186, %v3182
    %v3188 = vmul.f32 1.0, %v3187
    %v3189 = vtanh.pop %v3169
    %v3190 = vmul.f32 %v3188, %v3136
    %3192 = vrot.lane.b32.xlu0 %v3189, 88
    %v3193 = vpop.permute.xlu0 %3192
    %v3195 = vmul.f32 %v3188, %v3193
    %3197 = vrot.lane.b32.xlu0 %v3195, 20
    %v3198 = vpop.permute.xlu0 %3197
    %v3200 = vadd.f32 %v3190, %v3198
    %v3201 = vtanh.pop %v3200
    %3203 = vrot.lane.b32.xlu0 %v3201, 40
    %v3204 = vpop.permute.xlu0 %3203
    %v3206 = vmul.f32 %v3188, %v3204
    %3208 = vrot.lane.b32.xlu0 %v3206, 68
    %v3209 = vpop.permute.xlu0 %3208
    %3211 = vst.msk [vmem:[#allocation3 + $0x2a] sm:$0x1] %vm522, %v3209
    %v3212 = vld [vmem:[#allocation2 + $0x2b] sm:$0x1]
    %v3213 = vpack.c.bf16 %v3206, %v3206
    %3215 = vrot.lane.b32.xlu0 %v3213, 68
    %v3216 = vpop.permute.xlu0 %3215
    %v3218 = vsel %vm459, %v3216, 0
    %3220 = vmatpush.bf16.msra.mxu0 0
    %3221 = vmatpush.bf16.msra.mxu0 0
    %3222 = vmatpush.bf16.msra.mxu0 0
    %3223 = vmatpush.bf16.msra.mxu0 0
    %3224 = vmatpush.bf16.msra.mxu0 0
    %3225 = vmatpush.bf16.msra.mxu0 0
    %3226 = vmatpush.bf16.msra.mxu0 %v465
    %3227 = vmatpush.bf16.msra.mxu0 %v456
    %3228 = vmatmul.bf16.gmra.mxu0 %v3218
    %v3229 = vpop.f32.mrf.mxu0
    %v3230 = vadd.f32 0.0, %v3229
    %v3231 = vpop.f32.mrf.mxu0
    %3232 = vdwg.mxu0
    %v3233 = vadd.f32 %v3212, %v3230
    %v3234 = vxor.u32 %v3233, 2147483648
    %v3235 = vmul.f32 %v3234, 1.442695
    %v3236 = vpow.pop %v3235
    %v3237 = vadd.f32 %v3236, 1.0
    %v3238 = vrcp.pop %v3237
    %v3239 = vmul.f32 %v3237, %v3238
    %v3240 = vsub.f32 1.0, %v3239
    %v3241 = vmul.f32 %v3238, %v3240
    %v3242 = vadd.f32 %v3238, %v3241
    %vm3243 = vweird.f32 %v3237
    %vm3244 = vweird.f32 %v3238
    %vm3245 = vmor %vm3243, %vm3244
    %v3246 = vsel %vm3245, %v3238, %v3242
    %v3247 = vand.u32 2147483647, %v3237
    %vm3248 = vcmp.eq.f32.partialorder %v3247, 8.507059e+37
    %v3249 = vand.u32 %v3237, 2147483648
    %v3250 = vor.u32 1.1754944e-38, %v3249
    %v3251 = vsel %vm3248, %v3250, %v3246
    %v3252 = vmul.f32 1.0, %v3251
    %v3253 = vtanh.pop %v3233
    %v3254 = vmul.f32 %v3252, %v3200
    %3256 = vrot.lane.b32.xlu0 %v3253, 88
    %v3257 = vpop.permute.xlu0 %3256
    %v3259 = vmul.f32 %v3252, %v3257
    %3261 = vrot.lane.b32.xlu0 %v3259, 20
    %v3262 = vpop.permute.xlu0 %3261
    %v3264 = vadd.f32 %v3254, %v3262
    %v3265 = vtanh.pop %v3264
    %3267 = vrot.lane.b32.xlu0 %v3265, 40
    %v3268 = vpop.permute.xlu0 %3267
    %v3270 = vmul.f32 %v3252, %v3268
    %3272 = vrot.lane.b32.xlu0 %v3270, 68
    %v3273 = vpop.permute.xlu0 %3272
    %3275 = vst.msk [vmem:[#allocation3 + $0x2b] sm:$0x1] %vm522, %v3273
    %v3276 = vld [vmem:[#allocation2 + $0x2c] sm:$0x1]
    %v3277 = vpack.c.bf16 %v3270, %v3270
    %3279 = vrot.lane.b32.xlu0 %v3277, 68
    %v3280 = vpop.permute.xlu0 %3279
    %v3282 = vsel %vm459, %v3280, 0
    %3284 = vmatpush.bf16.msra.mxu0 0
    %3285 = vmatpush.bf16.msra.mxu0 0
    %3286 = vmatpush.bf16.msra.mxu0 0
    %3287 = vmatpush.bf16.msra.mxu0 0
    %3288 = vmatpush.bf16.msra.mxu0 0
    %3289 = vmatpush.bf16.msra.mxu0 0
    %3290 = vmatpush.bf16.msra.mxu0 %v465
    %3291 = vmatpush.bf16.msra.mxu0 %v456
    %3292 = vmatmul.bf16.gmra.mxu0 %v3282
    %v3293 = vpop.f32.mrf.mxu0
    %v3294 = vadd.f32 0.0, %v3293
    %v3295 = vpop.f32.mrf.mxu0
    %3296 = vdwg.mxu0
    %v3297 = vadd.f32 %v3276, %v3294
    %v3298 = vxor.u32 %v3297, 2147483648
    %v3299 = vmul.f32 %v3298, 1.442695
    %v3300 = vpow.pop %v3299
    %v3301 = vadd.f32 %v3300, 1.0
    %v3302 = vrcp.pop %v3301
    %v3303 = vmul.f32 %v3301, %v3302
    %v3304 = vsub.f32 1.0, %v3303
    %v3305 = vmul.f32 %v3302, %v3304
    %v3306 = vadd.f32 %v3302, %v3305
    %vm3307 = vweird.f32 %v3301
    %vm3308 = vweird.f32 %v3302
    %vm3309 = vmor %vm3307, %vm3308
    %v3310 = vsel %vm3309, %v3302, %v3306
    %v3311 = vand.u32 2147483647, %v3301
    %vm3312 = vcmp.eq.f32.partialorder %v3311, 8.507059e+37
    %v3313 = vand.u32 %v3301, 2147483648
    %v3314 = vor.u32 1.1754944e-38, %v3313
    %v3315 = vsel %vm3312, %v3314, %v3310
    %v3316 = vmul.f32 1.0, %v3315
    %v3317 = vtanh.pop %v3297
    %v3318 = vmul.f32 %v3316, %v3264
    %3320 = vrot.lane.b32.xlu0 %v3317, 88
    %v3321 = vpop.permute.xlu0 %3320
    %v3323 = vmul.f32 %v3316, %v3321
    %3325 = vrot.lane.b32.xlu0 %v3323, 20
    %v3326 = vpop.permute.xlu0 %3325
    %v3328 = vadd.f32 %v3318, %v3326
    %v3329 = vtanh.pop %v3328
    %3331 = vrot.lane.b32.xlu0 %v3329, 40
    %v3332 = vpop.permute.xlu0 %3331
    %v3334 = vmul.f32 %v3316, %v3332
    %3336 = vrot.lane.b32.xlu0 %v3334, 68
    %v3337 = vpop.permute.xlu0 %3336
    %3339 = vst.msk [vmem:[#allocation3 + $0x2c] sm:$0x1] %vm522, %v3337
    %v3340 = vld [vmem:[#allocation2 + $0x2d] sm:$0x1]
    %v3341 = vpack.c.bf16 %v3334, %v3334
    %3343 = vrot.lane.b32.xlu0 %v3341, 68
    %v3344 = vpop.permute.xlu0 %3343
    %v3346 = vsel %vm459, %v3344, 0
    %3348 = vmatpush.bf16.msra.mxu0 0
    %3349 = vmatpush.bf16.msra.mxu0 0
    %3350 = vmatpush.bf16.msra.mxu0 0
    %3351 = vmatpush.bf16.msra.mxu0 0
    %3352 = vmatpush.bf16.msra.mxu0 0
    %3353 = vmatpush.bf16.msra.mxu0 0
    %3354 = vmatpush.bf16.msra.mxu0 %v465
    %3355 = vmatpush.bf16.msra.mxu0 %v456
    %3356 = vmatmul.bf16.gmra.mxu0 %v3346
    %v3357 = vpop.f32.mrf.mxu0
    %v3358 = vadd.f32 0.0, %v3357
    %v3359 = vpop.f32.mrf.mxu0
    %3360 = vdwg.mxu0
    %v3361 = vadd.f32 %v3340, %v3358
    %v3362 = vxor.u32 %v3361, 2147483648
    %v3363 = vmul.f32 %v3362, 1.442695
    %v3364 = vpow.pop %v3363
    %v3365 = vadd.f32 %v3364, 1.0
    %v3366 = vrcp.pop %v3365
    %v3367 = vmul.f32 %v3365, %v3366
    %v3368 = vsub.f32 1.0, %v3367
    %v3369 = vmul.f32 %v3366, %v3368
    %v3370 = vadd.f32 %v3366, %v3369
    %vm3371 = vweird.f32 %v3365
    %vm3372 = vweird.f32 %v3366
    %vm3373 = vmor %vm3371, %vm3372
    %v3374 = vsel %vm3373, %v3366, %v3370
    %v3375 = vand.u32 2147483647, %v3365
    %vm3376 = vcmp.eq.f32.partialorder %v3375, 8.507059e+37
    %v3377 = vand.u32 %v3365, 2147483648
    %v3378 = vor.u32 1.1754944e-38, %v3377
    %v3379 = vsel %vm3376, %v3378, %v3374
    %v3380 = vmul.f32 1.0, %v3379
    %v3381 = vtanh.pop %v3361
    %v3382 = vmul.f32 %v3380, %v3328
    %3384 = vrot.lane.b32.xlu0 %v3381, 88
    %v3385 = vpop.permute.xlu0 %3384
    %v3387 = vmul.f32 %v3380, %v3385
    %3389 = vrot.lane.b32.xlu0 %v3387, 20
    %v3390 = vpop.permute.xlu0 %3389
    %v3392 = vadd.f32 %v3382, %v3390
    %v3393 = vtanh.pop %v3392
    %3395 = vrot.lane.b32.xlu0 %v3393, 40
    %v3396 = vpop.permute.xlu0 %3395
    %v3398 = vmul.f32 %v3380, %v3396
    %3400 = vrot.lane.b32.xlu0 %v3398, 68
    %v3401 = vpop.permute.xlu0 %3400
    %3403 = vst.msk [vmem:[#allocation3 + $0x2d] sm:$0x1] %vm522, %v3401
    %v3404 = vld [vmem:[#allocation2 + $0x2e] sm:$0x1]
    %v3405 = vpack.c.bf16 %v3398, %v3398
    %3407 = vrot.lane.b32.xlu0 %v3405, 68
    %v3408 = vpop.permute.xlu0 %3407
    %v3410 = vsel %vm459, %v3408, 0
    %3412 = vmatpush.bf16.msra.mxu0 0
    %3413 = vmatpush.bf16.msra.mxu0 0
    %3414 = vmatpush.bf16.msra.mxu0 0
    %3415 = vmatpush.bf16.msra.mxu0 0
    %3416 = vmatpush.bf16.msra.mxu0 0
    %3417 = vmatpush.bf16.msra.mxu0 0
    %3418 = vmatpush.bf16.msra.mxu0 %v465
    %3419 = vmatpush.bf16.msra.mxu0 %v456
    %3420 = vmatmul.bf16.gmra.mxu0 %v3410
    %v3421 = vpop.f32.mrf.mxu0
    %v3422 = vadd.f32 0.0, %v3421
    %v3423 = vpop.f32.mrf.mxu0
    %3424 = vdwg.mxu0
    %v3425 = vadd.f32 %v3404, %v3422
    %v3426 = vxor.u32 %v3425, 2147483648
    %v3427 = vmul.f32 %v3426, 1.442695
    %v3428 = vpow.pop %v3427
    %v3429 = vadd.f32 %v3428, 1.0
    %v3430 = vrcp.pop %v3429
    %v3431 = vmul.f32 %v3429, %v3430
    %v3432 = vsub.f32 1.0, %v3431
    %v3433 = vmul.f32 %v3430, %v3432
    %v3434 = vadd.f32 %v3430, %v3433
    %vm3435 = vweird.f32 %v3429
    %vm3436 = vweird.f32 %v3430
    %vm3437 = vmor %vm3435, %vm3436
    %v3438 = vsel %vm3437, %v3430, %v3434
    %v3439 = vand.u32 2147483647, %v3429
    %vm3440 = vcmp.eq.f32.partialorder %v3439, 8.507059e+37
    %v3441 = vand.u32 %v3429, 2147483648
    %v3442 = vor.u32 1.1754944e-38, %v3441
    %v3443 = vsel %vm3440, %v3442, %v3438
    %v3444 = vmul.f32 1.0, %v3443
    %v3445 = vtanh.pop %v3425
    %v3446 = vmul.f32 %v3444, %v3392
    %3448 = vrot.lane.b32.xlu0 %v3445, 88
    %v3449 = vpop.permute.xlu0 %3448
    %v3451 = vmul.f32 %v3444, %v3449
    %3453 = vrot.lane.b32.xlu0 %v3451, 20
    %v3454 = vpop.permute.xlu0 %3453
    %v3456 = vadd.f32 %v3446, %v3454
    %v3457 = vtanh.pop %v3456
    %3459 = vrot.lane.b32.xlu0 %v3457, 40
    %v3460 = vpop.permute.xlu0 %3459
    %v3462 = vmul.f32 %v3444, %v3460
    %3464 = vrot.lane.b32.xlu0 %v3462, 68
    %v3465 = vpop.permute.xlu0 %3464
    %3467 = vst.msk [vmem:[#allocation3 + $0x2e] sm:$0x1] %vm522, %v3465
    %v3468 = vld [vmem:[#allocation2 + $0x2f] sm:$0x1]
    %v3469 = vpack.c.bf16 %v3462, %v3462
    %3471 = vrot.lane.b32.xlu0 %v3469, 68
    %v3472 = vpop.permute.xlu0 %3471
    %v3474 = vsel %vm459, %v3472, 0
    %3476 = vmatpush.bf16.msra.mxu0 0
    %3477 = vmatpush.bf16.msra.mxu0 0
    %3478 = vmatpush.bf16.msra.mxu0 0
    %3479 = vmatpush.bf16.msra.mxu0 0
    %3480 = vmatpush.bf16.msra.mxu0 0
    %3481 = vmatpush.bf16.msra.mxu0 0
    %3482 = vmatpush.bf16.msra.mxu0 %v465
    %3483 = vmatpush.bf16.msra.mxu0 %v456
    %3484 = vmatmul.bf16.gmra.mxu0 %v3474
    %v3485 = vpop.f32.mrf.mxu0
    %v3486 = vadd.f32 0.0, %v3485
    %v3487 = vpop.f32.mrf.mxu0
    %3488 = vdwg.mxu0
    %v3489 = vadd.f32 %v3468, %v3486
    %v3490 = vxor.u32 %v3489, 2147483648
    %v3491 = vmul.f32 %v3490, 1.442695
    %v3492 = vpow.pop %v3491
    %v3493 = vadd.f32 %v3492, 1.0
    %v3494 = vrcp.pop %v3493
    %v3495 = vmul.f32 %v3493, %v3494
    %v3496 = vsub.f32 1.0, %v3495
    %v3497 = vmul.f32 %v3494, %v3496
    %v3498 = vadd.f32 %v3494, %v3497
    %vm3499 = vweird.f32 %v3493
    %vm3500 = vweird.f32 %v3494
    %vm3501 = vmor %vm3499, %vm3500
    %v3502 = vsel %vm3501, %v3494, %v3498
    %v3503 = vand.u32 2147483647, %v3493
    %vm3504 = vcmp.eq.f32.partialorder %v3503, 8.507059e+37
    %v3505 = vand.u32 %v3493, 2147483648
    %v3506 = vor.u32 1.1754944e-38, %v3505
    %v3507 = vsel %vm3504, %v3506, %v3502
    %v3508 = vmul.f32 1.0, %v3507
    %v3509 = vtanh.pop %v3489
    %v3510 = vmul.f32 %v3508, %v3456
    %3512 = vrot.lane.b32.xlu0 %v3509, 88
    %v3513 = vpop.permute.xlu0 %3512
    %v3515 = vmul.f32 %v3508, %v3513
    %3517 = vrot.lane.b32.xlu0 %v3515, 20
    %v3518 = vpop.permute.xlu0 %3517
    %v3520 = vadd.f32 %v3510, %v3518
    %v3521 = vtanh.pop %v3520
    %3523 = vrot.lane.b32.xlu0 %v3521, 40
    %v3524 = vpop.permute.xlu0 %3523
    %v3526 = vmul.f32 %v3508, %v3524
    %3528 = vrot.lane.b32.xlu0 %v3526, 68
    %v3529 = vpop.permute.xlu0 %3528
    %3531 = vst.msk [vmem:[#allocation3 + $0x2f] sm:$0x1] %vm522, %v3529
    %v3532 = vld [vmem:[#allocation3] sm:$0xff]
    %v3533 = vld [vmem:[#allocation3 + $0x8] sm:$0xff]
    %v3534 = vld [vmem:[#allocation3 + $0x10] sm:$0xff]
    %v3535 = vld [vmem:[#allocation3 + $0x18] sm:$0xff]
    %v3536 = vld [vmem:[#allocation3 + $0x20] sm:$0xff]
    %v3537 = vld [vmem:[#allocation3 + $0x28] sm:$0xff]
    %v3538 = vld [vmem:[%s7] sm:$0xff]
    %v3539 = vld [vmem:[%s7 + $0x8] sm:$0xff]
    %v3540 = vld [vmem:[%s7 + $0x10] sm:$0xf]
    %v3541 = vld [vmem:[%s8] sm:$0x1]
    %v3543 = vperm.slane %v3541, 0
    %v3546 = vsel %vm459, %v3532, 0
    %v3549 = vsel %vm459, %v3533, 0
    %v3552 = vsel %vm459, %v3534, 0
    %v3555 = vsel %vm459, %v3535, 0
    %v3558 = vsel %vm459, %v3536, 0
    %v3561 = vsel %vm459, %v3537, 0
    %vm3563 = vcmask 1043456
    %v3565 = vsel %vm3563, %v3540, 0
    %3567 = vmatpush.msra.mxu0 0.0
    %3568 = vmatpush.msra.mxu0 0.0
    %3569 = vmatpush.msra.mxu0 0.0
    %3570 = vmatpush.msra.mxu0 0.0
    %3571 = vmatpush.msra.mxu0 0.0
    %3572 = vmatpush.msra.mxu0 0.0
    %3573 = vmatpush.msra.mxu0 0.0
    %3574 = vmatpush.msra.mxu0 0.0
    %3575 = vmatpush.msra.mxu0 0.0
    %3576 = vmatpush.msra.mxu0 0.0
    %3577 = vmatpush.msra.mxu0 0.0
    %3578 = vmatpush.msra.mxu0 0.0
    %3579 = vmatpush.msra.mxu0 0.0
    %3580 = vmatpush.msra.mxu0 %v3565
    %3581 = vmatpush.msra.mxu0 %v3539
    %3582 = vmatpush.msra.mxu0 %v3538
    %3583 = vmatmul.f32.gmra.mxu0 %v3546
    %v3584 = vpop.f32.mrf.mxu0
    %v3585 = vadd.f32 %v3543, %v3584
    %3586 = vmatmul.f32.gmra.mxu0 %v3549
    %v3587 = vpop.f32.mrf.mxu0
    %v3588 = vadd.f32 %v3543, %v3587
    %3589 = vmatmul.f32.gmra.mxu0 %v3552
    %v3590 = vpop.f32.mrf.mxu0
    %v3591 = vadd.f32 %v3543, %v3590
    %3592 = vmatmul.f32.gmra.mxu0 %v3555
    %v3593 = vpop.f32.mrf.mxu0
    %v3594 = vadd.f32 %v3543, %v3593
    %3595 = vmatmul.f32.gmra.mxu0 %v3558
    %v3596 = vpop.f32.mrf.mxu0
    %v3597 = vadd.f32 %v3543, %v3596
    %3598 = vmatmul.f32.gmra.mxu0 %v3561
    %v3599 = vpop.f32.mrf.mxu0
    %v3600 = vadd.f32 %v3543, %v3599
    %3601 = vdwg.mxu0
    %3602 = vst [vmem:[#allocation4] sm:$0xff] %v3585
    %3603 = vst [vmem:[#allocation4 + $0x8] sm:$0xff] %v3588
    %3604 = vst [vmem:[#allocation4 + $0x10] sm:$0xff] %v3591
    %3605 = vst [vmem:[#allocation4 + $0x18] sm:$0xff] %v3594
    %3606 = vst [vmem:[#allocation4 + $0x20] sm:$0xff] %v3597
    %3607 = vst [vmem:[#allocation4 + $0x28] sm:$0xff] %v3600
    // Predicated region
    $region38: #{tpu_custom_call.1} parent=1 // pred_check
      _
    $region39: #{tpu_custom_call.1} parent=1 // pred_check_branch
      %3609 = sbr.rel (0) target = $region41
    $region40: #{tpu_custom_call.1} parent=1 // pred_region
      %3611 = vsyncadd [#allocation5], 0
      %s3612 = sshll.u32 [#allocation4], 4
      %s3613 = int_to_ptr.vmem [resolvable:$true] %s3612
      %s3614 = sshll.u32 %s9, 4
      %s3615 = int_to_ptr.hbm [resolvable:$true] %s3614
      %3620 = dma.vmem_to_hbm [thread:$0]  %s3613, 768, %s3615, [#allocation5], 128, 128, 8
    $region41: #{tpu_custom_call.1} parent=1 // pred_fallthru
      _
    // Predicated region
    $region42: #{tpu_custom_call.1} parent=1 // pred_check
      _
    $region43: #{tpu_custom_call.1} parent=1 // pred_check_branch
      %3622 = sbr.rel (0) target = $region45
    $region44: #{tpu_custom_call.1} parent=1 // pred_region
      %3624 = dma.done [#allocation5], 768
    $region45: #{tpu_custom_call.1} parent=1 // pred_fallthru
      _
    %3625 = vsyncpa [#allocation5], 1

</llo_original>
